<compile_context>
chip_gen: v7x
topology: tpu7x:2x2x1
jax: 0.10.0
libtpu: 0.0.40
codegen_flags: <defaults>
</compile_context>

<pallas_src>
import functools

import jax
import jax.numpy as jnp
from jax import lax
from jax.experimental import pallas as pl
from jax.experimental.pallas import tpu as pltpu

ALPHA_IT = 0.7            # self.alpha_it in GraphLearner
BETA_IT = 0.5             # cfg.TRAINER.GRAPHADAPTER.BETA (synthetic choice)
_EPS_SQ = 1e-24           # F.normalize eps (1e-12) applied to the *squared* norm


# --------------------------------------------------------------------------------------
# Chip-aware knobs (best effort, never raise)
# --------------------------------------------------------------------------------------
def _chip_info():
    kind = ""
    try:
        kind = jax.devices()[0].device_kind.lower()
    except Exception:
        pass
    try:
        vmem_cap = int(pltpu.get_tpu_info().vmem_capacity_bytes)
    except Exception:
        vmem_cap = 128 * 1024 * 1024
    wide_mxu = any(t in kind for t in ("v6", "6e", "7"))   # 256-wide MXU parts
    two_tc = "7" in kind                                    # 2 TensorCores / chip
    return wide_mxu, two_tc, vmem_cap


def _vmem_limit_bytes(vmem_cap):
    # 64 MiB/TC parts (v7x): leave headroom for compiler temporaries; 128 MiB parts: 64 MiB.
    if vmem_cap <= 64 * 1024 * 1024:
        return 36 * 1024 * 1024
    return 64 * 1024 * 1024


def _pick_block_c(C, wide_mxu, two_tc):
    cands = (256, 128, 64, 32, 16, 8) if wide_mxu else (128, 64, 32, 16, 8)
    limit = C // 2 if (two_tc and C >= 16) else C            # >=2 grid steps on 2-TC chips
    for bc in cands:
        if bc <= limit and C % bc == 0:
            return bc
    return C    # full-extent block (always BlockSpec-legal)


# --------------------------------------------------------------------------------------
# Prologue kernel: everything that does not depend on the class block.
# --------------------------------------------------------------------------------------
def _prep_kernel(cl_t_ref, cl_i_ref, text_ref, w_tt_ref, w_it_ref,
                 fn_t_ref, fn_i_ref, pre_tt_ref, pre_it_ref, deg_tt_ref, deg_it_ref,
                 fn_text_ref, a00_ref, pre_text_tt_ref, pre_text_it_ref):
    """cl_*  : (4, NCp, D) zero-padded cluster node matrices (text / image), f32
       text  : (C, D) base text features, f32;   w_* : (D, D) GCN weights, f32
       outputs: normalized cluster nodes (bf16), cluster @ W (bf16),
                cluster-block degrees colsum(relu(sims)) + 1 (f32),
                normalized node-0 features (bf16), a00 = relu(self-sim)+1 (f32),
                node-0 pre-activations text @ W (bf16)."""
    w_tt_bf = w_tt_ref[...].astype(jnp.bfloat16)
    w_it_bf = w_it_ref[...].astype(jnp.bfloat16)

    # ---- node-0 (text) quantities, shared by every graph ----
    text = text_ref[...]
    ss0 = jnp.sum(text * text, axis=1, keepdims=True)
    fn_text = text * lax.rsqrt(jnp.maximum(ss0, _EPS_SQ))            # F.normalize
    fn_text_ref[...] = fn_text.astype(jnp.bfloat16)
    a00_ref[...] = jnp.maximum(jnp.sum(fn_text * fn_text, axis=1, keepdims=True),
                               0.0) + 1.0                            # clip + self-loop
    text_bf = text.astype(jnp.bfloat16)
    pre_text_tt_ref[...] = jnp.dot(text_bf, w_tt_bf,
                                   preferred_element_type=jnp.float32).astype(jnp.bfloat16)
    pre_text_it_ref[...] = jnp.dot(text_bf, w_it_bf,
                                   preferred_element_type=jnp.float32).astype(jnp.bfloat16)

    # ---- shared cluster-slice quantities (4 slices x {text, image}) ----
    for g in range(4):                                               # static unroll
        for cl_ref, w_bf, fn_out, pre_out, deg_out in (
                (cl_t_ref, w_tt_bf, fn_t_ref, pre_tt_ref, deg_tt_ref),
                (cl_i_ref, w_it_bf, fn_i_ref, pre_it_ref, deg_it_ref)):
            cl = cl_ref[g]                                           # (NCp, D) f32
            ss = jnp.sum(cl * cl, axis=1, keepdims=True)
            fn = cl * lax.rsqrt(jnp.maximum(ss, _EPS_SQ))            # padded rows stay 0
            # one-time (NCp, NCp) sims in f32 -> accurate degrees
            sims = lax.dot_general(fn, fn, (((1,), (1,)), ((), ())),
                                   preferred_element_type=jnp.float32)
            deg = jnp.sum(jnp.maximum(sims, 0.0), axis=0, keepdims=True) + 1.0
            pre = jnp.dot(cl.astype(jnp.bfloat16), w_bf,
                          preferred_element_type=jnp.float32)        # (NCp, D)
            fn_out[g] = fn.astype(jnp.bfloat16)
            pre_out[g] = pre.astype(jnp.bfloat16)
            deg_out[g] = deg


# --------------------------------------------------------------------------------------
# Main kernel: one grid step per block of `block_c` classes (row-0-only propagation).
# --------------------------------------------------------------------------------------
def _graph_learner_kernel(fn_all_ref, pre_cl_tt_ref, pre_cl_it_ref,
                          deg_tt_ref, deg_it_ref,
                          text_ref, fn_text_ref, a00_ref,
                          pre_text_tt_ref, pre_text_it_ref, b_tt_ref, b_it_ref,
                          out_ref, *, alpha_it, beta_it, nc_pad):
    text = text_ref[...]                                             # (TC, D) f32
    fn_text_bf = fn_text_ref[...]                                    # (TC, D) bf16
    a00 = a00_ref[...]                                               # (TC, 1) f32
    pre_text = (pre_text_tt_ref[...].astype(jnp.float32),
                pre_text_it_ref[...].astype(jnp.float32))            # (TC, D) f32
    bias = (b_tt_ref[...], b_it_ref[...])
    pre_cl_refs = (pre_cl_tt_ref, pre_cl_it_ref)
    deg_refs = (deg_tt_ref, deg_it_ref)

    acc = [jnp.zeros_like(text), jnp.zeros_like(text)]               # tt / it
    for g in range(4):                                               # static unroll
        # Border sims of node 0 vs BOTH modalities' cluster nodes in one MXU call:
        # fn_all[g] is (D, 2*NCp) bf16, lanes [0:NCp) = text, [NCp:2NCp) = image.
        s_all = jnp.dot(fn_text_bf, fn_all_ref[g],
                        preferred_element_type=jnp.float32)          # (TC, 2*NCp)
        s_all = jnp.maximum(s_all, 0.0)                              # clip(min=0)
        for m in range(2):                                           # tt / it
            s_m = s_all[:, m * nc_pad:(m + 1) * nc_pad]              # 128-aligned slice
            d0 = a00 + jnp.sum(s_m, axis=1, keepdims=True)           # deg(node 0)
            inv_d0 = lax.rsqrt(d0)
            dj = deg_refs[m][g] + s_m                                # deg(cluster nodes)
            # fold d0^-1/2 into the propagation weights before the MXU call
            w_row = (s_m * lax.rsqrt(dj) * inv_d0).astype(jnp.bfloat16)
            contrib = jnp.dot(w_row, pre_cl_refs[m][g],
                              preferred_element_type=jnp.float32)    # (TC, D)
            acc[m] = acc[m] + jnp.tanh(
                contrib + (a00 * inv_d0 * inv_d0) * pre_text[m] + bias[m])

    # fused alpha / mean-of-4 / beta blend with folded constants
    c_tt = 0.25 * (1.0 - beta_it) * alpha_it
    c_it = 0.25 * (1.0 - beta_it) * (1.0 - alpha_it)
    out_ref[...] = beta_it * text + c_tt * acc[0] + c_it * acc[1]


# --------------------------------------------------------------------------------------
# Wrapper
# --------------------------------------------------------------------------------------
def graph_learner_forward(base_text, base_img, img_feature,
                          w_tt, w_it, b_tt, b_it,
                          alpha_it=ALPHA_IT, beta_it=BETA_IT, block_c=None):
    C, D = base_text.shape
    assert C % 4 == 0
    nc = C // 4
    nc_pad = max(128, ((nc + 127) // 128) * 128)      # MXU lane-tile alignment
    pad = nc_pad - nc

    wide_mxu, two_tc, vmem_cap = _chip_info()
    vmem_limit = _vmem_limit_bytes(vmem_cap)
    if block_c is None:
        block_c = _pick_block_c(C, wide_mxu, two_tc)
    assert C % block_c == 0 and (block_c % 8 == 0 or block_c == C)
    # NOTE: for lane-dense output stores D should be a multiple of 128 in production
    # (D=512/1024); the small self-test below uses D=32 (full-extent block, still legal).

    # Shared cluster node matrices: cl[g, i] = base[4*i + g]  (matches torch .view),
    # zero-padded rows are exact no-ops for sims / degrees / propagation.
    cl_t = jnp.transpose(base_text.reshape(nc, 4, D), (1, 0, 2))     # (4, NC, D)
    cl_i = jnp.transpose(base_img.reshape(nc, 4, D), (1, 0, 2))
    if pad:
        cl_t = jnp.pad(cl_t, ((0, 0), (0, pad), (0, 0)))
        cl_i = jnp.pad(cl_i, ((0, 0), (0, pad), (0, 0)))

    (fn_t, fn_i, pre_tt, pre_it, deg_tt, deg_it,
     fn_text, a00, pre_text_tt, pre_text_it) = pl.pallas_call(
        _prep_kernel,
        out_shape=(
            jax.ShapeDtypeStruct((4, nc_pad, D), jnp.bfloat16),      # fn_t
            jax.ShapeDtypeStruct((4, nc_pad, D), jnp.bfloat16),      # fn_i
            jax.ShapeDtypeStruct((4, nc_pad, D), jnp.bfloat16),      # pre_cl_tt
            jax.ShapeDtypeStruct((4, nc_pad, D), jnp.bfloat16),      # pre_cl_it
            jax.ShapeDtypeStruct((4, 1, nc_pad), jnp.float32),       # deg_tt
            jax.ShapeDtypeStruct((4, 1, nc_pad), jnp.float32),       # deg_it
            jax.ShapeDtypeStruct((C, D), jnp.bfloat16),              # fn_text
            jax.ShapeDtypeStruct((C, 1), jnp.float32),               # a00
            jax.ShapeDtypeStruct((C, D), jnp.bfloat16),              # pre_text_tt
            jax.ShapeDtypeStruct((C, D), jnp.bfloat16),              # pre_text_it
        ),
        compiler_params=pltpu.CompilerParams(vmem_limit_bytes=vmem_limit),
    )(cl_t, cl_i, base_text, w_tt, w_it)

    # One-time XLA transpose/concat so the main kernel's border-sim matmul is a plain
    # (TC,D)@(D,2*NCp) A@B with no per-step relayout; text in lanes [0:NCp), image after.
    fn_all = jnp.concatenate([jnp.transpose(fn_t, (0, 2, 1)),
                              jnp.transpose(fn_i, (0, 2, 1))], axis=2)   # (4, D, 2*NCp)

    kernel = functools.partial(_graph_learner_kernel,
                               alpha_it=float(alpha_it), beta_it=float(beta_it),
                               nc_pad=nc_pad)

    def _run(single_buffer_resident):
        resident3 = lambda i: (0, 0, 0)                              # VMEM-resident
        per_block = lambda i: (i, 0)
        if single_buffer_resident:
            res = lambda shape: pl.BlockSpec(shape, resident3,
                                             pipeline_mode=pl.Buffered(1))
        else:
            res = lambda shape: pl.BlockSpec(shape, resident3)
        stream = lambda shape: pl.BlockSpec(shape, per_block)
        return pl.pallas_call(
            kernel,
            out_shape=jax.ShapeDtypeStruct((C, D), jnp.float32),
            grid=(C // block_c,),
            in_specs=[
                res((4, D, 2 * nc_pad)),        # fn_all     (bf16, resident)
                res((4, nc_pad, D)),            # pre_cl_tt  (bf16, resident)
                res((4, nc_pad, D)),            # pre_cl_it  (bf16, resident)
                res((4, 1, nc_pad)),            # deg_tt     (f32,  resident)
                res((4, 1, nc_pad)),            # deg_it     (f32,  resident)
                stream((block_c, D)),           # base_text
                stream((block_c, D)),           # fn_text (bf16)
                stream((block_c, 1)),           # a00
                stream((block_c, D)),           # pre_text_tt (bf16)
                stream((block_c, D)),           # pre_text_it (bf16)
                stream((block_c, D)),           # b_tt
                stream((block_c, D)),           # b_it
            ],
            out_specs=pl.BlockSpec((block_c, D), per_block),
            compiler_params=pltpu.CompilerParams(
                dimension_semantics=("parallel",),
                vmem_limit_bytes=vmem_limit),
        )(fn_all, pre_tt, pre_it, deg_tt, deg_it,
          base_text, fn_text, a00, pre_text_tt, pre_text_it, b_tt, b_it)

    try:
        out = _run(True)
    except Exception:
        # pipeline_mode / Buffered(1) unsupported on this jax build -> default buffering
        out = _run(False)

    return out, img_feature


# ---------------- pure-JAX reference (mirrors the PyTorch code, f32) ----------------
def _build_node_features(base_text, base_img):
    C, D = base_text.shape
    nc = C // 4
    cl_t = base_text.reshape(nc, 4, D)
    cl_i = base_img.reshape(nc, 4, D)
    feats_tt, feats_it = [], []
    for g in range(4):
        nodes_t = jnp.broadcast_to(cl_t[:, g, :][None], (C, nc, D))
        nodes_i = jnp.broadcast_to(cl_i[:, g, :][None], (C, nc, D))
        feats_tt.append(jnp.concatenate([base_text[:, None, :], nodes_t], axis=1))
        feats_it.append(jnp.concatenate([base_text[:, None, :], nodes_i], axis=1))
    return jnp.stack(feats_tt), jnp.stack(feats_it)     # (4, C, N, D), N = 1 + C//4


def reference_forward(base_text, base_img, img_feature,
                      w_tt, w_it, b_tt, b_it,
                      alpha_it=ALPHA_IT, beta_it=BETA_IT):
    feat_tt, feat_it = _build_node_features(base_text, base_img)
    N = feat_tt.shape[2]
    eye = jnp.eye(N, dtype=jnp.float32)

    def gcn(feat, w, b):                               # feat: (C, N, D)
        nrm = jnp.sqrt(jnp.sum(feat * feat, axis=2, keepdims=True))
        fn = feat / jnp.maximum(nrm, 1e-12)
        adj = jnp.einsum('cnd,cmd->cnm', fn, fn)
        adj = jnp.clip(adj, 0.0, None) + eye[None]
        dd = adj.sum(-1) ** -0.5
        adj_n = dd[:, :, None] * adj * dd[:, None, :]
        pre = jnp.einsum('cnd,de->cne', feat, w)
        out = jnp.einsum('cnm,cmd->cnd', adj_n, pre) + b[:, None, :]
        return jnp.tanh(out[:, 0, :])

    outs = []
    for g in range(4):
        o_tt = gcn(feat_tt[g], w_tt, b_tt)
        o_it = gcn(feat_it[g], w_it, b_it)
        outs.append(alpha_it * o_tt + (1.0 - alpha_it) * o_it)
    graph_o = jnp.mean(jnp.stack(outs), axis=0)
    return beta_it * base_text + (1.0 - beta_it) * graph_o, img_feature


if __name__ == "__main__":
    # Small synthetic shapes consistent with the module: C classes (div by 4), dim D.
    C, D, B = 32, 32, 2
    key = jax.random.PRNGKey(0)
    k1, k2, k3, k4, k5, k6, k7 = jax.random.split(key, 7)

    base_text = jax.random.normal(k1, (C, D), jnp.float32)
    base_img = jax.random.normal(k2, (C, D), jnp.float32)
    img_feature = jax.random.normal(k3, (B, D), jnp.float32)

    # GraphConvolution params: W ~ U(-stdv, stdv); bias zeros at init but trainable,
    # so use small random values to exercise the bias path.
    stdv = 1.0 / (D ** 0.5)
    w_tt = jax.random.uniform(k4, (D, D), jnp.float32, minval=-stdv, maxval=stdv)
    w_it = jax.random.uniform(k5, (D, D), jnp.float32, minval=-stdv, maxval=stdv)
    b_tt = 0.1 * jax.random.normal(k6, (C, D), jnp.float32)
    b_it = 0.1 * jax.random.normal(k7, (C, D), jnp.float32)

    out, img_out = graph_learner_forward(base_text, base_img, img_feature,
                                         w_tt, w_it, b_tt, b_it)
    jax.block_until_ready(out)
    jax.block_until_ready(img_out)

    ref_out, ref_img = reference_forward(base_text, base_img, img_feature,
                                         w_tt, w_it, b_tt, b_it)
    assert out.shape == (C, D) and img_out.shape == (B, D)
    # bf16 MXU operands -> validate with a looser tolerance than pure f32.
    assert jnp.allclose(out, ref_out, rtol=2e-2, atol=2e-2), \
        float(jnp.max(jnp.abs(out - ref_out)))
    assert jnp.allclose(img_out, ref_img)

    print("KERNEL_OK")
</pallas_src>

<mosaic_0001>
module attributes {stable_mosaic.version = 11 : i64} {
  func.func @_prep_kernel(%arg0: memref<4x128x32xf32, #tpu.memory_space<vmem>>, %arg1: memref<4x128x32xf32, #tpu.memory_space<vmem>>, %arg2: memref<32x32xf32, #tpu.memory_space<vmem>>, %arg3: memref<32x32xf32, #tpu.memory_space<vmem>>, %arg4: memref<32x32xf32, #tpu.memory_space<vmem>>, %arg5: memref<4x128x32xbf16, #tpu.memory_space<vmem>>, %arg6: memref<4x128x32xbf16, #tpu.memory_space<vmem>>, %arg7: memref<4x128x32xbf16, #tpu.memory_space<vmem>>, %arg8: memref<4x128x32xbf16, #tpu.memory_space<vmem>>, %arg9: memref<4x1x128xf32, #tpu.memory_space<vmem>>, %arg10: memref<4x1x128xf32, #tpu.memory_space<vmem>>, %arg11: memref<32x32xbf16, #tpu.memory_space<vmem>>, %arg12: memref<32x1xf32, #tpu.memory_space<vmem>>, %arg13: memref<32x32xbf16, #tpu.memory_space<vmem>>, %arg14: memref<32x32xbf16, #tpu.memory_space<vmem>>) attributes {dimension_semantics = [], scalar_prefetch = 0 : i64, scratch_operands = 0 : i64, tpu.core_type = #tpu.core_type<tc>} {
    %c0 = arith.constant 0 : index
    %c0_0 = arith.constant 0 : index
    %0 = vector.load %arg3[%c0, %c0_0] : memref<32x32xf32, #tpu.memory_space<vmem>>, vector<32x32xf32>
    %1 = arith.truncf %0 : vector<32x32xf32> to vector<32x32xbf16>
    %c0_1 = arith.constant 0 : index
    %c0_2 = arith.constant 0 : index
    %2 = vector.load %arg4[%c0_1, %c0_2] : memref<32x32xf32, #tpu.memory_space<vmem>>, vector<32x32xf32>
    %3 = arith.truncf %2 : vector<32x32xf32> to vector<32x32xbf16>
    %c0_3 = arith.constant 0 : index
    %c0_4 = arith.constant 0 : index
    %4 = vector.load %arg2[%c0_3, %c0_4] : memref<32x32xf32, #tpu.memory_space<vmem>>, vector<32x32xf32>
    %5 = arith.mulf %4, %4 : vector<32x32xf32>
    %cst = arith.constant dense<0.000000e+00> : vector<32xf32>
    %6 = vector.multi_reduction <add>, %5, %cst [1] : vector<32x32xf32> to vector<32xf32>
    %7 = vector.shape_cast %6 : vector<32xf32> to vector<32x1xf32>
    %cst_5 = arith.constant 1.000000e-24 : f32
    %8 = vector.broadcast %cst_5 : f32 to vector<32x1xf32>
    %9 = arith.maximumf %7, %8 : vector<32x1xf32>
    %10 = math.rsqrt %9 : vector<32x1xf32>
    %11 = vector.broadcast %10 : vector<32x1xf32> to vector<32x32xf32>
    %12 = arith.mulf %4, %11 : vector<32x32xf32>
    %13 = arith.truncf %12 : vector<32x32xf32> to vector<32x32xbf16>
    %c0_6 = arith.constant 0 : index
    %c0_7 = arith.constant 0 : index
    %14 = vector.load %arg11[%c0_6, %c0_7] : memref<32x32xbf16, #tpu.memory_space<vmem>>, vector<32x32xbf16>
    tpu.vector_store %arg11[%c0_6, %c0_7], %13 {strides = array<i32>} : memref<32x32xbf16, #tpu.memory_space<vmem>>, vector<32x32xbf16>,
    %15 = arith.mulf %12, %12 : vector<32x32xf32>
    %cst_8 = arith.constant dense<0.000000e+00> : vector<32xf32>
    %16 = vector.multi_reduction <add>, %15, %cst_8 [1] : vector<32x32xf32> to vector<32xf32>
    %17 = vector.shape_cast %16 : vector<32xf32> to vector<32x1xf32>
    %cst_9 = arith.constant 0.000000e+00 : f32
    %18 = vector.broadcast %cst_9 : f32 to vector<32x1xf32>
    %19 = arith.maximumf %17, %18 : vector<32x1xf32>
    %cst_10 = arith.constant 1.000000e+00 : f32
    %20 = vector.broadcast %cst_10 : f32 to vector<32x1xf32>
    %21 = arith.addf %19, %20 : vector<32x1xf32>
    %c0_11 = arith.constant 0 : index
    %c0_12 = arith.constant 0 : index
    %22 = vector.load %arg12[%c0_11, %c0_12] : memref<32x1xf32, #tpu.memory_space<vmem>>, vector<32x1xf32>
    tpu.vector_store %arg12[%c0_11, %c0_12], %21 {strides = array<i32>} : memref<32x1xf32, #tpu.memory_space<vmem>>, vector<32x1xf32>,
    %23 = arith.truncf %4 : vector<32x32xf32> to vector<32x32xbf16>
    %cst_13 = arith.constant dense<0.000000e+00> : vector<32x32xf32>
    %24 = tpu.matmul %23, %1, %cst_13 {dimension_numbers = #tpu.dot_dimension_numbers<[1], [0], [0], [1], [0, 0, 1, 1], [], []>} : vector<32x32xbf16>, vector<32x32xbf16>, vector<32x32xf32> -> vector<32x32xf32>
    %25 = arith.truncf %24 : vector<32x32xf32> to vector<32x32xbf16>
    %c0_14 = arith.constant 0 : index
    %c0_15 = arith.constant 0 : index
    %26 = vector.load %arg13[%c0_14, %c0_15] : memref<32x32xbf16, #tpu.memory_space<vmem>>, vector<32x32xbf16>
    tpu.vector_store %arg13[%c0_14, %c0_15], %25 {strides = array<i32>} : memref<32x32xbf16, #tpu.memory_space<vmem>>, vector<32x32xbf16>,
    %cst_16 = arith.constant dense<0.000000e+00> : vector<32x32xf32>
    %27 = tpu.matmul %23, %3, %cst_16 {dimension_numbers = #tpu.dot_dimension_numbers<[1], [0], [0], [1], [0, 0, 1, 1], [], []>} : vector<32x32xbf16>, vector<32x32xbf16>, vector<32x32xf32> -> vector<32x32xf32>
    %28 = arith.truncf %27 : vector<32x32xf32> to vector<32x32xbf16>
    %c0_17 = arith.constant 0 : index
    %c0_18 = arith.constant 0 : index
    %29 = vector.load %arg14[%c0_17, %c0_18] : memref<32x32xbf16, #tpu.memory_space<vmem>>, vector<32x32xbf16>
    tpu.vector_store %arg14[%c0_17, %c0_18], %28 {strides = array<i32>} : memref<32x32xbf16, #tpu.memory_space<vmem>>, vector<32x32xbf16>,
    %c0_19 = arith.constant 0 : index
    %c0_20 = arith.constant 0 : index
    %c0_21 = arith.constant 0 : index
    %30 = vector.load %arg0[%c0_19, %c0_20, %c0_21] : memref<4x128x32xf32, #tpu.memory_space<vmem>>, vector<1x128x32xf32>
    %31 = vector.shape_cast %30 : vector<1x128x32xf32> to vector<128x32xf32>
    %32 = arith.mulf %31, %31 : vector<128x32xf32>
    %cst_22 = arith.constant dense<0.000000e+00> : vector<128xf32>
    %33 = vector.multi_reduction <add>, %32, %cst_22 [1] : vector<128x32xf32> to vector<128xf32>
    %34 = vector.shape_cast %33 : vector<128xf32> to vector<128x1xf32>
    %cst_23 = arith.constant 1.000000e-24 : f32
    %35 = vector.broadcast %cst_23 : f32 to vector<128x1xf32>
    %36 = arith.maximumf %34, %35 : vector<128x1xf32>
    %37 = math.rsqrt %36 : vector<128x1xf32>
    %38 = vector.broadcast %37 : vector<128x1xf32> to vector<128x32xf32>
    %39 = arith.mulf %31, %38 : vector<128x32xf32>
    %cst_24 = arith.constant dense<0.000000e+00> : vector<128x128xf32>
    %40 = tpu.matmul %39, %39, %cst_24 {dimension_numbers = #tpu.dot_dimension_numbers<[1], [1], [0], [0], [0, 0, 1, 0], [], []>} : vector<128x32xf32>, vector<128x32xf32>, vector<128x128xf32> -> vector<128x128xf32>
    %cst_25 = arith.constant 0.000000e+00 : f32
    %41 = vector.broadcast %cst_25 : f32 to vector<128x128xf32>
    %42 = arith.maximumf %40, %41 : vector<128x128xf32>
    %cst_26 = arith.constant dense<0.000000e+00> : vector<128xf32>
    %43 = vector.multi_reduction <add>, %42, %cst_26 [0] : vector<128x128xf32> to vector<128xf32>
    %44 = vector.shape_cast %43 : vector<128xf32> to vector<1x128xf32>
    %cst_27 = arith.constant 1.000000e+00 : f32
    %45 = vector.broadcast %cst_27 : f32 to vector<1x128xf32>
    %46 = arith.addf %44, %45 : vector<1x128xf32>
    %47 = arith.truncf %31 : vector<128x32xf32> to vector<128x32xbf16>
    %cst_28 = arith.constant dense<0.000000e+00> : vector<128x32xf32>
    %48 = tpu.matmul %47, %1, %cst_28 {dimension_numbers = #tpu.dot_dimension_numbers<[1], [0], [0], [1], [0, 0, 1, 1], [], []>} : vector<128x32xbf16>, vector<32x32xbf16>, vector<128x32xf32> -> vector<128x32xf32>
    %49 = arith.truncf %39 : vector<128x32xf32> to vector<128x32xbf16>
    %c0_29 = arith.constant 0 : index
    %c0_30 = arith.constant 0 : index
    %c0_31 = arith.constant 0 : index
    %50 = vector.load %arg5[%c0_29, %c0_30, %c0_31] : memref<4x128x32xbf16, #tpu.memory_space<vmem>>, vector<1x128x32xbf16>
    %51 = vector.shape_cast %50 : vector<1x128x32xbf16> to vector<128x32xbf16>
    %52 = vector.shape_cast %49 : vector<128x32xbf16> to vector<1x128x32xbf16>
    tpu.vector_store %arg5[%c0_29, %c0_30, %c0_31], %52 {strides = array<i32>} : memref<4x128x32xbf16, #tpu.memory_space<vmem>>, vector<1x128x32xbf16>,
    %53 = arith.truncf %48 : vector<128x32xf32> to vector<128x32xbf16>
    %c0_32 = arith.constant 0 : index
    %c0_33 = arith.constant 0 : index
    %c0_34 = arith.constant 0 : index
    %54 = vector.load %arg7[%c0_32, %c0_33, %c0_34] : memref<4x128x32xbf16, #tpu.memory_space<vmem>>, vector<1x128x32xbf16>
    %55 = vector.shape_cast %54 : vector<1x128x32xbf16> to vector<128x32xbf16>
    %56 = vector.shape_cast %53 : vector<128x32xbf16> to vector<1x128x32xbf16>
    tpu.vector_store %arg7[%c0_32, %c0_33, %c0_34], %56 {strides = array<i32>} : memref<4x128x32xbf16, #tpu.memory_space<vmem>>, vector<1x128x32xbf16>,
    %c0_35 = arith.constant 0 : index
    %c0_36 = arith.constant 0 : index
    %c0_37 = arith.constant 0 : index
    %57 = vector.load %arg9[%c0_35, %c0_36, %c0_37] : memref<4x1x128xf32, #tpu.memory_space<vmem>>, vector<1x1x128xf32>
    %58 = vector.shape_cast %57 : vector<1x1x128xf32> to vector<1x128xf32>
    %59 = vector.shape_cast %46 : vector<1x128xf32> to vector<1x1x128xf32>
    tpu.vector_store %arg9[%c0_35, %c0_36, %c0_37], %59 {strides = array<i32>} : memref<4x1x128xf32, #tpu.memory_space<vmem>>, vector<1x1x128xf32>,
    %c0_38 = arith.constant 0 : index
    %c0_39 = arith.constant 0 : index
    %c0_40 = arith.constant 0 : index
    %60 = vector.load %arg1[%c0_38, %c0_39, %c0_40] : memref<4x128x32xf32, #tpu.memory_space<vmem>>, vector<1x128x32xf32>
    %61 = vector.shape_cast %60 : vector<1x128x32xf32> to vector<128x32xf32>
    %62 = arith.mulf %61, %61 : vector<128x32xf32>
    %cst_41 = arith.constant dense<0.000000e+00> : vector<128xf32>
    %63 = vector.multi_reduction <add>, %62, %cst_41 [1] : vector<128x32xf32> to vector<128xf32>
    %64 = vector.shape_cast %63 : vector<128xf32> to vector<128x1xf32>
    %cst_42 = arith.constant 1.000000e-24 : f32
    %65 = vector.broadcast %cst_42 : f32 to vector<128x1xf32>
    %66 = arith.maximumf %64, %65 : vector<128x1xf32>
    %67 = math.rsqrt %66 : vector<128x1xf32>
    %68 = vector.broadcast %67 : vector<128x1xf32> to vector<128x32xf32>
    %69 = arith.mulf %61, %68 : vector<128x32xf32>
    %cst_43 = arith.constant dense<0.000000e+00> : vector<128x128xf32>
    %70 = tpu.matmul %69, %69, %cst_43 {dimension_numbers = #tpu.dot_dimension_numbers<[1], [1], [0], [0], [0, 0, 1, 0], [], []>} : vector<128x32xf32>, vector<128x32xf32>, vector<128x128xf32> -> vector<128x128xf32>
    %cst_44 = arith.constant 0.000000e+00 : f32
    %71 = vector.broadcast %cst_44 : f32 to vector<128x128xf32>
    %72 = arith.maximumf %70, %71 : vector<128x128xf32>
    %cst_45 = arith.constant dense<0.000000e+00> : vector<128xf32>
    %73 = vector.multi_reduction <add>, %72, %cst_45 [0] : vector<128x128xf32> to vector<128xf32>
    %74 = vector.shape_cast %73 : vector<128xf32> to vector<1x128xf32>
    %cst_46 = arith.constant 1.000000e+00 : f32
    %75 = vector.broadcast %cst_46 : f32 to vector<1x128xf32>
    %76 = arith.addf %74, %75 : vector<1x128xf32>
    %77 = arith.truncf %61 : vector<128x32xf32> to vector<128x32xbf16>
    %cst_47 = arith.constant dense<0.000000e+00> : vector<128x32xf32>
    %78 = tpu.matmul %77, %3, %cst_47 {dimension_numbers = #tpu.dot_dimension_numbers<[1], [0], [0], [1], [0, 0, 1, 1], [], []>} : vector<128x32xbf16>, vector<32x32xbf16>, vector<128x32xf32> -> vector<128x32xf32>
    %79 = arith.truncf %69 : vector<128x32xf32> to vector<128x32xbf16>
    %c0_48 = arith.constant 0 : index
    %c0_49 = arith.constant 0 : index
    %c0_50 = arith.constant 0 : index
    %80 = vector.load %arg6[%c0_48, %c0_49, %c0_50] : memref<4x128x32xbf16, #tpu.memory_space<vmem>>, vector<1x128x32xbf16>
    %81 = vector.shape_cast %80 : vector<1x128x32xbf16> to vector<128x32xbf16>
    %82 = vector.shape_cast %79 : vector<128x32xbf16> to vector<1x128x32xbf16>
    tpu.vector_store %arg6[%c0_48, %c0_49, %c0_50], %82 {strides = array<i32>} : memref<4x128x32xbf16, #tpu.memory_space<vmem>>, vector<1x128x32xbf16>,
    %83 = arith.truncf %78 : vector<128x32xf32> to vector<128x32xbf16>
    %c0_51 = arith.constant 0 : index
    %c0_52 = arith.constant 0 : index
    %c0_53 = arith.constant 0 : index
    %84 = vector.load %arg8[%c0_51, %c0_52, %c0_53] : memref<4x128x32xbf16, #tpu.memory_space<vmem>>, vector<1x128x32xbf16>
    %85 = vector.shape_cast %84 : vector<1x128x32xbf16> to vector<128x32xbf16>
    %86 = vector.shape_cast %83 : vector<128x32xbf16> to vector<1x128x32xbf16>
    tpu.vector_store %arg8[%c0_51, %c0_52, %c0_53], %86 {strides = array<i32>} : memref<4x128x32xbf16, #tpu.memory_space<vmem>>, vector<1x128x32xbf16>,
    %c0_54 = arith.constant 0 : index
    %c0_55 = arith.constant 0 : index
    %c0_56 = arith.constant 0 : index
    %87 = vector.load %arg10[%c0_54, %c0_55, %c0_56] : memref<4x1x128xf32, #tpu.memory_space<vmem>>, vector<1x1x128xf32>
    %88 = vector.shape_cast %87 : vector<1x1x128xf32> to vector<1x128xf32>
    %89 = vector.shape_cast %76 : vector<1x128xf32> to vector<1x1x128xf32>
    tpu.vector_store %arg10[%c0_54, %c0_55, %c0_56], %89 {strides = array<i32>} : memref<4x1x128xf32, #tpu.memory_space<vmem>>, vector<1x1x128xf32>,
    %c1 = arith.constant 1 : index
    %c0_57 = arith.constant 0 : index
    %c0_58 = arith.constant 0 : index
    %90 = vector.load %arg0[%c1, %c0_57, %c0_58] : memref<4x128x32xf32, #tpu.memory_space<vmem>>, vector<1x128x32xf32>
    %91 = vector.shape_cast %90 : vector<1x128x32xf32> to vector<128x32xf32>
    %92 = arith.mulf %91, %91 : vector<128x32xf32>
    %cst_59 = arith.constant dense<0.000000e+00> : vector<128xf32>
    %93 = vector.multi_reduction <add>, %92, %cst_59 [1] : vector<128x32xf32> to vector<128xf32>
    %94 = vector.shape_cast %93 : vector<128xf32> to vector<128x1xf32>
    %cst_60 = arith.constant 1.000000e-24 : f32
    %95 = vector.broadcast %cst_60 : f32 to vector<128x1xf32>
    %96 = arith.maximumf %94, %95 : vector<128x1xf32>
    %97 = math.rsqrt %96 : vector<128x1xf32>
    %98 = vector.broadcast %97 : vector<128x1xf32> to vector<128x32xf32>
    %99 = arith.mulf %91, %98 : vector<128x32xf32>
    %cst_61 = arith.constant dense<0.000000e+00> : vector<128x128xf32>
    %100 = tpu.matmul %99, %99, %cst_61 {dimension_numbers = #tpu.dot_dimension_numbers<[1], [1], [0], [0], [0, 0, 1, 0], [], []>} : vector<128x32xf32>, vector<128x32xf32>, vector<128x128xf32> -> vector<128x128xf32>
    %cst_62 = arith.constant 0.000000e+00 : f32
    %101 = vector.broadcast %cst_62 : f32 to vector<128x128xf32>
    %102 = arith.maximumf %100, %101 : vector<128x128xf32>
    %cst_63 = arith.constant dense<0.000000e+00> : vector<128xf32>
    %103 = vector.multi_reduction <add>, %102, %cst_63 [0] : vector<128x128xf32> to vector<128xf32>
    %104 = vector.shape_cast %103 : vector<128xf32> to vector<1x128xf32>
    %cst_64 = arith.constant 1.000000e+00 : f32
    %105 = vector.broadcast %cst_64 : f32 to vector<1x128xf32>
    %106 = arith.addf %104, %105 : vector<1x128xf32>
    %107 = arith.truncf %91 : vector<128x32xf32> to vector<128x32xbf16>
    %cst_65 = arith.constant dense<0.000000e+00> : vector<128x32xf32>
    %108 = tpu.matmul %107, %1, %cst_65 {dimension_numbers = #tpu.dot_dimension_numbers<[1], [0], [0], [1], [0, 0, 1, 1], [], []>} : vector<128x32xbf16>, vector<32x32xbf16>, vector<128x32xf32> -> vector<128x32xf32>
    %109 = arith.truncf %99 : vector<128x32xf32> to vector<128x32xbf16>
    %c1_66 = arith.constant 1 : index
    %c0_67 = arith.constant 0 : index
    %c0_68 = arith.constant 0 : index
    %110 = vector.load %arg5[%c1_66, %c0_67, %c0_68] : memref<4x128x32xbf16, #tpu.memory_space<vmem>>, vector<1x128x32xbf16>
    %111 = vector.shape_cast %110 : vector<1x128x32xbf16> to vector<128x32xbf16>
    %112 = vector.shape_cast %109 : vector<128x32xbf16> to vector<1x128x32xbf16>
    tpu.vector_store %arg5[%c1_66, %c0_67, %c0_68], %112 {strides = array<i32>} : memref<4x128x32xbf16, #tpu.memory_space<vmem>>, vector<1x128x32xbf16>,
    %113 = arith.truncf %108 : vector<128x32xf32> to vector<128x32xbf16>
    %c1_69 = arith.constant 1 : index
    %c0_70 = arith.constant 0 : index
    %c0_71 = arith.constant 0 : index
    %114 = vector.load %arg7[%c1_69, %c0_70, %c0_71] : memref<4x128x32xbf16, #tpu.memory_space<vmem>>, vector<1x128x32xbf16>
    %115 = vector.shape_cast %114 : vector<1x128x32xbf16> to vector<128x32xbf16>
    %116 = vector.shape_cast %113 : vector<128x32xbf16> to vector<1x128x32xbf16>
    tpu.vector_store %arg7[%c1_69, %c0_70, %c0_71], %116 {strides = array<i32>} : memref<4x128x32xbf16, #tpu.memory_space<vmem>>, vector<1x128x32xbf16>,
    %c1_72 = arith.constant 1 : index
    %c0_73 = arith.constant 0 : index
    %c0_74 = arith.constant 0 : index
    %117 = vector.load %arg9[%c1_72, %c0_73, %c0_74] : memref<4x1x128xf32, #tpu.memory_space<vmem>>, vector<1x1x128xf32>
    %118 = vector.shape_cast %117 : vector<1x1x128xf32> to vector<1x128xf32>
    %119 = vector.shape_cast %106 : vector<1x128xf32> to vector<1x1x128xf32>
    tpu.vector_store %arg9[%c1_72, %c0_73, %c0_74], %119 {strides = array<i32>} : memref<4x1x128xf32, #tpu.memory_space<vmem>>, vector<1x1x128xf32>,
    %c1_75 = arith.constant 1 : index
    %c0_76 = arith.constant 0 : index
    %c0_77 = arith.constant 0 : index
    %120 = vector.load %arg1[%c1_75, %c0_76, %c0_77] : memref<4x128x32xf32, #tpu.memory_space<vmem>>, vector<1x128x32xf32>
    %121 = vector.shape_cast %120 : vector<1x128x32xf32> to vector<128x32xf32>
    %122 = arith.mulf %121, %121 : vector<128x32xf32>
    %cst_78 = arith.constant dense<0.000000e+00> : vector<128xf32>
    %123 = vector.multi_reduction <add>, %122, %cst_78 [1] : vector<128x32xf32> to vector<128xf32>
    %124 = vector.shape_cast %123 : vector<128xf32> to vector<128x1xf32>
    %cst_79 = arith.constant 1.000000e-24 : f32
    %125 = vector.broadcast %cst_79 : f32 to vector<128x1xf32>
    %126 = arith.maximumf %124, %125 : vector<128x1xf32>
    %127 = math.rsqrt %126 : vector<128x1xf32>
    %128 = vector.broadcast %127 : vector<128x1xf32> to vector<128x32xf32>
    %129 = arith.mulf %121, %128 : vector<128x32xf32>
    %cst_80 = arith.constant dense<0.000000e+00> : vector<128x128xf32>
    %130 = tpu.matmul %129, %129, %cst_80 {dimension_numbers = #tpu.dot_dimension_numbers<[1], [1], [0], [0], [0, 0, 1, 0], [], []>} : vector<128x32xf32>, vector<128x32xf32>, vector<128x128xf32> -> vector<128x128xf32>
    %cst_81 = arith.constant 0.000000e+00 : f32
    %131 = vector.broadcast %cst_81 : f32 to vector<128x128xf32>
    %132 = arith.maximumf %130, %131 : vector<128x128xf32>
    %cst_82 = arith.constant dense<0.000000e+00> : vector<128xf32>
    %133 = vector.multi_reduction <add>, %132, %cst_82 [0] : vector<128x128xf32> to vector<128xf32>
    %134 = vector.shape_cast %133 : vector<128xf32> to vector<1x128xf32>
    %cst_83 = arith.constant 1.000000e+00 : f32
    %135 = vector.broadcast %cst_83 : f32 to vector<1x128xf32>
    %136 = arith.addf %134, %135 : vector<1x128xf32>
    %137 = arith.truncf %121 : vector<128x32xf32> to vector<128x32xbf16>
    %cst_84 = arith.constant dense<0.000000e+00> : vector<128x32xf32>
    %138 = tpu.matmul %137, %3, %cst_84 {dimension_numbers = #tpu.dot_dimension_numbers<[1], [0], [0], [1], [0, 0, 1, 1], [], []>} : vector<128x32xbf16>, vector<32x32xbf16>, vector<128x32xf32> -> vector<128x32xf32>
    %139 = arith.truncf %129 : vector<128x32xf32> to vector<128x32xbf16>
    %c1_85 = arith.constant 1 : index
    %c0_86 = arith.constant 0 : index
    %c0_87 = arith.constant 0 : index
    %140 = vector.load %arg6[%c1_85, %c0_86, %c0_87] : memref<4x128x32xbf16, #tpu.memory_space<vmem>>, vector<1x128x32xbf16>
    %141 = vector.shape_cast %140 : vector<1x128x32xbf16> to vector<128x32xbf16>
    %142 = vector.shape_cast %139 : vector<128x32xbf16> to vector<1x128x32xbf16>
    tpu.vector_store %arg6[%c1_85, %c0_86, %c0_87], %142 {strides = array<i32>} : memref<4x128x32xbf16, #tpu.memory_space<vmem>>, vector<1x128x32xbf16>,
    %143 = arith.truncf %138 : vector<128x32xf32> to vector<128x32xbf16>
    %c1_88 = arith.constant 1 : index
    %c0_89 = arith.constant 0 : index
    %c0_90 = arith.constant 0 : index
    %144 = vector.load %arg8[%c1_88, %c0_89, %c0_90] : memref<4x128x32xbf16, #tpu.memory_space<vmem>>, vector<1x128x32xbf16>
    %145 = vector.shape_cast %144 : vector<1x128x32xbf16> to vector<128x32xbf16>
    %146 = vector.shape_cast %143 : vector<128x32xbf16> to vector<1x128x32xbf16>
    tpu.vector_store %arg8[%c1_88, %c0_89, %c0_90], %146 {strides = array<i32>} : memref<4x128x32xbf16, #tpu.memory_space<vmem>>, vector<1x128x32xbf16>,
    %c1_91 = arith.constant 1 : index
    %c0_92 = arith.constant 0 : index
    %c0_93 = arith.constant 0 : index
    %147 = vector.load %arg10[%c1_91, %c0_92, %c0_93] : memref<4x1x128xf32, #tpu.memory_space<vmem>>, vector<1x1x128xf32>
    %148 = vector.shape_cast %147 : vector<1x1x128xf32> to vector<1x128xf32>
    %149 = vector.shape_cast %136 : vector<1x128xf32> to vector<1x1x128xf32>
    tpu.vector_store %arg10[%c1_91, %c0_92, %c0_93], %149 {strides = array<i32>} : memref<4x1x128xf32, #tpu.memory_space<vmem>>, vector<1x1x128xf32>,
    %c2 = arith.constant 2 : index
    %c0_94 = arith.constant 0 : index
    %c0_95 = arith.constant 0 : index
    %150 = vector.load %arg0[%c2, %c0_94, %c0_95] : memref<4x128x32xf32, #tpu.memory_space<vmem>>, vector<1x128x32xf32>
    %151 = vector.shape_cast %150 : vector<1x128x32xf32> to vector<128x32xf32>
    %152 = arith.mulf %151, %151 : vector<128x32xf32>
    %cst_96 = arith.constant dense<0.000000e+00> : vector<128xf32>
    %153 = vector.multi_reduction <add>, %152, %cst_96 [1] : vector<128x32xf32> to vector<128xf32>
    %154 = vector.shape_cast %153 : vector<128xf32> to vector<128x1xf32>
    %cst_97 = arith.constant 1.000000e-24 : f32
    %155 = vector.broadcast %cst_97 : f32 to vector<128x1xf32>
    %156 = arith.maximumf %154, %155 : vector<128x1xf32>
    %157 = math.rsqrt %156 : vector<128x1xf32>
    %158 = vector.broadcast %157 : vector<128x1xf32> to vector<128x32xf32>
    %159 = arith.mulf %151, %158 : vector<128x32xf32>
    %cst_98 = arith.constant dense<0.000000e+00> : vector<128x128xf32>
    %160 = tpu.matmul %159, %159, %cst_98 {dimension_numbers = #tpu.dot_dimension_numbers<[1], [1], [0], [0], [0, 0, 1, 0], [], []>} : vector<128x32xf32>, vector<128x32xf32>, vector<128x128xf32> -> vector<128x128xf32>
    %cst_99 = arith.constant 0.000000e+00 : f32
    %161 = vector.broadcast %cst_99 : f32 to vector<128x128xf32>
    %162 = arith.maximumf %160, %161 : vector<128x128xf32>
    %cst_100 = arith.constant dense<0.000000e+00> : vector<128xf32>
    %163 = vector.multi_reduction <add>, %162, %cst_100 [0] : vector<128x128xf32> to vector<128xf32>
    %164 = vector.shape_cast %163 : vector<128xf32> to vector<1x128xf32>
    %cst_101 = arith.constant 1.000000e+00 : f32
    %165 = vector.broadcast %cst_101 : f32 to vector<1x128xf32>
    %166 = arith.addf %164, %165 : vector<1x128xf32>
    %167 = arith.truncf %151 : vector<128x32xf32> to vector<128x32xbf16>
    %cst_102 = arith.constant dense<0.000000e+00> : vector<128x32xf32>
    %168 = tpu.matmul %167, %1, %cst_102 {dimension_numbers = #tpu.dot_dimension_numbers<[1], [0], [0], [1], [0, 0, 1, 1], [], []>} : vector<128x32xbf16>, vector<32x32xbf16>, vector<128x32xf32> -> vector<128x32xf32>
    %169 = arith.truncf %159 : vector<128x32xf32> to vector<128x32xbf16>
    %c2_103 = arith.constant 2 : index
    %c0_104 = arith.constant 0 : index
    %c0_105 = arith.constant 0 : index
    %170 = vector.load %arg5[%c2_103, %c0_104, %c0_105] : memref<4x128x32xbf16, #tpu.memory_space<vmem>>, vector<1x128x32xbf16>
    %171 = vector.shape_cast %170 : vector<1x128x32xbf16> to vector<128x32xbf16>
    %172 = vector.shape_cast %169 : vector<128x32xbf16> to vector<1x128x32xbf16>
    tpu.vector_store %arg5[%c2_103, %c0_104, %c0_105], %172 {strides = array<i32>} : memref<4x128x32xbf16, #tpu.memory_space<vmem>>, vector<1x128x32xbf16>,
    %173 = arith.truncf %168 : vector<128x32xf32> to vector<128x32xbf16>
    %c2_106 = arith.constant 2 : index
    %c0_107 = arith.constant 0 : index
    %c0_108 = arith.constant 0 : index
    %174 = vector.load %arg7[%c2_106, %c0_107, %c0_108] : memref<4x128x32xbf16, #tpu.memory_space<vmem>>, vector<1x128x32xbf16>
    %175 = vector.shape_cast %174 : vector<1x128x32xbf16> to vector<128x32xbf16>
    %176 = vector.shape_cast %173 : vector<128x32xbf16> to vector<1x128x32xbf16>
    tpu.vector_store %arg7[%c2_106, %c0_107, %c0_108], %176 {strides = array<i32>} : memref<4x128x32xbf16, #tpu.memory_space<vmem>>, vector<1x128x32xbf16>,
    %c2_109 = arith.constant 2 : index
    %c0_110 = arith.constant 0 : index
    %c0_111 = arith.constant 0 : index
    %177 = vector.load %arg9[%c2_109, %c0_110, %c0_111] : memref<4x1x128xf32, #tpu.memory_space<vmem>>, vector<1x1x128xf32>
    %178 = vector.shape_cast %177 : vector<1x1x128xf32> to vector<1x128xf32>
    %179 = vector.shape_cast %166 : vector<1x128xf32> to vector<1x1x128xf32>
    tpu.vector_store %arg9[%c2_109, %c0_110, %c0_111], %179 {strides = array<i32>} : memref<4x1x128xf32, #tpu.memory_space<vmem>>, vector<1x1x128xf32>,
    %c2_112 = arith.constant 2 : index
    %c0_113 = arith.constant 0 : index
    %c0_114 = arith.constant 0 : index
    %180 = vector.load %arg1[%c2_112, %c0_113, %c0_114] : memref<4x128x32xf32, #tpu.memory_space<vmem>>, vector<1x128x32xf32>
    %181 = vector.shape_cast %180 : vector<1x128x32xf32> to vector<128x32xf32>
    %182 = arith.mulf %181, %181 : vector<128x32xf32>
    %cst_115 = arith.constant dense<0.000000e+00> : vector<128xf32>
    %183 = vector.multi_reduction <add>, %182, %cst_115 [1] : vector<128x32xf32> to vector<128xf32>
    %184 = vector.shape_cast %183 : vector<128xf32> to vector<128x1xf32>
    %cst_116 = arith.constant 1.000000e-24 : f32
    %185 = vector.broadcast %cst_116 : f32 to vector<128x1xf32>
    %186 = arith.maximumf %184, %185 : vector<128x1xf32>
    %187 = math.rsqrt %186 : vector<128x1xf32>
    %188 = vector.broadcast %187 : vector<128x1xf32> to vector<128x32xf32>
    %189 = arith.mulf %181, %188 : vector<128x32xf32>
    %cst_117 = arith.constant dense<0.000000e+00> : vector<128x128xf32>
    %190 = tpu.matmul %189, %189, %cst_117 {dimension_numbers = #tpu.dot_dimension_numbers<[1], [1], [0], [0], [0, 0, 1, 0], [], []>} : vector<128x32xf32>, vector<128x32xf32>, vector<128x128xf32> -> vector<128x128xf32>
    %cst_118 = arith.constant 0.000000e+00 : f32
    %191 = vector.broadcast %cst_118 : f32 to vector<128x128xf32>
    %192 = arith.maximumf %190, %191 : vector<128x128xf32>
    %cst_119 = arith.constant dense<0.000000e+00> : vector<128xf32>
    %193 = vector.multi_reduction <add>, %192, %cst_119 [0] : vector<128x128xf32> to vector<128xf32>
    %194 = vector.shape_cast %193 : vector<128xf32> to vector<1x128xf32>
    %cst_120 = arith.constant 1.000000e+00 : f32
    %195 = vector.broadcast %cst_120 : f32 to vector<1x128xf32>
    %196 = arith.addf %194, %195 : vector<1x128xf32>
    %197 = arith.truncf %181 : vector<128x32xf32> to vector<128x32xbf16>
    %cst_121 = arith.constant dense<0.000000e+00> : vector<128x32xf32>
    %198 = tpu.matmul %197, %3, %cst_121 {dimension_numbers = #tpu.dot_dimension_numbers<[1], [0], [0], [1], [0, 0, 1, 1], [], []>} : vector<128x32xbf16>, vector<32x32xbf16>, vector<128x32xf32> -> vector<128x32xf32>
    %199 = arith.truncf %189 : vector<128x32xf32> to vector<128x32xbf16>
    %c2_122 = arith.constant 2 : index
    %c0_123 = arith.constant 0 : index
    %c0_124 = arith.constant 0 : index
    %200 = vector.load %arg6[%c2_122, %c0_123, %c0_124] : memref<4x128x32xbf16, #tpu.memory_space<vmem>>, vector<1x128x32xbf16>
    %201 = vector.shape_cast %200 : vector<1x128x32xbf16> to vector<128x32xbf16>
    %202 = vector.shape_cast %199 : vector<128x32xbf16> to vector<1x128x32xbf16>
    tpu.vector_store %arg6[%c2_122, %c0_123, %c0_124], %202 {strides = array<i32>} : memref<4x128x32xbf16, #tpu.memory_space<vmem>>, vector<1x128x32xbf16>,
    %203 = arith.truncf %198 : vector<128x32xf32> to vector<128x32xbf16>
    %c2_125 = arith.constant 2 : index
    %c0_126 = arith.constant 0 : index
    %c0_127 = arith.constant 0 : index
    %204 = vector.load %arg8[%c2_125, %c0_126, %c0_127] : memref<4x128x32xbf16, #tpu.memory_space<vmem>>, vector<1x128x32xbf16>
    %205 = vector.shape_cast %204 : vector<1x128x32xbf16> to vector<128x32xbf16>
    %206 = vector.shape_cast %203 : vector<128x32xbf16> to vector<1x128x32xbf16>
    tpu.vector_store %arg8[%c2_125, %c0_126, %c0_127], %206 {strides = array<i32>} : memref<4x128x32xbf16, #tpu.memory_space<vmem>>, vector<1x128x32xbf16>,
    %c2_128 = arith.constant 2 : index
    %c0_129 = arith.constant 0 : index
    %c0_130 = arith.constant 0 : index
    %207 = vector.load %arg10[%c2_128, %c0_129, %c0_130] : memref<4x1x128xf32, #tpu.memory_space<vmem>>, vector<1x1x128xf32>
    %208 = vector.shape_cast %207 : vector<1x1x128xf32> to vector<1x128xf32>
    %209 = vector.shape_cast %196 : vector<1x128xf32> to vector<1x1x128xf32>
    tpu.vector_store %arg10[%c2_128, %c0_129, %c0_130], %209 {strides = array<i32>} : memref<4x1x128xf32, #tpu.memory_space<vmem>>, vector<1x1x128xf32>,
    %c3 = arith.constant 3 : index
    %c0_131 = arith.constant 0 : index
    %c0_132 = arith.constant 0 : index
    %210 = vector.load %arg0[%c3, %c0_131, %c0_132] : memref<4x128x32xf32, #tpu.memory_space<vmem>>, vector<1x128x32xf32>
    %211 = vector.shape_cast %210 : vector<1x128x32xf32> to vector<128x32xf32>
    %212 = arith.mulf %211, %211 : vector<128x32xf32>
    %cst_133 = arith.constant dense<0.000000e+00> : vector<128xf32>
    %213 = vector.multi_reduction <add>, %212, %cst_133 [1] : vector<128x32xf32> to vector<128xf32>
    %214 = vector.shape_cast %213 : vector<128xf32> to vector<128x1xf32>
    %cst_134 = arith.constant 1.000000e-24 : f32
    %215 = vector.broadcast %cst_134 : f32 to vector<128x1xf32>
    %216 = arith.maximumf %214, %215 : vector<128x1xf32>
    %217 = math.rsqrt %216 : vector<128x1xf32>
    %218 = vector.broadcast %217 : vector<128x1xf32> to vector<128x32xf32>
    %219 = arith.mulf %211, %218 : vector<128x32xf32>
    %cst_135 = arith.constant dense<0.000000e+00> : vector<128x128xf32>
    %220 = tpu.matmul %219, %219, %cst_135 {dimension_numbers = #tpu.dot_dimension_numbers<[1], [1], [0], [0], [0, 0, 1, 0], [], []>} : vector<128x32xf32>, vector<128x32xf32>, vector<128x128xf32> -> vector<128x128xf32>
    %cst_136 = arith.constant 0.000000e+00 : f32
    %221 = vector.broadcast %cst_136 : f32 to vector<128x128xf32>
    %222 = arith.maximumf %220, %221 : vector<128x128xf32>
    %cst_137 = arith.constant dense<0.000000e+00> : vector<128xf32>
    %223 = vector.multi_reduction <add>, %222, %cst_137 [0] : vector<128x128xf32> to vector<128xf32>
    %224 = vector.shape_cast %223 : vector<128xf32> to vector<1x128xf32>
    %cst_138 = arith.constant 1.000000e+00 : f32
    %225 = vector.broadcast %cst_138 : f32 to vector<1x128xf32>
    %226 = arith.addf %224, %225 : vector<1x128xf32>
    %227 = arith.truncf %211 : vector<128x32xf32> to vector<128x32xbf16>
    %cst_139 = arith.constant dense<0.000000e+00> : vector<128x32xf32>
    %228 = tpu.matmul %227, %1, %cst_139 {dimension_numbers = #tpu.dot_dimension_numbers<[1], [0], [0], [1], [0, 0, 1, 1], [], []>} : vector<128x32xbf16>, vector<32x32xbf16>, vector<128x32xf32> -> vector<128x32xf32>
    %229 = arith.truncf %219 : vector<128x32xf32> to vector<128x32xbf16>
    %c3_140 = arith.constant 3 : index
    %c0_141 = arith.constant 0 : index
    %c0_142 = arith.constant 0 : index
    %230 = vector.load %arg5[%c3_140, %c0_141, %c0_142] : memref<4x128x32xbf16, #tpu.memory_space<vmem>>, vector<1x128x32xbf16>
    %231 = vector.shape_cast %230 : vector<1x128x32xbf16> to vector<128x32xbf16>
    %232 = vector.shape_cast %229 : vector<128x32xbf16> to vector<1x128x32xbf16>
    tpu.vector_store %arg5[%c3_140, %c0_141, %c0_142], %232 {strides = array<i32>} : memref<4x128x32xbf16, #tpu.memory_space<vmem>>, vector<1x128x32xbf16>,
    %233 = arith.truncf %228 : vector<128x32xf32> to vector<128x32xbf16>
    %c3_143 = arith.constant 3 : index
    %c0_144 = arith.constant 0 : index
    %c0_145 = arith.constant 0 : index
    %234 = vector.load %arg7[%c3_143, %c0_144, %c0_145] : memref<4x128x32xbf16, #tpu.memory_space<vmem>>, vector<1x128x32xbf16>
    %235 = vector.shape_cast %234 : vector<1x128x32xbf16> to vector<128x32xbf16>
    %236 = vector.shape_cast %233 : vector<128x32xbf16> to vector<1x128x32xbf16>
    tpu.vector_store %arg7[%c3_143, %c0_144, %c0_145], %236 {strides = array<i32>} : memref<4x128x32xbf16, #tpu.memory_space<vmem>>, vector<1x128x32xbf16>,
    %c3_146 = arith.constant 3 : index
    %c0_147 = arith.constant 0 : index
    %c0_148 = arith.constant 0 : index
    %237 = vector.load %arg9[%c3_146, %c0_147, %c0_148] : memref<4x1x128xf32, #tpu.memory_space<vmem>>, vector<1x1x128xf32>
    %238 = vector.shape_cast %237 : vector<1x1x128xf32> to vector<1x128xf32>
    %239 = vector.shape_cast %226 : vector<1x128xf32> to vector<1x1x128xf32>
    tpu.vector_store %arg9[%c3_146, %c0_147, %c0_148], %239 {strides = array<i32>} : memref<4x1x128xf32, #tpu.memory_space<vmem>>, vector<1x1x128xf32>,
    %c3_149 = arith.constant 3 : index
    %c0_150 = arith.constant 0 : index
    %c0_151 = arith.constant 0 : index
    %240 = vector.load %arg1[%c3_149, %c0_150, %c0_151] : memref<4x128x32xf32, #tpu.memory_space<vmem>>, vector<1x128x32xf32>
    %241 = vector.shape_cast %240 : vector<1x128x32xf32> to vector<128x32xf32>
    %242 = arith.mulf %241, %241 : vector<128x32xf32>
    %cst_152 = arith.constant dense<0.000000e+00> : vector<128xf32>
    %243 = vector.multi_reduction <add>, %242, %cst_152 [1] : vector<128x32xf32> to vector<128xf32>
    %244 = vector.shape_cast %243 : vector<128xf32> to vector<128x1xf32>
    %cst_153 = arith.constant 1.000000e-24 : f32
    %245 = vector.broadcast %cst_153 : f32 to vector<128x1xf32>
    %246 = arith.maximumf %244, %245 : vector<128x1xf32>
    %247 = math.rsqrt %246 : vector<128x1xf32>
    %248 = vector.broadcast %247 : vector<128x1xf32> to vector<128x32xf32>
    %249 = arith.mulf %241, %248 : vector<128x32xf32>
    %cst_154 = arith.constant dense<0.000000e+00> : vector<128x128xf32>
    %250 = tpu.matmul %249, %249, %cst_154 {dimension_numbers = #tpu.dot_dimension_numbers<[1], [1], [0], [0], [0, 0, 1, 0], [], []>} : vector<128x32xf32>, vector<128x32xf32>, vector<128x128xf32> -> vector<128x128xf32>
    %cst_155 = arith.constant 0.000000e+00 : f32
    %251 = vector.broadcast %cst_155 : f32 to vector<128x128xf32>
    %252 = arith.maximumf %250, %251 : vector<128x128xf32>
    %cst_156 = arith.constant dense<0.000000e+00> : vector<128xf32>
    %253 = vector.multi_reduction <add>, %252, %cst_156 [0] : vector<128x128xf32> to vector<128xf32>
    %254 = vector.shape_cast %253 : vector<128xf32> to vector<1x128xf32>
    %cst_157 = arith.constant 1.000000e+00 : f32
    %255 = vector.broadcast %cst_157 : f32 to vector<1x128xf32>
    %256 = arith.addf %254, %255 : vector<1x128xf32>
    %257 = arith.truncf %241 : vector<128x32xf32> to vector<128x32xbf16>
    %cst_158 = arith.constant dense<0.000000e+00> : vector<128x32xf32>
    %258 = tpu.matmul %257, %3, %cst_158 {dimension_numbers = #tpu.dot_dimension_numbers<[1], [0], [0], [1], [0, 0, 1, 1], [], []>} : vector<128x32xbf16>, vector<32x32xbf16>, vector<128x32xf32> -> vector<128x32xf32>
    %259 = arith.truncf %249 : vector<128x32xf32> to vector<128x32xbf16>
    %c3_159 = arith.constant 3 : index
    %c0_160 = arith.constant 0 : index
    %c0_161 = arith.constant 0 : index
    %260 = vector.load %arg6[%c3_159, %c0_160, %c0_161] : memref<4x128x32xbf16, #tpu.memory_space<vmem>>, vector<1x128x32xbf16>
    %261 = vector.shape_cast %260 : vector<1x128x32xbf16> to vector<128x32xbf16>
    %262 = vector.shape_cast %259 : vector<128x32xbf16> to vector<1x128x32xbf16>
    tpu.vector_store %arg6[%c3_159, %c0_160, %c0_161], %262 {strides = array<i32>} : memref<4x128x32xbf16, #tpu.memory_space<vmem>>, vector<1x128x32xbf16>,
    %263 = arith.truncf %258 : vector<128x32xf32> to vector<128x32xbf16>
    %c3_162 = arith.constant 3 : index
    %c0_163 = arith.constant 0 : index
    %c0_164 = arith.constant 0 : index
    %264 = vector.load %arg8[%c3_162, %c0_163, %c0_164] : memref<4x128x32xbf16, #tpu.memory_space<vmem>>, vector<1x128x32xbf16>
    %265 = vector.shape_cast %264 : vector<1x128x32xbf16> to vector<128x32xbf16>
    %266 = vector.shape_cast %263 : vector<128x32xbf16> to vector<1x128x32xbf16>
    tpu.vector_store %arg8[%c3_162, %c0_163, %c0_164], %266 {strides = array<i32>} : memref<4x128x32xbf16, #tpu.memory_space<vmem>>, vector<1x128x32xbf16>,
    %c3_165 = arith.constant 3 : index
    %c0_166 = arith.constant 0 : index
    %c0_167 = arith.constant 0 : index
    %267 = vector.load %arg10[%c3_165, %c0_166, %c0_167] : memref<4x1x128xf32, #tpu.memory_space<vmem>>, vector<1x1x128xf32>
    %268 = vector.shape_cast %267 : vector<1x1x128xf32> to vector<1x128xf32>
    %269 = vector.shape_cast %256 : vector<1x128xf32> to vector<1x1x128xf32>
    tpu.vector_store %arg10[%c3_165, %c0_166, %c0_167], %269 {strides = array<i32>} : memref<4x1x128xf32, #tpu.memory_space<vmem>>, vector<1x1x128xf32>,
    return
  }
}

</mosaic_0001>

<llo_original>
// kernel: tpu_custom_call.1
$region0: #{tpu_custom_call.1}
  #allocation0 [shape = 'u32[]', space=smem, size = 0x4, offset = 0x4, fixed_abs, tag = 'smem constant byte address 0x4 - core index']
  #allocation1 [shape = 'u32[144,128]{1,0:T(1,128)}', space=vmem, size = 0x12000, scoped, tag = 'internal scratch']
  %s0 = inlined_call_operand.hbm [shape: f32[4,128,32], index: 0, kind: input, shape index: {}]
  %s1 = inlined_call_operand.hbm [shape: f32[4,128,32], index: 1, kind: input, shape index: {}]
  %s2 = inlined_call_operand.hbm [shape: f32[32,32], index: 2, kind: input, shape index: {}]
  %s3 = inlined_call_operand.hbm [shape: f32[32,32], index: 3, kind: input, shape index: {}]
  %s4 = inlined_call_operand.hbm [shape: f32[32,32], index: 4, kind: input, shape index: {}]
  %s5 = inlined_call_operand.hbm [shape: bf16[4,128,32], index: 5, kind: output, shape index: {0}]
  %s6 = inlined_call_operand.hbm [shape: bf16[4,128,32], index: 6, kind: output, shape index: {1}]
  %s7 = inlined_call_operand.hbm [shape: bf16[4,128,32], index: 7, kind: output, shape index: {2}]
  %s8 = inlined_call_operand.hbm [shape: bf16[4,128,32], index: 8, kind: output, shape index: {3}]
  %s9 = inlined_call_operand.hbm [shape: f32[4,1,128], index: 9, kind: output, shape index: {4}]
  %s10 = inlined_call_operand.hbm [shape: f32[4,1,128], index: 10, kind: output, shape index: {5}]
  %s11 = inlined_call_operand.hbm [shape: bf16[32,32], index: 11, kind: output, shape index: {6}]
  %s12 = inlined_call_operand.hbm [shape: f32[32,1], index: 12, kind: output, shape index: {7}]
  %s13 = inlined_call_operand.hbm [shape: bf16[32,32], index: 13, kind: output, shape index: {8}]
  %s14 = inlined_call_operand.hbm [shape: bf16[32,32], index: 14, kind: output, shape index: {9}]
  %15 = xla_tuple %s5, %s6, %s7, %s8, %s9, %s10, %s11, %s12, %s13, %s14
  %s16 = sld [smem:[#allocation0]]
  $region122: #{tpu_custom_call.1} parent=0
    _
  %s18 = ssub.s32 1, %s16
  %s19 = scalar_select 0, %s18, %s16
  $region1: #{tpu_custom_call.1} parent=0
    #allocation2 [shape = 'u8[262144]{0}', space=vmem, size = 0x40000, scoped, tag = 'input window, operand 0, single buffered']
    #allocation3 [shape = 's32[1]{0}', space=sflag, size = 0x4, scoped, tag = 'scoped memory for tpu_custom_call.1']
    #allocation4 [shape = 's32[1]{0}', space=sflag, size = 0x4, scoped, tag = 'scoped memory for tpu_custom_call.1']
    #allocation5 [shape = 'u8[262144]{0}', space=vmem, size = 0x40000, scoped, tag = 'input window, operand 1, single buffered']
    #allocation6 [shape = 's32[1]{0}', space=sflag, size = 0x4, scoped, tag = 'scoped memory for tpu_custom_call.1']
    #allocation7 [shape = 'u8[16384]{0}', space=vmem, size = 0x4000, scoped, tag = 'input window, operand 2, single buffered']
    #allocation8 [shape = 'u8[16384]{0}', space=vmem, size = 0x4000, scoped, tag = 'input window, operand 3, single buffered']
    #allocation9 [shape = 's32[1]{0}', space=sflag, size = 0x4, scoped, tag = 'scoped memory for tpu_custom_call.1']
    #allocation10 [shape = 'u8[16384]{0}', space=vmem, size = 0x4000, scoped, tag = 'input window, operand 4, single buffered']
    #allocation11 [shape = 'u8[131072]{0}', space=vmem, size = 0x20000, scoped, tag = 'output window, operand 0, single buffered']
    #allocation12 [shape = 'u8[131072]{0}', space=vmem, size = 0x20000, scoped, tag = 'output window, operand 1, single buffered']
    #allocation13 [shape = 's32[1]{0}', space=sflag, size = 0x4, scoped, tag = 'scoped memory for tpu_custom_call.1']
    #allocation14 [shape = 'u8[131072]{0}', space=vmem, size = 0x20000, scoped, tag = 'output window, operand 2, single buffered']
    #allocation15 [shape = 'u8[131072]{0}', space=vmem, size = 0x20000, scoped, tag = 'output window, operand 3, single buffered']
    #allocation16 [shape = 's32[1]{0}', space=sflag, size = 0x4, scoped, tag = 'scoped memory for tpu_custom_call.1']
    #allocation17 [shape = 'u8[2048]{0}', space=vmem, size = 0x800, scoped, tag = 'output window, operand 4, single buffered']
    #allocation18 [shape = 'u8[2048]{0}', space=vmem, size = 0x800, scoped, tag = 'output window, operand 5, single buffered']
    #allocation19 [shape = 's32[1]{0}', space=sflag, size = 0x4, scoped, tag = 'scoped memory for tpu_custom_call.1']
    #allocation20 [shape = 'u8[8192]{0}', space=vmem, size = 0x2000, scoped, tag = 'output window, operand 6, single buffered']
    #allocation21 [shape = 'u8[16384]{0}', space=vmem, size = 0x4000, scoped, tag = 'output window, operand 7, single buffered']
    #allocation22 [shape = 's32[1]{0}', space=sflag, size = 0x4, scoped, tag = 'scoped memory for tpu_custom_call.1']
    #allocation23 [shape = 'u8[8192]{0}', space=vmem, size = 0x2000, scoped, tag = 'output window, operand 8, single buffered']
    #allocation24 [shape = 'u8[8192]{0}', space=vmem, size = 0x2000, scoped, tag = 'output window, operand 9, single buffered']
    #allocation25 [shape = 's32[1]{0}', space=sflag, size = 0x4, scoped, tag = 'scoped memory for tpu_custom_call.1']
    %20 = vsyncpa [#allocation3], 0
    %21 = vsyncpa [#allocation6], 0
    %22 = vsyncpa [#allocation9], 0
    %23 = vsyncpa [#allocation4], 0
    %24 = vsyncpa [#allocation13], 0
    %25 = vsyncpa [#allocation16], 0
    %26 = vsyncpa [#allocation19], 0
    %27 = vsyncpa [#allocation22], 0
    %28 = vsyncpa [#allocation25], 0
    // Predicated region
    $region2: #{tpu_custom_call.1} parent=1 // pred_check
      _
    $region3: #{tpu_custom_call.1} parent=1 // pred_check_branch
      %30 = sbr.rel (0) target = $region5
    $region4: #{tpu_custom_call.1} parent=1 // pred_region
      %s32 = ssub.s32 8192, 8192
      %33 = vsyncadd [#allocation3], %s32
      %s34 = sshll.u32 [#allocation2], 4
      %s35 = int_to_ptr.vmem [resolvable:$true] %s34
      %40 = dma.hbm_to_vmem [thread:$0]  %s0, 8192, %s35, [#allocation3], 128, 128, 8
    $region5: #{tpu_custom_call.1} parent=1 // pred_fallthru
      _
    // Predicated region
    $region6: #{tpu_custom_call.1} parent=1 // pred_check
      _
    $region7: #{tpu_custom_call.1} parent=1 // pred_check_branch
      %42 = sbr.rel (0) target = $region9
    $region8: #{tpu_custom_call.1} parent=1 // pred_region
      %s44 = ssub.s32 8192, 8192
      %45 = vsyncadd [#allocation6], %s44
      %s46 = sshll.u32 [#allocation5], 4
      %s47 = int_to_ptr.vmem [resolvable:$true] %s46
      %52 = dma.hbm_to_vmem [thread:$0]  %s1, 8192, %s47, [#allocation6], 128, 128, 8
    $region9: #{tpu_custom_call.1} parent=1 // pred_fallthru
      _
    // Predicated region
    $region10: #{tpu_custom_call.1} parent=1 // pred_check
      _
    $region11: #{tpu_custom_call.1} parent=1 // pred_check_branch
      %54 = sbr.rel (0) target = $region13
    $region12: #{tpu_custom_call.1} parent=1 // pred_region
      %s56 = ssub.s32 512, 512
      %57 = vsyncadd [#allocation6], %s56
      %s58 = sshll.u32 [#allocation7], 4
      %s59 = int_to_ptr.vmem [resolvable:$true] %s58
      %64 = dma.hbm_to_vmem [thread:$0]  %s2, 512, %s59, [#allocation6], 128, 128, 8
    $region13: #{tpu_custom_call.1} parent=1 // pred_fallthru
      _
    // Predicated region
    $region14: #{tpu_custom_call.1} parent=1 // pred_check
      _
    $region15: #{tpu_custom_call.1} parent=1 // pred_check_branch
      %66 = sbr.rel (0) target = $region17
    $region16: #{tpu_custom_call.1} parent=1 // pred_region
      %s68 = ssub.s32 512, 512
      %69 = vsyncadd [#allocation9], %s68
      %s70 = sshll.u32 [#allocation8], 4
      %s71 = int_to_ptr.vmem [resolvable:$true] %s70
      %76 = dma.hbm_to_vmem [thread:$0]  %s3, 512, %s71, [#allocation9], 128, 128, 8
    $region17: #{tpu_custom_call.1} parent=1 // pred_fallthru
      _
    // Predicated region
    $region18: #{tpu_custom_call.1} parent=1 // pred_check
      _
    $region19: #{tpu_custom_call.1} parent=1 // pred_check_branch
      %78 = sbr.rel (0) target = $region21
    $region20: #{tpu_custom_call.1} parent=1 // pred_region
      %s80 = ssub.s32 512, 512
      %81 = vsyncadd [#allocation9], %s80
      %s82 = sshll.u32 [#allocation10], 4
      %s83 = int_to_ptr.vmem [resolvable:$true] %s82
      %88 = dma.hbm_to_vmem [thread:$0]  %s4, 512, %s83, [#allocation9], 128, 128, 8
    $region21: #{tpu_custom_call.1} parent=1 // pred_fallthru
      _
    // Predicated region
    $region22: #{tpu_custom_call.1} parent=1 // pred_check
      _
    $region23: #{tpu_custom_call.1} parent=1 // pred_check_branch
      %90 = sbr.rel (0) target = $region25
    $region24: #{tpu_custom_call.1} parent=1 // pred_region
      %91 = dma.done [#allocation3], 8192
    $region25: #{tpu_custom_call.1} parent=1 // pred_fallthru
      _
    // Predicated region
    $region26: #{tpu_custom_call.1} parent=1 // pred_check
      _
    $region27: #{tpu_custom_call.1} parent=1 // pred_check_branch
      %93 = sbr.rel (0) target = $region29
    $region28: #{tpu_custom_call.1} parent=1 // pred_region
      %94 = dma.done [#allocation6], 8192
    $region29: #{tpu_custom_call.1} parent=1 // pred_fallthru
      _
    // Predicated region
    $region30: #{tpu_custom_call.1} parent=1 // pred_check
      _
    $region31: #{tpu_custom_call.1} parent=1 // pred_check_branch
      %96 = sbr.rel (0) target = $region33
    $region32: #{tpu_custom_call.1} parent=1 // pred_region
      %97 = dma.done [#allocation6], 512
    $region33: #{tpu_custom_call.1} parent=1 // pred_fallthru
      _
    // Predicated region
    $region34: #{tpu_custom_call.1} parent=1 // pred_check
      _
    $region35: #{tpu_custom_call.1} parent=1 // pred_check_branch
      %99 = sbr.rel (0) target = $region37
    $region36: #{tpu_custom_call.1} parent=1 // pred_region
      %100 = dma.done [#allocation9], 512
    $region37: #{tpu_custom_call.1} parent=1 // pred_fallthru
      _
    // Predicated region
    $region38: #{tpu_custom_call.1} parent=1 // pred_check
      _
    $region39: #{tpu_custom_call.1} parent=1 // pred_check_branch
      %102 = sbr.rel (0) target = $region41
    $region40: #{tpu_custom_call.1} parent=1 // pred_region
      %103 = dma.done [#allocation9], 512
    $region41: #{tpu_custom_call.1} parent=1 // pred_fallthru
      _
    %v105 = vld [vmem:[#allocation8] sm:$0xff]
    %v106 = vld [vmem:[#allocation8 + $0x8] sm:$0xff]
    %v107 = vld [vmem:[#allocation8 + $0x10] sm:$0xff]
    %v108 = vld [vmem:[#allocation8 + $0x18] sm:$0xff]
    %v109 = vpack.c.bf16 %v106, %v105
    %v110 = vpack.c.bf16 %v108, %v107
    %v111 = vld [vmem:[#allocation10] sm:$0xff]
    %v112 = vld [vmem:[#allocation10 + $0x8] sm:$0xff]
    %v113 = vld [vmem:[#allocation10 + $0x10] sm:$0xff]
    %v114 = vld [vmem:[#allocation10 + $0x18] sm:$0xff]
    %v115 = vpack.c.bf16 %v112, %v111
    %v116 = vpack.c.bf16 %v114, %v113
    %v117 = vld [vmem:[#allocation7] sm:$0xff]
    %v118 = vld [vmem:[#allocation7 + $0x8] sm:$0xff]
    %v119 = vld [vmem:[#allocation7 + $0x10] sm:$0xff]
    %v120 = vld [vmem:[#allocation7 + $0x18] sm:$0xff]
    %v121 = vmul.f32 %v117, %v117
    %v122 = vmul.f32 %v118, %v118
    %v123 = vmul.f32 %v119, %v119
    %v124 = vmul.f32 %v120, %v120
    %vm125 = vcmask 261120
    %v126 = vsel %vm125, %v121, 0.0
    %127 = vadd.xlane.f32.xlu0 %v126
    %v128 = vpop.xlane.xlu0 %127
    %v129 = vsel %vm125, %v122, 0.0
    %130 = vadd.xlane.f32.xlu0 %v129
    %v131 = vpop.xlane.xlu0 %130
    %v132 = vsel %vm125, %v123, 0.0
    %133 = vadd.xlane.f32.xlu0 %v132
    %v134 = vpop.xlane.xlu0 %133
    %v135 = vsel %vm125, %v124, 0.0
    %136 = vadd.xlane.f32.xlu0 %v135
    %v137 = vpop.xlane.xlu0 %136
    %v138 = vmax.f32 %v128, 1e-24
    %v139 = vmax.f32 %v131, 1e-24
    %v140 = vmax.f32 %v134, 1e-24
    %v141 = vmax.f32 %v137, 1e-24
    %v142 = vrsqrt.pop %v138
    %v143 = vrsqrt.pop %v139
    %v144 = vrsqrt.pop %v140
    %v145 = vrsqrt.pop %v141
    %v146 = vmul.f32 %v117, %v142
    %v147 = vmul.f32 %v118, %v143
    %v148 = vmul.f32 %v119, %v144
    %v149 = vmul.f32 %v120, %v145
    %v150 = vpack.c.bf16 %v147, %v146
    %v151 = vpack.c.bf16 %v149, %v148
    %v154 = vunpack.c.l.b16 %v150
    %v155 = vunpack.c.h.b16 %v150
    %v156 = vunpack.c.l.b16 %v151
    %v157 = vunpack.c.h.b16 %v151
    %v158 = vpack.c.b16 %v154, %v154
    %v159 = vpack.c.b16 %v155, %v155
    %v160 = vpack.c.b16 %v156, %v156
    %v161 = vpack.c.b16 %v157, %v157
    %vm166 = vcmask 257024
    %167 = vst.msk [vmem:[#allocation20] sm:$0xf] %vm166, %v158
    %168 = vst.msk [vmem:[#allocation20 + $0x4] sm:$0xf] %vm166, %v159
    %169 = vst.msk [vmem:[#allocation20 + $0x8] sm:$0xf] %vm166, %v160
    %170 = vst.msk [vmem:[#allocation20 + $0xc] sm:$0xf] %vm166, %v161
    %v171 = vmul.f32 %v146, %v146
    %v172 = vmul.f32 %v147, %v147
    %v173 = vmul.f32 %v148, %v148
    %v174 = vmul.f32 %v149, %v149
    %v175 = vsel %vm125, %v171, 0.0
    %176 = vadd.xlane.f32.xlu0 %v175
    %v177 = vpop.xlane.xlu0 %176
    %v178 = vsel %vm125, %v172, 0.0
    %179 = vadd.xlane.f32.xlu0 %v178
    %v180 = vpop.xlane.xlu0 %179
    %v181 = vsel %vm125, %v173, 0.0
    %182 = vadd.xlane.f32.xlu0 %v181
    %v183 = vpop.xlane.xlu0 %182
    %v184 = vsel %vm125, %v174, 0.0
    %185 = vadd.xlane.f32.xlu0 %v184
    %v186 = vpop.xlane.xlu0 %185
    %v187 = vmax.f32 %v177, 0.0
    %v188 = vmax.f32 %v180, 0.0
    %v189 = vmax.f32 %v183, 0.0
    %v190 = vmax.f32 %v186, 0.0
    %v191 = vadd.f32 %v187, 1.0
    %v192 = vadd.f32 %v188, 1.0
    %v193 = vadd.f32 %v189, 1.0
    %v194 = vadd.f32 %v190, 1.0
    %vm195 = vcmask 7168
    %196 = vst.msk [vmem:[#allocation21] sm:$0xff] %vm195, %v191
    %197 = vst.msk [vmem:[#allocation21 + $0x8] sm:$0xff] %vm195, %v192
    %198 = vst.msk [vmem:[#allocation21 + $0x10] sm:$0xff] %vm195, %v193
    %199 = vst.msk [vmem:[#allocation21 + $0x18] sm:$0xff] %vm195, %v194
    %v200 = vpack.c.bf16 %v118, %v117
    %v201 = vpack.c.bf16 %v120, %v119
    %v203 = vsel %vm125, %v200, 0
    %v206 = vsel %vm125, %v201, 0
    %208 = vmatprep.subr.bf16.mxu0 0
    %209 = vmatpush1.bf16.msra.mxu0 %v109
    %210 = vmatprep.subr.bf16.mxu0 0
    %211 = vmatpush1.bf16.msra.mxu0 %v110
    %212 = vmatprep.subr.bf16.mxu0 0
    %213 = vmatpush1.bf16.msra.mxu0 0
    %214 = vmatprep.subr.bf16.mxu0 0
    %215 = vmatpush1.bf16.msra.mxu0 0
    %216 = vmatprep.subr.bf16.mxu0 0
    %217 = vmatpush1.bf16.msra.mxu0 0
    %218 = vmatprep.subr.bf16.mxu0 0
    %219 = vmatpush1.bf16.msra.mxu0 0
    %220 = vmatprep.subr.bf16.mxu0 0
    %221 = vmatpush1.bf16.msra.mxu0 0
    %222 = vmatprep.subr.bf16.mxu0 0
    %223 = vmatpush1.bf16.msra.mxu0 0
    %224 = vmatprep.subr.bf16.mxu0 0
    %225 = vmatpush1.bf16.msra.mxu0 0
    %226 = vmatprep.subr.bf16.mxu0 0
    %227 = vmatpush1.bf16.msra.mxu0 0
    %228 = vmatprep.subr.bf16.mxu0 0
    %229 = vmatpush1.bf16.msra.mxu0 0
    %230 = vmatprep.subr.bf16.mxu0 0
    %231 = vmatpush1.bf16.msra.mxu0 0
    %232 = vmatprep.subr.bf16.mxu0 0
    %233 = vmatpush1.bf16.msra.mxu0 0
    %234 = vmatprep.subr.bf16.mxu0 0
    %235 = vmatpush1.bf16.msra.mxu0 0
    %236 = vmatprep.subr.bf16.mxu0 0
    %237 = vmatpush1.bf16.msra.mxu0 0
    %238 = vmatprep.subr.bf16.mxu0 0
    %239 = vmatpush1.bf16.msra.mxu0 0
    %240 = vmatprep.mubr.bf16.mxu0 0
    %241 = vmatmul.mubr.bf16.gmra.mrb[0].mxu0 %v203
    %v242 = vpop.f32.mrb[0].mxu0
    %v243 = vadd.f32 0.0, %v242
    %v244 = vpop.f32.mrb[0].mxu0
    %v245 = vpop.f32.mrb[0].mxu0
    %v246 = vadd.f32 0.0, %v245
    %v247 = vpop.f32.mrb[0].mxu0
    %248 = vmatprep.mubr.bf16.mxu0 0
    %249 = vmatmul.mubr.bf16.gmra.mrb[0].mxu0 %v206
    %v250 = vpop.f32.mrb[0].mxu0
    %v251 = vadd.f32 0.0, %v250
    %v252 = vpop.f32.mrb[0].mxu0
    %v253 = vpop.f32.mrb[0].mxu0
    %v254 = vadd.f32 0.0, %v253
    %v255 = vpop.f32.mrb[0].mxu0
    %256 = vdwg.mxu0
    %v257 = vpack.c.bf16 %v246, %v243
    %v258 = vpack.c.bf16 %v254, %v251
    %v261 = vunpack.c.l.b16 %v257
    %v262 = vunpack.c.h.b16 %v257
    %v263 = vunpack.c.l.b16 %v258
    %v264 = vunpack.c.h.b16 %v258
    %v265 = vpack.c.b16 %v261, %v261
    %v266 = vpack.c.b16 %v262, %v262
    %v267 = vpack.c.b16 %v263, %v263
    %v268 = vpack.c.b16 %v264, %v264
    %273 = vst.msk [vmem:[#allocation23] sm:$0xf] %vm166, %v265
    %274 = vst.msk [vmem:[#allocation23 + $0x4] sm:$0xf] %vm166, %v266
    %275 = vst.msk [vmem:[#allocation23 + $0x8] sm:$0xf] %vm166, %v267
    %276 = vst.msk [vmem:[#allocation23 + $0xc] sm:$0xf] %vm166, %v268
    %277 = vmatprep.subr.bf16.mxu0 0
    %278 = vmatpush1.bf16.msra.mxu0 %v115
    %279 = vmatprep.subr.bf16.mxu0 0
    %280 = vmatpush1.bf16.msra.mxu0 %v116
    %281 = vmatprep.subr.bf16.mxu0 0
    %282 = vmatpush1.bf16.msra.mxu0 0
    %283 = vmatprep.subr.bf16.mxu0 0
    %284 = vmatpush1.bf16.msra.mxu0 0
    %285 = vmatprep.subr.bf16.mxu0 0
    %286 = vmatpush1.bf16.msra.mxu0 0
    %287 = vmatprep.subr.bf16.mxu0 0
    %288 = vmatpush1.bf16.msra.mxu0 0
    %289 = vmatprep.subr.bf16.mxu0 0
    %290 = vmatpush1.bf16.msra.mxu0 0
    %291 = vmatprep.subr.bf16.mxu0 0
    %292 = vmatpush1.bf16.msra.mxu0 0
    %293 = vmatprep.subr.bf16.mxu0 0
    %294 = vmatpush1.bf16.msra.mxu0 0
    %295 = vmatprep.subr.bf16.mxu0 0
    %296 = vmatpush1.bf16.msra.mxu0 0
    %297 = vmatprep.subr.bf16.mxu0 0
    %298 = vmatpush1.bf16.msra.mxu0 0
    %299 = vmatprep.subr.bf16.mxu0 0
    %300 = vmatpush1.bf16.msra.mxu0 0
    %301 = vmatprep.subr.bf16.mxu0 0
    %302 = vmatpush1.bf16.msra.mxu0 0
    %303 = vmatprep.subr.bf16.mxu0 0
    %304 = vmatpush1.bf16.msra.mxu0 0
    %305 = vmatprep.subr.bf16.mxu0 0
    %306 = vmatpush1.bf16.msra.mxu0 0
    %307 = vmatprep.subr.bf16.mxu0 0
    %308 = vmatpush1.bf16.msra.mxu0 0
    %309 = vmatprep.mubr.bf16.mxu0 0
    %310 = vmatmul.mubr.bf16.gmra.mrb[0].mxu0 %v203
    %v311 = vpop.f32.mrb[0].mxu0
    %v312 = vadd.f32 0.0, %v311
    %v313 = vpop.f32.mrb[0].mxu0
    %v314 = vpop.f32.mrb[0].mxu0
    %v315 = vadd.f32 0.0, %v314
    %v316 = vpop.f32.mrb[0].mxu0
    %317 = vmatprep.mubr.bf16.mxu0 0
    %318 = vmatmul.mubr.bf16.gmra.mrb[0].mxu0 %v206
    %v319 = vpop.f32.mrb[0].mxu0
    %v320 = vadd.f32 0.0, %v319
    %v321 = vpop.f32.mrb[0].mxu0
    %v322 = vpop.f32.mrb[0].mxu0
    %v323 = vadd.f32 0.0, %v322
    %v324 = vpop.f32.mrb[0].mxu0
    %325 = vdwg.mxu0
    %v326 = vpack.c.bf16 %v315, %v312
    %v327 = vpack.c.bf16 %v323, %v320
    %v330 = vunpack.c.l.b16 %v326
    %v331 = vunpack.c.h.b16 %v326
    %v332 = vunpack.c.l.b16 %v327
    %v333 = vunpack.c.h.b16 %v327
    %v334 = vpack.c.b16 %v330, %v330
    %v335 = vpack.c.b16 %v331, %v331
    %v336 = vpack.c.b16 %v332, %v332
    %v337 = vpack.c.b16 %v333, %v333
    %342 = vst.msk [vmem:[#allocation24] sm:$0xf] %vm166, %v334
    %343 = vst.msk [vmem:[#allocation24 + $0x4] sm:$0xf] %vm166, %v335
    %344 = vst.msk [vmem:[#allocation24 + $0x8] sm:$0xf] %vm166, %v336
    %345 = vst.msk [vmem:[#allocation24 + $0xc] sm:$0xf] %vm166, %v337
    %v346 = vld [vmem:[#allocation2] sm:$0xff]
    %v347 = vld [vmem:[#allocation2 + $0x8] sm:$0xff]
    %v348 = vld [vmem:[#allocation2 + $0x10] sm:$0xff]
    %v349 = vld [vmem:[#allocation2 + $0x18] sm:$0xff]
    %v350 = vld [vmem:[#allocation2 + $0x20] sm:$0xff]
    %v351 = vld [vmem:[#allocation2 + $0x28] sm:$0xff]
    %v352 = vld [vmem:[#allocation2 + $0x30] sm:$0xff]
    %v353 = vld [vmem:[#allocation2 + $0x38] sm:$0xff]
    %v354 = vld [vmem:[#allocation2 + $0x40] sm:$0xff]
    %v355 = vld [vmem:[#allocation2 + $0x48] sm:$0xff]
    %v356 = vld [vmem:[#allocation2 + $0x50] sm:$0xff]
    %v357 = vld [vmem:[#allocation2 + $0x58] sm:$0xff]
    %v358 = vld [vmem:[#allocation2 + $0x60] sm:$0xff]
    %v359 = vld [vmem:[#allocation2 + $0x68] sm:$0xff]
    %v360 = vld [vmem:[#allocation2 + $0x70] sm:$0xff]
    %v361 = vld [vmem:[#allocation2 + $0x78] sm:$0xff]
    %v362 = vmul.f32 %v346, %v346
    %v363 = vmul.f32 %v347, %v347
    %v364 = vmul.f32 %v348, %v348
    %v365 = vmul.f32 %v349, %v349
    %v366 = vmul.f32 %v350, %v350
    %v367 = vmul.f32 %v351, %v351
    %v368 = vmul.f32 %v352, %v352
    %v369 = vmul.f32 %v353, %v353
    %v370 = vmul.f32 %v354, %v354
    %v371 = vmul.f32 %v355, %v355
    %v372 = vmul.f32 %v356, %v356
    %v373 = vmul.f32 %v357, %v357
    %v374 = vmul.f32 %v358, %v358
    %v375 = vmul.f32 %v359, %v359
    %v376 = vmul.f32 %v360, %v360
    %v377 = vmul.f32 %v361, %v361
    %v378 = vsel %vm125, %v362, 0.0
    %379 = vadd.xlane.f32.xlu0 %v378
    %v380 = vpop.xlane.xlu0 %379
    %v381 = vsel %vm125, %v363, 0.0
    %382 = vadd.xlane.f32.xlu0 %v381
    %v383 = vpop.xlane.xlu0 %382
    %v384 = vsel %vm125, %v364, 0.0
    %385 = vadd.xlane.f32.xlu0 %v384
    %v386 = vpop.xlane.xlu0 %385
    %v387 = vsel %vm125, %v365, 0.0
    %388 = vadd.xlane.f32.xlu0 %v387
    %v389 = vpop.xlane.xlu0 %388
    %v390 = vsel %vm125, %v366, 0.0
    %391 = vadd.xlane.f32.xlu0 %v390
    %v392 = vpop.xlane.xlu0 %391
    %v393 = vsel %vm125, %v367, 0.0
    %394 = vadd.xlane.f32.xlu0 %v393
    %v395 = vpop.xlane.xlu0 %394
    %v396 = vsel %vm125, %v368, 0.0
    %397 = vadd.xlane.f32.xlu0 %v396
    %v398 = vpop.xlane.xlu0 %397
    %v399 = vsel %vm125, %v369, 0.0
    %400 = vadd.xlane.f32.xlu0 %v399
    %v401 = vpop.xlane.xlu0 %400
    %v402 = vsel %vm125, %v370, 0.0
    %403 = vadd.xlane.f32.xlu0 %v402
    %v404 = vpop.xlane.xlu0 %403
    %v405 = vsel %vm125, %v371, 0.0
    %406 = vadd.xlane.f32.xlu0 %v405
    %v407 = vpop.xlane.xlu0 %406
    %v408 = vsel %vm125, %v372, 0.0
    %409 = vadd.xlane.f32.xlu0 %v408
    %v410 = vpop.xlane.xlu0 %409
    %v411 = vsel %vm125, %v373, 0.0
    %412 = vadd.xlane.f32.xlu0 %v411
    %v413 = vpop.xlane.xlu0 %412
    %v414 = vsel %vm125, %v374, 0.0
    %415 = vadd.xlane.f32.xlu0 %v414
    %v416 = vpop.xlane.xlu0 %415
    %v417 = vsel %vm125, %v375, 0.0
    %418 = vadd.xlane.f32.xlu0 %v417
    %v419 = vpop.xlane.xlu0 %418
    %v420 = vsel %vm125, %v376, 0.0
    %421 = vadd.xlane.f32.xlu0 %v420
    %v422 = vpop.xlane.xlu0 %421
    %v423 = vsel %vm125, %v377, 0.0
    %424 = vadd.xlane.f32.xlu0 %v423
    %v425 = vpop.xlane.xlu0 %424
    %v426 = vmax.f32 %v380, 1e-24
    %v427 = vmax.f32 %v383, 1e-24
    %v428 = vmax.f32 %v386, 1e-24
    %v429 = vmax.f32 %v389, 1e-24
    %v430 = vmax.f32 %v392, 1e-24
    %v431 = vmax.f32 %v395, 1e-24
    %v432 = vmax.f32 %v398, 1e-24
    %v433 = vmax.f32 %v401, 1e-24
    %v434 = vmax.f32 %v404, 1e-24
    %v435 = vmax.f32 %v407, 1e-24
    %v436 = vmax.f32 %v410, 1e-24
    %v437 = vmax.f32 %v413, 1e-24
    %v438 = vmax.f32 %v416, 1e-24
    %v439 = vmax.f32 %v419, 1e-24
    %v440 = vmax.f32 %v422, 1e-24
    %v441 = vmax.f32 %v425, 1e-24
    %v442 = vrsqrt.pop %v426
    %v443 = vrsqrt.pop %v427
    %v444 = vrsqrt.pop %v428
    %v445 = vrsqrt.pop %v429
    %v446 = vrsqrt.pop %v430
    %v447 = vrsqrt.pop %v431
    %v448 = vrsqrt.pop %v432
    %v449 = vrsqrt.pop %v433
    %v450 = vrsqrt.pop %v434
    %v451 = vrsqrt.pop %v435
    %v452 = vrsqrt.pop %v436
    %v453 = vrsqrt.pop %v437
    %v454 = vrsqrt.pop %v438
    %v455 = vrsqrt.pop %v439
    %v456 = vrsqrt.pop %v440
    %v457 = vrsqrt.pop %v441
    %v458 = vmul.f32 %v346, %v442
    %v459 = vmul.f32 %v347, %v443
    %v460 = vmul.f32 %v348, %v444
    %v461 = vmul.f32 %v349, %v445
    %v462 = vmul.f32 %v350, %v446
    %v463 = vmul.f32 %v351, %v447
    %v464 = vmul.f32 %v352, %v448
    %v465 = vmul.f32 %v353, %v449
    %v466 = vmul.f32 %v354, %v450
    %v467 = vmul.f32 %v355, %v451
    %v468 = vmul.f32 %v356, %v452
    %v469 = vmul.f32 %v357, %v453
    %v470 = vmul.f32 %v358, %v454
    %v471 = vmul.f32 %v359, %v455
    %v472 = vmul.f32 %v360, %v456
    %v473 = vmul.f32 %v361, %v457
    %v475 = vsel %vm125, %v458, 0
    %v478 = vsel %vm125, %v459, 0
    %v481 = vsel %vm125, %v460, 0
    %v484 = vsel %vm125, %v461, 0
    %v487 = vsel %vm125, %v462, 0
    %v490 = vsel %vm125, %v463, 0
    %v493 = vsel %vm125, %v464, 0
    %v496 = vsel %vm125, %v465, 0
    %v499 = vsel %vm125, %v466, 0
    %v502 = vsel %vm125, %v467, 0
    %v505 = vsel %vm125, %v468, 0
    %v508 = vsel %vm125, %v469, 0
    %v511 = vsel %vm125, %v470, 0
    %v514 = vsel %vm125, %v471, 0
    %v517 = vsel %vm125, %v472, 0
    %v520 = vsel %vm125, %v473, 0
    %522 = vmatprep.subr.mxu0 0.0
    %523 = vmatpush1.xpose.msra.mxu0 %v475
    %524 = vmatprep.subr.mxu0 0.0
    %525 = vmatpush1.xpose.msra.mxu0 %v478
    %526 = vmatprep.subr.mxu0 0.0
    %527 = vmatpush1.xpose.msra.mxu0 %v481
    %528 = vmatprep.subr.mxu0 0.0
    %529 = vmatpush1.xpose.msra.mxu0 %v484
    %530 = vmatprep.subr.mxu0 0.0
    %531 = vmatpush1.xpose.msra.mxu0 %v487
    %532 = vmatprep.subr.mxu0 0.0
    %533 = vmatpush1.xpose.msra.mxu0 %v490
    %534 = vmatprep.subr.mxu0 0.0
    %535 = vmatpush1.xpose.msra.mxu0 %v493
    %536 = vmatprep.subr.mxu0 0.0
    %537 = vmatpush1.xpose.msra.mxu0 %v496
    %538 = vmatprep.subr.mxu0 0.0
    %539 = vmatpush1.xpose.msra.mxu0 %v499
    %540 = vmatprep.subr.mxu0 0.0
    %541 = vmatpush1.xpose.msra.mxu0 %v502
    %542 = vmatprep.subr.mxu0 0.0
    %543 = vmatpush1.xpose.msra.mxu0 %v505
    %544 = vmatprep.subr.mxu0 0.0
    %545 = vmatpush1.xpose.msra.mxu0 %v508
    %546 = vmatprep.subr.mxu0 0.0
    %547 = vmatpush1.xpose.msra.mxu0 %v511
    %548 = vmatprep.subr.mxu0 0.0
    %549 = vmatpush1.xpose.msra.mxu0 %v514
    %550 = vmatprep.subr.mxu0 0.0
    %551 = vmatpush1.xpose.msra.mxu0 %v517
    %552 = vmatprep.subr.mxu0 0.0
    %553 = vmatpush1.xpose.msra.mxu0 %v520
    %554 = vmatprep.subr.mxu0 0.0
    %555 = vmatpush1.xpose.msra.mxu0 0.0
    %556 = vmatprep.subr.mxu0 0.0
    %557 = vmatpush1.xpose.msra.mxu0 0.0
    %558 = vmatprep.subr.mxu0 0.0
    %559 = vmatpush1.xpose.msra.mxu0 0.0
    %560 = vmatprep.subr.mxu0 0.0
    %561 = vmatpush1.xpose.msra.mxu0 0.0
    %562 = vmatprep.subr.mxu0 0.0
    %563 = vmatpush1.xpose.msra.mxu0 0.0
    %564 = vmatprep.subr.mxu0 0.0
    %565 = vmatpush1.xpose.msra.mxu0 0.0
    %566 = vmatprep.subr.mxu0 0.0
    %567 = vmatpush1.xpose.msra.mxu0 0.0
    %568 = vmatprep.subr.mxu0 0.0
    %569 = vmatpush1.xpose.msra.mxu0 0.0
    %570 = vmatprep.subr.mxu0 0.0
    %571 = vmatpush1.xpose.msra.mxu0 0.0
    %572 = vmatprep.subr.mxu0 0.0
    %573 = vmatpush1.xpose.msra.mxu0 0.0
    %574 = vmatprep.subr.mxu0 0.0
    %575 = vmatpush1.xpose.msra.mxu0 0.0
    %576 = vmatprep.subr.mxu0 0.0
    %577 = vmatpush1.xpose.msra.mxu0 0.0
    %578 = vmatprep.subr.mxu0 0.0
    %579 = vmatpush1.xpose.msra.mxu0 0.0
    %580 = vmatprep.subr.mxu0 0.0
    %581 = vmatpush1.xpose.msra.mxu0 0.0
    %582 = vmatprep.subr.mxu0 0.0
    %583 = vmatpush1.xpose.msra.mxu0 0.0
    %584 = vmatprep.subr.mxu0 0.0
    %585 = vmatpush1.xpose.msra.mxu0 0.0
    %586 = vmatprep.mubr.f32.mxu0 0.0
    %587 = vmatmul.mubr.f32.gmra.mrb[0].mxu0 %v475
    %v588 = vpop.f32.mrb[0].mxu0
    %v589 = vadd.f32 0.0, %v588
    %v590 = vpop.f32.mrb[0].mxu0
    %591 = vmatprep.mubr.f32.mxu0 0.0
    %592 = vmatmul.mubr.f32.gmra.mrb[0].mxu0 %v478
    %v593 = vpop.f32.mrb[0].mxu0
    %v594 = vadd.f32 0.0, %v593
    %v595 = vpop.f32.mrb[0].mxu0
    %596 = vmatprep.mubr.f32.mxu0 0.0
    %597 = vmatmul.mubr.f32.gmra.mrb[0].mxu0 %v481
    %v598 = vpop.f32.mrb[0].mxu0
    %v599 = vadd.f32 0.0, %v598
    %v600 = vpop.f32.mrb[0].mxu0
    %601 = vmatprep.mubr.f32.mxu0 0.0
    %602 = vmatmul.mubr.f32.gmra.mrb[0].mxu0 %v484
    %v603 = vpop.f32.mrb[0].mxu0
    %v604 = vadd.f32 0.0, %v603
    %v605 = vpop.f32.mrb[0].mxu0
    %606 = vmatprep.mubr.f32.mxu0 0.0
    %607 = vmatmul.mubr.f32.gmra.mrb[0].mxu0 %v487
    %v608 = vpop.f32.mrb[0].mxu0
    %v609 = vadd.f32 0.0, %v608
    %v610 = vpop.f32.mrb[0].mxu0
    %611 = vmatprep.mubr.f32.mxu0 0.0
    %612 = vmatmul.mubr.f32.gmra.mrb[0].mxu0 %v490
    %v613 = vpop.f32.mrb[0].mxu0
    %v614 = vadd.f32 0.0, %v613
    %v615 = vpop.f32.mrb[0].mxu0
    %616 = vmatprep.mubr.f32.mxu0 0.0
    %617 = vmatmul.mubr.f32.gmra.mrb[0].mxu0 %v493
    %v618 = vpop.f32.mrb[0].mxu0
    %v619 = vadd.f32 0.0, %v618
    %v620 = vpop.f32.mrb[0].mxu0
    %621 = vmatprep.mubr.f32.mxu0 0.0
    %622 = vmatmul.mubr.f32.gmra.mrb[0].mxu0 %v496
    %v623 = vpop.f32.mrb[0].mxu0
    %v624 = vadd.f32 0.0, %v623
    %v625 = vpop.f32.mrb[0].mxu0
    %626 = vmatprep.mubr.f32.mxu0 0.0
    %627 = vmatmul.mubr.f32.gmra.mrb[0].mxu0 %v499
    %v628 = vpop.f32.mrb[0].mxu0
    %v629 = vadd.f32 0.0, %v628
    %v630 = vpop.f32.mrb[0].mxu0
    %631 = vmatprep.mubr.f32.mxu0 0.0
    %632 = vmatmul.mubr.f32.gmra.mrb[0].mxu0 %v502
    %v633 = vpop.f32.mrb[0].mxu0
    %v634 = vadd.f32 0.0, %v633
    %v635 = vpop.f32.mrb[0].mxu0
    %636 = vmatprep.mubr.f32.mxu0 0.0
    %637 = vmatmul.mubr.f32.gmra.mrb[0].mxu0 %v505
    %v638 = vpop.f32.mrb[0].mxu0
    %v639 = vadd.f32 0.0, %v638
    %v640 = vpop.f32.mrb[0].mxu0
    %641 = vmatprep.mubr.f32.mxu0 0.0
    %642 = vmatmul.mubr.f32.gmra.mrb[0].mxu0 %v508
    %v643 = vpop.f32.mrb[0].mxu0
    %v644 = vadd.f32 0.0, %v643
    %v645 = vpop.f32.mrb[0].mxu0
    %646 = vmatprep.mubr.f32.mxu0 0.0
    %647 = vmatmul.mubr.f32.gmra.mrb[0].mxu0 %v511
    %v648 = vpop.f32.mrb[0].mxu0
    %v649 = vadd.f32 0.0, %v648
    %v650 = vpop.f32.mrb[0].mxu0
    %651 = vmatprep.mubr.f32.mxu0 0.0
    %652 = vmatmul.mubr.f32.gmra.mrb[0].mxu0 %v514
    %v653 = vpop.f32.mrb[0].mxu0
    %v654 = vadd.f32 0.0, %v653
    %v655 = vpop.f32.mrb[0].mxu0
    %656 = vmatprep.mubr.f32.mxu0 0.0
    %657 = vmatmul.mubr.f32.gmra.mrb[0].mxu0 %v517
    %v658 = vpop.f32.mrb[0].mxu0
    %v659 = vadd.f32 0.0, %v658
    %v660 = vpop.f32.mrb[0].mxu0
    %661 = vmatprep.mubr.f32.mxu0 0.0
    %662 = vmatmul.mubr.f32.gmra.mrb[0].mxu0 %v520
    %v663 = vpop.f32.mrb[0].mxu0
    %v664 = vadd.f32 0.0, %v663
    %v665 = vpop.f32.mrb[0].mxu0
    %666 = vdwg.mxu0
    %v667 = vmax.f32 %v589, 0.0
    %v668 = vmax.f32 %v594, 0.0
    %v669 = vmax.f32 %v599, 0.0
    %v670 = vmax.f32 %v604, 0.0
    %v671 = vmax.f32 %v609, 0.0
    %v672 = vmax.f32 %v614, 0.0
    %v673 = vmax.f32 %v619, 0.0
    %v674 = vmax.f32 %v624, 0.0
    %v675 = vmax.f32 %v629, 0.0
    %v676 = vmax.f32 %v634, 0.0
    %v677 = vmax.f32 %v639, 0.0
    %v678 = vmax.f32 %v644, 0.0
    %v679 = vmax.f32 %v649, 0.0
    %v680 = vmax.f32 %v654, 0.0
    %v681 = vmax.f32 %v659, 0.0
    %v682 = vmax.f32 %v664, 0.0
    %v683 = vadd.f32 %v667, %v668
    %v684 = vadd.f32 %v683, %v669
    %v685 = vadd.f32 %v684, %v670
    %v686 = vadd.f32 %v685, %v671
    %v687 = vadd.f32 %v686, %v672
    %v688 = vadd.f32 %v687, %v673
    %v689 = vadd.f32 %v688, %v674
    %v690 = vadd.f32 %v689, %v675
    %v691 = vadd.f32 %v690, %v676
    %v692 = vadd.f32 %v691, %v677
    %v693 = vadd.f32 %v692, %v678
    %v694 = vadd.f32 %v693, %v679
    %v695 = vadd.f32 %v694, %v680
    %v696 = vadd.f32 %v695, %v681
    %v697 = vadd.f32 %v696, %v682
    %v698 = vrot.slane %v697, 4
    %v699 = vadd.f32 %v697, %v698
    %v700 = vrot.slane %v699, 2
    %v701 = vadd.f32 %v699, %v700
    %v702 = vrot.slane %v701, 1
    %v703 = vadd.f32 %v701, %v702
    %v704 = vadd.f32 %v703, 1.0
    %v705 = vpack.c.bf16 %v347, %v346
    %v706 = vpack.c.bf16 %v349, %v348
    %v707 = vpack.c.bf16 %v351, %v350
    %v708 = vpack.c.bf16 %v353, %v352
    %v709 = vpack.c.bf16 %v355, %v354
    %v710 = vpack.c.bf16 %v357, %v356
    %v711 = vpack.c.bf16 %v359, %v358
    %v712 = vpack.c.bf16 %v361, %v360
    %v714 = vsel %vm125, %v705, 0
    %v717 = vsel %vm125, %v706, 0
    %v720 = vsel %vm125, %v707, 0
    %v723 = vsel %vm125, %v708, 0
    %v726 = vsel %vm125, %v709, 0
    %v729 = vsel %vm125, %v710, 0
    %v732 = vsel %vm125, %v711, 0
    %v735 = vsel %vm125, %v712, 0
    %737 = vmatprep.subr.bf16.mxu0 0
    %738 = vmatpush1.bf16.msra.mxu0 %v109
    %739 = vmatprep.subr.bf16.mxu0 0
    %740 = vmatpush1.bf16.msra.mxu0 %v110
    %741 = vmatprep.subr.bf16.mxu0 0
    %742 = vmatpush1.bf16.msra.mxu0 0
    %743 = vmatprep.subr.bf16.mxu0 0
    %744 = vmatpush1.bf16.msra.mxu0 0
    %745 = vmatprep.subr.bf16.mxu0 0
    %746 = vmatpush1.bf16.msra.mxu0 0
    %747 = vmatprep.subr.bf16.mxu0 0
    %748 = vmatpush1.bf16.msra.mxu0 0
    %749 = vmatprep.subr.bf16.mxu0 0
    %750 = vmatpush1.bf16.msra.mxu0 0
    %751 = vmatprep.subr.bf16.mxu0 0
    %752 = vmatpush1.bf16.msra.mxu0 0
    %753 = vmatprep.subr.bf16.mxu0 0
    %754 = vmatpush1.bf16.msra.mxu0 0
    %755 = vmatprep.subr.bf16.mxu0 0
    %756 = vmatpush1.bf16.msra.mxu0 0
    %757 = vmatprep.subr.bf16.mxu0 0
    %758 = vmatpush1.bf16.msra.mxu0 0
    %759 = vmatprep.subr.bf16.mxu0 0
    %760 = vmatpush1.bf16.msra.mxu0 0
    %761 = vmatprep.subr.bf16.mxu0 0
    %762 = vmatpush1.bf16.msra.mxu0 0
    %763 = vmatprep.subr.bf16.mxu0 0
    %764 = vmatpush1.bf16.msra.mxu0 0
    %765 = vmatprep.subr.bf16.mxu0 0
    %766 = vmatpush1.bf16.msra.mxu0 0
    %767 = vmatprep.subr.bf16.mxu0 0
    %768 = vmatpush1.bf16.msra.mxu0 0
    %769 = vmatprep.mubr.bf16.mxu0 0
    %770 = vmatmul.mubr.bf16.gmra.mrb[0].mxu0 %v714
    %v771 = vpop.f32.mrb[0].mxu0
    %v772 = vadd.f32 0.0, %v771
    %v773 = vpop.f32.mrb[0].mxu0
    %v774 = vpop.f32.mrb[0].mxu0
    %v775 = vadd.f32 0.0, %v774
    %v776 = vpop.f32.mrb[0].mxu0
    %777 = vmatprep.mubr.bf16.mxu0 0
    %778 = vmatmul.mubr.bf16.gmra.mrb[0].mxu0 %v717
    %v779 = vpop.f32.mrb[0].mxu0
    %v780 = vadd.f32 0.0, %v779
    %v781 = vpop.f32.mrb[0].mxu0
    %v782 = vpop.f32.mrb[0].mxu0
    %v783 = vadd.f32 0.0, %v782
    %v784 = vpop.f32.mrb[0].mxu0
    %785 = vmatprep.mubr.bf16.mxu0 0
    %786 = vmatmul.mubr.bf16.gmra.mrb[0].mxu0 %v720
    %v787 = vpop.f32.mrb[0].mxu0
    %v788 = vadd.f32 0.0, %v787
    %v789 = vpop.f32.mrb[0].mxu0
    %v790 = vpop.f32.mrb[0].mxu0
    %v791 = vadd.f32 0.0, %v790
    %v792 = vpop.f32.mrb[0].mxu0
    %793 = vmatprep.mubr.bf16.mxu0 0
    %794 = vmatmul.mubr.bf16.gmra.mrb[0].mxu0 %v723
    %v795 = vpop.f32.mrb[0].mxu0
    %v796 = vadd.f32 0.0, %v795
    %v797 = vpop.f32.mrb[0].mxu0
    %v798 = vpop.f32.mrb[0].mxu0
    %v799 = vadd.f32 0.0, %v798
    %v800 = vpop.f32.mrb[0].mxu0
    %801 = vmatprep.mubr.bf16.mxu0 0
    %802 = vmatmul.mubr.bf16.gmra.mrb[0].mxu0 %v726
    %v803 = vpop.f32.mrb[0].mxu0
    %v804 = vadd.f32 0.0, %v803
    %v805 = vpop.f32.mrb[0].mxu0
    %v806 = vpop.f32.mrb[0].mxu0
    %v807 = vadd.f32 0.0, %v806
    %v808 = vpop.f32.mrb[0].mxu0
    %809 = vmatprep.mubr.bf16.mxu0 0
    %810 = vmatmul.mubr.bf16.gmra.mrb[0].mxu0 %v729
    %v811 = vpop.f32.mrb[0].mxu0
    %v812 = vadd.f32 0.0, %v811
    %v813 = vpop.f32.mrb[0].mxu0
    %v814 = vpop.f32.mrb[0].mxu0
    %v815 = vadd.f32 0.0, %v814
    %v816 = vpop.f32.mrb[0].mxu0
    %817 = vmatprep.mubr.bf16.mxu0 0
    %818 = vmatmul.mubr.bf16.gmra.mrb[0].mxu0 %v732
    %v819 = vpop.f32.mrb[0].mxu0
    %v820 = vadd.f32 0.0, %v819
    %v821 = vpop.f32.mrb[0].mxu0
    %v822 = vpop.f32.mrb[0].mxu0
    %v823 = vadd.f32 0.0, %v822
    %v824 = vpop.f32.mrb[0].mxu0
    %825 = vmatprep.mubr.bf16.mxu0 0
    %826 = vmatmul.mubr.bf16.gmra.mrb[0].mxu0 %v735
    %v827 = vpop.f32.mrb[0].mxu0
    %v828 = vadd.f32 0.0, %v827
    %v829 = vpop.f32.mrb[0].mxu0
    %v830 = vpop.f32.mrb[0].mxu0
    %v831 = vadd.f32 0.0, %v830
    %v832 = vpop.f32.mrb[0].mxu0
    %833 = vdwg.mxu0
    %v834 = vpack.c.bf16 %v459, %v458
    %v835 = vpack.c.bf16 %v461, %v460
    %v836 = vpack.c.bf16 %v463, %v462
    %v837 = vpack.c.bf16 %v465, %v464
    %v838 = vpack.c.bf16 %v467, %v466
    %v839 = vpack.c.bf16 %v469, %v468
    %v840 = vpack.c.bf16 %v471, %v470
    %v841 = vpack.c.bf16 %v473, %v472
    %v850 = vunpack.c.l.b16 %v834
    %v851 = vunpack.c.h.b16 %v834
    %v852 = vunpack.c.l.b16 %v835
    %v853 = vunpack.c.h.b16 %v835
    %v854 = vunpack.c.l.b16 %v836
    %v855 = vunpack.c.h.b16 %v836
    %v856 = vunpack.c.l.b16 %v837
    %v857 = vunpack.c.h.b16 %v837
    %v858 = vunpack.c.l.b16 %v838
    %v859 = vunpack.c.h.b16 %v838
    %v860 = vunpack.c.l.b16 %v839
    %v861 = vunpack.c.h.b16 %v839
    %v862 = vunpack.c.l.b16 %v840
    %v863 = vunpack.c.h.b16 %v840
    %v864 = vunpack.c.l.b16 %v841
    %v865 = vunpack.c.h.b16 %v841
    %v866 = vpack.c.b16 %v850, %v850
    %v867 = vpack.c.b16 %v851, %v851
    %v868 = vpack.c.b16 %v852, %v852
    %v869 = vpack.c.b16 %v853, %v853
    %v870 = vpack.c.b16 %v854, %v854
    %v871 = vpack.c.b16 %v855, %v855
    %v872 = vpack.c.b16 %v856, %v856
    %v873 = vpack.c.b16 %v857, %v857
    %v874 = vpack.c.b16 %v858, %v858
    %v875 = vpack.c.b16 %v859, %v859
    %v876 = vpack.c.b16 %v860, %v860
    %v877 = vpack.c.b16 %v861, %v861
    %v878 = vpack.c.b16 %v862, %v862
    %v879 = vpack.c.b16 %v863, %v863
    %v880 = vpack.c.b16 %v864, %v864
    %v881 = vpack.c.b16 %v865, %v865
    %898 = vst.msk [vmem:[#allocation11] sm:$0xf] %vm166, %v866
    %899 = vst.msk [vmem:[#allocation11 + $0x4] sm:$0xf] %vm166, %v867
    %900 = vst.msk [vmem:[#allocation11 + $0x8] sm:$0xf] %vm166, %v868
    %901 = vst.msk [vmem:[#allocation11 + $0xc] sm:$0xf] %vm166, %v869
    %902 = vst.msk [vmem:[#allocation11 + $0x10] sm:$0xf] %vm166, %v870
    %903 = vst.msk [vmem:[#allocation11 + $0x14] sm:$0xf] %vm166, %v871
    %904 = vst.msk [vmem:[#allocation11 + $0x18] sm:$0xf] %vm166, %v872
    %905 = vst.msk [vmem:[#allocation11 + $0x1c] sm:$0xf] %vm166, %v873
    %906 = vst.msk [vmem:[#allocation11 + $0x20] sm:$0xf] %vm166, %v874
    %907 = vst.msk [vmem:[#allocation11 + $0x24] sm:$0xf] %vm166, %v875
    %908 = vst.msk [vmem:[#allocation11 + $0x28] sm:$0xf] %vm166, %v876
    %909 = vst.msk [vmem:[#allocation11 + $0x2c] sm:$0xf] %vm166, %v877
    %910 = vst.msk [vmem:[#allocation11 + $0x30] sm:$0xf] %vm166, %v878
    %911 = vst.msk [vmem:[#allocation11 + $0x34] sm:$0xf] %vm166, %v879
    %912 = vst.msk [vmem:[#allocation11 + $0x38] sm:$0xf] %vm166, %v880
    %913 = vst.msk [vmem:[#allocation11 + $0x3c] sm:$0xf] %vm166, %v881
    %v914 = vpack.c.bf16 %v775, %v772
    %v915 = vpack.c.bf16 %v783, %v780
    %v916 = vpack.c.bf16 %v791, %v788
    %v917 = vpack.c.bf16 %v799, %v796
    %v918 = vpack.c.bf16 %v807, %v804
    %v919 = vpack.c.bf16 %v815, %v812
    %v920 = vpack.c.bf16 %v823, %v820
    %v921 = vpack.c.bf16 %v831, %v828
    %v930 = vunpack.c.l.b16 %v914
    %v931 = vunpack.c.h.b16 %v914
    %v932 = vunpack.c.l.b16 %v915
    %v933 = vunpack.c.h.b16 %v915
    %v934 = vunpack.c.l.b16 %v916
    %v935 = vunpack.c.h.b16 %v916
    %v936 = vunpack.c.l.b16 %v917
    %v937 = vunpack.c.h.b16 %v917
    %v938 = vunpack.c.l.b16 %v918
    %v939 = vunpack.c.h.b16 %v918
    %v940 = vunpack.c.l.b16 %v919
    %v941 = vunpack.c.h.b16 %v919
    %v942 = vunpack.c.l.b16 %v920
    %v943 = vunpack.c.h.b16 %v920
    %v944 = vunpack.c.l.b16 %v921
    %v945 = vunpack.c.h.b16 %v921
    %v946 = vpack.c.b16 %v930, %v930
    %v947 = vpack.c.b16 %v931, %v931
    %v948 = vpack.c.b16 %v932, %v932
    %v949 = vpack.c.b16 %v933, %v933
    %v950 = vpack.c.b16 %v934, %v934
    %v951 = vpack.c.b16 %v935, %v935
    %v952 = vpack.c.b16 %v936, %v936
    %v953 = vpack.c.b16 %v937, %v937
    %v954 = vpack.c.b16 %v938, %v938
    %v955 = vpack.c.b16 %v939, %v939
    %v956 = vpack.c.b16 %v940, %v940
    %v957 = vpack.c.b16 %v941, %v941
    %v958 = vpack.c.b16 %v942, %v942
    %v959 = vpack.c.b16 %v943, %v943
    %v960 = vpack.c.b16 %v944, %v944
    %v961 = vpack.c.b16 %v945, %v945
    %978 = vst.msk [vmem:[#allocation14] sm:$0xf] %vm166, %v946
    %979 = vst.msk [vmem:[#allocation14 + $0x4] sm:$0xf] %vm166, %v947
    %980 = vst.msk [vmem:[#allocation14 + $0x8] sm:$0xf] %vm166, %v948
    %981 = vst.msk [vmem:[#allocation14 + $0xc] sm:$0xf] %vm166, %v949
    %982 = vst.msk [vmem:[#allocation14 + $0x10] sm:$0xf] %vm166, %v950
    %983 = vst.msk [vmem:[#allocation14 + $0x14] sm:$0xf] %vm166, %v951
    %984 = vst.msk [vmem:[#allocation14 + $0x18] sm:$0xf] %vm166, %v952
    %985 = vst.msk [vmem:[#allocation14 + $0x1c] sm:$0xf] %vm166, %v953
    %986 = vst.msk [vmem:[#allocation14 + $0x20] sm:$0xf] %vm166, %v954
    %987 = vst.msk [vmem:[#allocation14 + $0x24] sm:$0xf] %vm166, %v955
    %988 = vst.msk [vmem:[#allocation14 + $0x28] sm:$0xf] %vm166, %v956
    %989 = vst.msk [vmem:[#allocation14 + $0x2c] sm:$0xf] %vm166, %v957
    %990 = vst.msk [vmem:[#allocation14 + $0x30] sm:$0xf] %vm166, %v958
    %991 = vst.msk [vmem:[#allocation14 + $0x34] sm:$0xf] %vm166, %v959
    %992 = vst.msk [vmem:[#allocation14 + $0x38] sm:$0xf] %vm166, %v960
    %993 = vst.msk [vmem:[#allocation14 + $0x3c] sm:$0xf] %vm166, %v961
    %994 = vst [vmem:[#allocation17] sm:$0x1] %v704
    %v995 = vld [vmem:[#allocation5] sm:$0xff]
    %v996 = vld [vmem:[#allocation5 + $0x8] sm:$0xff]
    %v997 = vld [vmem:[#allocation5 + $0x10] sm:$0xff]
    %v998 = vld [vmem:[#allocation5 + $0x18] sm:$0xff]
    %v999 = vld [vmem:[#allocation5 + $0x20] sm:$0xff]
    %v1000 = vld [vmem:[#allocation5 + $0x28] sm:$0xff]
    %v1001 = vld [vmem:[#allocation5 + $0x30] sm:$0xff]
    %v1002 = vld [vmem:[#allocation5 + $0x38] sm:$0xff]
    %v1003 = vld [vmem:[#allocation5 + $0x40] sm:$0xff]
    %v1004 = vld [vmem:[#allocation5 + $0x48] sm:$0xff]
    %v1005 = vld [vmem:[#allocation5 + $0x50] sm:$0xff]
    %v1006 = vld [vmem:[#allocation5 + $0x58] sm:$0xff]
    %v1007 = vld [vmem:[#allocation5 + $0x60] sm:$0xff]
    %v1008 = vld [vmem:[#allocation5 + $0x68] sm:$0xff]
    %v1009 = vld [vmem:[#allocation5 + $0x70] sm:$0xff]
    %v1010 = vld [vmem:[#allocation5 + $0x78] sm:$0xff]
    %v1011 = vmul.f32 %v995, %v995
    %v1012 = vmul.f32 %v996, %v996
    %v1013 = vmul.f32 %v997, %v997
    %v1014 = vmul.f32 %v998, %v998
    %v1015 = vmul.f32 %v999, %v999
    %v1016 = vmul.f32 %v1000, %v1000
    %v1017 = vmul.f32 %v1001, %v1001
    %v1018 = vmul.f32 %v1002, %v1002
    %v1019 = vmul.f32 %v1003, %v1003
    %v1020 = vmul.f32 %v1004, %v1004
    %v1021 = vmul.f32 %v1005, %v1005
    %v1022 = vmul.f32 %v1006, %v1006
    %v1023 = vmul.f32 %v1007, %v1007
    %v1024 = vmul.f32 %v1008, %v1008
    %v1025 = vmul.f32 %v1009, %v1009
    %v1026 = vmul.f32 %v1010, %v1010
    %v1027 = vsel %vm125, %v1011, 0.0
    %1028 = vadd.xlane.f32.xlu0 %v1027
    %v1029 = vpop.xlane.xlu0 %1028
    %v1030 = vsel %vm125, %v1012, 0.0
    %1031 = vadd.xlane.f32.xlu0 %v1030
    %v1032 = vpop.xlane.xlu0 %1031
    %v1033 = vsel %vm125, %v1013, 0.0
    %1034 = vadd.xlane.f32.xlu0 %v1033
    %v1035 = vpop.xlane.xlu0 %1034
    %v1036 = vsel %vm125, %v1014, 0.0
    %1037 = vadd.xlane.f32.xlu0 %v1036
    %v1038 = vpop.xlane.xlu0 %1037
    %v1039 = vsel %vm125, %v1015, 0.0
    %1040 = vadd.xlane.f32.xlu0 %v1039
    %v1041 = vpop.xlane.xlu0 %1040
    %v1042 = vsel %vm125, %v1016, 0.0
    %1043 = vadd.xlane.f32.xlu0 %v1042
    %v1044 = vpop.xlane.xlu0 %1043
    %v1045 = vsel %vm125, %v1017, 0.0
    %1046 = vadd.xlane.f32.xlu0 %v1045
    %v1047 = vpop.xlane.xlu0 %1046
    %v1048 = vsel %vm125, %v1018, 0.0
    %1049 = vadd.xlane.f32.xlu0 %v1048
    %v1050 = vpop.xlane.xlu0 %1049
    %v1051 = vsel %vm125, %v1019, 0.0
    %1052 = vadd.xlane.f32.xlu0 %v1051
    %v1053 = vpop.xlane.xlu0 %1052
    %v1054 = vsel %vm125, %v1020, 0.0
    %1055 = vadd.xlane.f32.xlu0 %v1054
    %v1056 = vpop.xlane.xlu0 %1055
    %v1057 = vsel %vm125, %v1021, 0.0
    %1058 = vadd.xlane.f32.xlu0 %v1057
    %v1059 = vpop.xlane.xlu0 %1058
    %v1060 = vsel %vm125, %v1022, 0.0
    %1061 = vadd.xlane.f32.xlu0 %v1060
    %v1062 = vpop.xlane.xlu0 %1061
    %v1063 = vsel %vm125, %v1023, 0.0
    %1064 = vadd.xlane.f32.xlu0 %v1063
    %v1065 = vpop.xlane.xlu0 %1064
    %v1066 = vsel %vm125, %v1024, 0.0
    %1067 = vadd.xlane.f32.xlu0 %v1066
    %v1068 = vpop.xlane.xlu0 %1067
    %v1069 = vsel %vm125, %v1025, 0.0
    %1070 = vadd.xlane.f32.xlu0 %v1069
    %v1071 = vpop.xlane.xlu0 %1070
    %v1072 = vsel %vm125, %v1026, 0.0
    %1073 = vadd.xlane.f32.xlu0 %v1072
    %v1074 = vpop.xlane.xlu0 %1073
    %v1075 = vmax.f32 %v1029, 1e-24
    %v1076 = vmax.f32 %v1032, 1e-24
    %v1077 = vmax.f32 %v1035, 1e-24
    %v1078 = vmax.f32 %v1038, 1e-24
    %v1079 = vmax.f32 %v1041, 1e-24
    %v1080 = vmax.f32 %v1044, 1e-24
    %v1081 = vmax.f32 %v1047, 1e-24
    %v1082 = vmax.f32 %v1050, 1e-24
    %v1083 = vmax.f32 %v1053, 1e-24
    %v1084 = vmax.f32 %v1056, 1e-24
    %v1085 = vmax.f32 %v1059, 1e-24
    %v1086 = vmax.f32 %v1062, 1e-24
    %v1087 = vmax.f32 %v1065, 1e-24
    %v1088 = vmax.f32 %v1068, 1e-24
    %v1089 = vmax.f32 %v1071, 1e-24
    %v1090 = vmax.f32 %v1074, 1e-24
    %v1091 = vrsqrt.pop %v1075
    %v1092 = vrsqrt.pop %v1076
    %v1093 = vrsqrt.pop %v1077
    %v1094 = vrsqrt.pop %v1078
    %v1095 = vrsqrt.pop %v1079
    %v1096 = vrsqrt.pop %v1080
    %v1097 = vrsqrt.pop %v1081
    %v1098 = vrsqrt.pop %v1082
    %v1099 = vrsqrt.pop %v1083
    %v1100 = vrsqrt.pop %v1084
    %v1101 = vrsqrt.pop %v1085
    %v1102 = vrsqrt.pop %v1086
    %v1103 = vrsqrt.pop %v1087
    %v1104 = vrsqrt.pop %v1088
    %v1105 = vrsqrt.pop %v1089
    %v1106 = vrsqrt.pop %v1090
    %v1107 = vmul.f32 %v995, %v1091
    %v1108 = vmul.f32 %v996, %v1092
    %v1109 = vmul.f32 %v997, %v1093
    %v1110 = vmul.f32 %v998, %v1094
    %v1111 = vmul.f32 %v999, %v1095
    %v1112 = vmul.f32 %v1000, %v1096
    %v1113 = vmul.f32 %v1001, %v1097
    %v1114 = vmul.f32 %v1002, %v1098
    %v1115 = vmul.f32 %v1003, %v1099
    %v1116 = vmul.f32 %v1004, %v1100
    %v1117 = vmul.f32 %v1005, %v1101
    %v1118 = vmul.f32 %v1006, %v1102
    %v1119 = vmul.f32 %v1007, %v1103
    %v1120 = vmul.f32 %v1008, %v1104
    %v1121 = vmul.f32 %v1009, %v1105
    %v1122 = vmul.f32 %v1010, %v1106
    %v1124 = vsel %vm125, %v1107, 0
    %v1127 = vsel %vm125, %v1108, 0
    %v1130 = vsel %vm125, %v1109, 0
    %v1133 = vsel %vm125, %v1110, 0
    %v1136 = vsel %vm125, %v1111, 0
    %v1139 = vsel %vm125, %v1112, 0
    %v1142 = vsel %vm125, %v1113, 0
    %v1145 = vsel %vm125, %v1114, 0
    %v1148 = vsel %vm125, %v1115, 0
    %v1151 = vsel %vm125, %v1116, 0
    %v1154 = vsel %vm125, %v1117, 0
    %v1157 = vsel %vm125, %v1118, 0
    %v1160 = vsel %vm125, %v1119, 0
    %v1163 = vsel %vm125, %v1120, 0
    %v1166 = vsel %vm125, %v1121, 0
    %v1169 = vsel %vm125, %v1122, 0
    %1171 = vmatprep.subr.mxu0 0.0
    %1172 = vmatpush1.xpose.msra.mxu0 %v1124
    %1173 = vmatprep.subr.mxu0 0.0
    %1174 = vmatpush1.xpose.msra.mxu0 %v1127
    %1175 = vmatprep.subr.mxu0 0.0
    %1176 = vmatpush1.xpose.msra.mxu0 %v1130
    %1177 = vmatprep.subr.mxu0 0.0
    %1178 = vmatpush1.xpose.msra.mxu0 %v1133
    %1179 = vmatprep.subr.mxu0 0.0
    %1180 = vmatpush1.xpose.msra.mxu0 %v1136
    %1181 = vmatprep.subr.mxu0 0.0
    %1182 = vmatpush1.xpose.msra.mxu0 %v1139
    %1183 = vmatprep.subr.mxu0 0.0
    %1184 = vmatpush1.xpose.msra.mxu0 %v1142
    %1185 = vmatprep.subr.mxu0 0.0
    %1186 = vmatpush1.xpose.msra.mxu0 %v1145
    %1187 = vmatprep.subr.mxu0 0.0
    %1188 = vmatpush1.xpose.msra.mxu0 %v1148
    %1189 = vmatprep.subr.mxu0 0.0
    %1190 = vmatpush1.xpose.msra.mxu0 %v1151
    %1191 = vmatprep.subr.mxu0 0.0
    %1192 = vmatpush1.xpose.msra.mxu0 %v1154
    %1193 = vmatprep.subr.mxu0 0.0
    %1194 = vmatpush1.xpose.msra.mxu0 %v1157
    %1195 = vmatprep.subr.mxu0 0.0
    %1196 = vmatpush1.xpose.msra.mxu0 %v1160
    %1197 = vmatprep.subr.mxu0 0.0
    %1198 = vmatpush1.xpose.msra.mxu0 %v1163
    %1199 = vmatprep.subr.mxu0 0.0
    %1200 = vmatpush1.xpose.msra.mxu0 %v1166
    %1201 = vmatprep.subr.mxu0 0.0
    %1202 = vmatpush1.xpose.msra.mxu0 %v1169
    %1203 = vmatprep.subr.mxu0 0.0
    %1204 = vmatpush1.xpose.msra.mxu0 0.0
    %1205 = vmatprep.subr.mxu0 0.0
    %1206 = vmatpush1.xpose.msra.mxu0 0.0
    %1207 = vmatprep.subr.mxu0 0.0
    %1208 = vmatpush1.xpose.msra.mxu0 0.0
    %1209 = vmatprep.subr.mxu0 0.0
    %1210 = vmatpush1.xpose.msra.mxu0 0.0
    %1211 = vmatprep.subr.mxu0 0.0
    %1212 = vmatpush1.xpose.msra.mxu0 0.0
    %1213 = vmatprep.subr.mxu0 0.0
    %1214 = vmatpush1.xpose.msra.mxu0 0.0
    %1215 = vmatprep.subr.mxu0 0.0
    %1216 = vmatpush1.xpose.msra.mxu0 0.0
    %1217 = vmatprep.subr.mxu0 0.0
    %1218 = vmatpush1.xpose.msra.mxu0 0.0
    %1219 = vmatprep.subr.mxu0 0.0
    %1220 = vmatpush1.xpose.msra.mxu0 0.0
    %1221 = vmatprep.subr.mxu0 0.0
    %1222 = vmatpush1.xpose.msra.mxu0 0.0
    %1223 = vmatprep.subr.mxu0 0.0
    %1224 = vmatpush1.xpose.msra.mxu0 0.0
    %1225 = vmatprep.subr.mxu0 0.0
    %1226 = vmatpush1.xpose.msra.mxu0 0.0
    %1227 = vmatprep.subr.mxu0 0.0
    %1228 = vmatpush1.xpose.msra.mxu0 0.0
    %1229 = vmatprep.subr.mxu0 0.0
    %1230 = vmatpush1.xpose.msra.mxu0 0.0
    %1231 = vmatprep.subr.mxu0 0.0
    %1232 = vmatpush1.xpose.msra.mxu0 0.0
    %1233 = vmatprep.subr.mxu0 0.0
    %1234 = vmatpush1.xpose.msra.mxu0 0.0
    %1235 = vmatprep.mubr.f32.mxu0 0.0
    %1236 = vmatmul.mubr.f32.gmra.mrb[0].mxu0 %v1124
    %v1237 = vpop.f32.mrb[0].mxu0
    %v1238 = vadd.f32 0.0, %v1237
    %v1239 = vpop.f32.mrb[0].mxu0
    %1240 = vmatprep.mubr.f32.mxu0 0.0
    %1241 = vmatmul.mubr.f32.gmra.mrb[0].mxu0 %v1127
    %v1242 = vpop.f32.mrb[0].mxu0
    %v1243 = vadd.f32 0.0, %v1242
    %v1244 = vpop.f32.mrb[0].mxu0
    %1245 = vmatprep.mubr.f32.mxu0 0.0
    %1246 = vmatmul.mubr.f32.gmra.mrb[0].mxu0 %v1130
    %v1247 = vpop.f32.mrb[0].mxu0
    %v1248 = vadd.f32 0.0, %v1247
    %v1249 = vpop.f32.mrb[0].mxu0
    %1250 = vmatprep.mubr.f32.mxu0 0.0
    %1251 = vmatmul.mubr.f32.gmra.mrb[0].mxu0 %v1133
    %v1252 = vpop.f32.mrb[0].mxu0
    %v1253 = vadd.f32 0.0, %v1252
    %v1254 = vpop.f32.mrb[0].mxu0
    %1255 = vmatprep.mubr.f32.mxu0 0.0
    %1256 = vmatmul.mubr.f32.gmra.mrb[0].mxu0 %v1136
    %v1257 = vpop.f32.mrb[0].mxu0
    %v1258 = vadd.f32 0.0, %v1257
    %v1259 = vpop.f32.mrb[0].mxu0
    %1260 = vmatprep.mubr.f32.mxu0 0.0
    %1261 = vmatmul.mubr.f32.gmra.mrb[0].mxu0 %v1139
    %v1262 = vpop.f32.mrb[0].mxu0
    %v1263 = vadd.f32 0.0, %v1262
    %v1264 = vpop.f32.mrb[0].mxu0
    %1265 = vmatprep.mubr.f32.mxu0 0.0
    %1266 = vmatmul.mubr.f32.gmra.mrb[0].mxu0 %v1142
    %v1267 = vpop.f32.mrb[0].mxu0
    %v1268 = vadd.f32 0.0, %v1267
    %v1269 = vpop.f32.mrb[0].mxu0
    %1270 = vmatprep.mubr.f32.mxu0 0.0
    %1271 = vmatmul.mubr.f32.gmra.mrb[0].mxu0 %v1145
    %v1272 = vpop.f32.mrb[0].mxu0
    %v1273 = vadd.f32 0.0, %v1272
    %v1274 = vpop.f32.mrb[0].mxu0
    %1275 = vmatprep.mubr.f32.mxu0 0.0
    %1276 = vmatmul.mubr.f32.gmra.mrb[0].mxu0 %v1148
    %v1277 = vpop.f32.mrb[0].mxu0
    %v1278 = vadd.f32 0.0, %v1277
    %v1279 = vpop.f32.mrb[0].mxu0
    %1280 = vmatprep.mubr.f32.mxu0 0.0
    %1281 = vmatmul.mubr.f32.gmra.mrb[0].mxu0 %v1151
    %v1282 = vpop.f32.mrb[0].mxu0
    %v1283 = vadd.f32 0.0, %v1282
    %v1284 = vpop.f32.mrb[0].mxu0
    %1285 = vmatprep.mubr.f32.mxu0 0.0
    %1286 = vmatmul.mubr.f32.gmra.mrb[0].mxu0 %v1154
    %v1287 = vpop.f32.mrb[0].mxu0
    %v1288 = vadd.f32 0.0, %v1287
    %v1289 = vpop.f32.mrb[0].mxu0
    %1290 = vmatprep.mubr.f32.mxu0 0.0
    %1291 = vmatmul.mubr.f32.gmra.mrb[0].mxu0 %v1157
    %v1292 = vpop.f32.mrb[0].mxu0
    %v1293 = vadd.f32 0.0, %v1292
    %v1294 = vpop.f32.mrb[0].mxu0
    %1295 = vmatprep.mubr.f32.mxu0 0.0
    %1296 = vmatmul.mubr.f32.gmra.mrb[0].mxu0 %v1160
    %v1297 = vpop.f32.mrb[0].mxu0
    %v1298 = vadd.f32 0.0, %v1297
    %v1299 = vpop.f32.mrb[0].mxu0
    %1300 = vmatprep.mubr.f32.mxu0 0.0
    %1301 = vmatmul.mubr.f32.gmra.mrb[0].mxu0 %v1163
    %v1302 = vpop.f32.mrb[0].mxu0
    %v1303 = vadd.f32 0.0, %v1302
    %v1304 = vpop.f32.mrb[0].mxu0
    %1305 = vmatprep.mubr.f32.mxu0 0.0
    %1306 = vmatmul.mubr.f32.gmra.mrb[0].mxu0 %v1166
    %v1307 = vpop.f32.mrb[0].mxu0
    %v1308 = vadd.f32 0.0, %v1307
    %v1309 = vpop.f32.mrb[0].mxu0
    %1310 = vmatprep.mubr.f32.mxu0 0.0
    %1311 = vmatmul.mubr.f32.gmra.mrb[0].mxu0 %v1169
    %v1312 = vpop.f32.mrb[0].mxu0
    %v1313 = vadd.f32 0.0, %v1312
    %v1314 = vpop.f32.mrb[0].mxu0
    %1315 = vdwg.mxu0
    %v1316 = vmax.f32 %v1238, 0.0
    %v1317 = vmax.f32 %v1243, 0.0
    %v1318 = vmax.f32 %v1248, 0.0
    %v1319 = vmax.f32 %v1253, 0.0
    %v1320 = vmax.f32 %v1258, 0.0
    %v1321 = vmax.f32 %v1263, 0.0
    %v1322 = vmax.f32 %v1268, 0.0
    %v1323 = vmax.f32 %v1273, 0.0
    %v1324 = vmax.f32 %v1278, 0.0
    %v1325 = vmax.f32 %v1283, 0.0
    %v1326 = vmax.f32 %v1288, 0.0
    %v1327 = vmax.f32 %v1293, 0.0
    %v1328 = vmax.f32 %v1298, 0.0
    %v1329 = vmax.f32 %v1303, 0.0
    %v1330 = vmax.f32 %v1308, 0.0
    %v1331 = vmax.f32 %v1313, 0.0
    %v1332 = vadd.f32 %v1316, %v1317
    %v1333 = vadd.f32 %v1332, %v1318
    %v1334 = vadd.f32 %v1333, %v1319
    %v1335 = vadd.f32 %v1334, %v1320
    %v1336 = vadd.f32 %v1335, %v1321
    %v1337 = vadd.f32 %v1336, %v1322
    %v1338 = vadd.f32 %v1337, %v1323
    %v1339 = vadd.f32 %v1338, %v1324
    %v1340 = vadd.f32 %v1339, %v1325
    %v1341 = vadd.f32 %v1340, %v1326
    %v1342 = vadd.f32 %v1341, %v1327
    %v1343 = vadd.f32 %v1342, %v1328
    %v1344 = vadd.f32 %v1343, %v1329
    %v1345 = vadd.f32 %v1344, %v1330
    %v1346 = vadd.f32 %v1345, %v1331
    %v1347 = vrot.slane %v1346, 4
    %v1348 = vadd.f32 %v1346, %v1347
    %v1349 = vrot.slane %v1348, 2
    %v1350 = vadd.f32 %v1348, %v1349
    %v1351 = vrot.slane %v1350, 1
    %v1352 = vadd.f32 %v1350, %v1351
    %v1353 = vadd.f32 %v1352, 1.0
    %v1354 = vpack.c.bf16 %v996, %v995
    %v1355 = vpack.c.bf16 %v998, %v997
    %v1356 = vpack.c.bf16 %v1000, %v999
    %v1357 = vpack.c.bf16 %v1002, %v1001
    %v1358 = vpack.c.bf16 %v1004, %v1003
    %v1359 = vpack.c.bf16 %v1006, %v1005
    %v1360 = vpack.c.bf16 %v1008, %v1007
    %v1361 = vpack.c.bf16 %v1010, %v1009
    %v1363 = vsel %vm125, %v1354, 0
    %v1366 = vsel %vm125, %v1355, 0
    %v1369 = vsel %vm125, %v1356, 0
    %v1372 = vsel %vm125, %v1357, 0
    %v1375 = vsel %vm125, %v1358, 0
    %v1378 = vsel %vm125, %v1359, 0
    %v1381 = vsel %vm125, %v1360, 0
    %v1384 = vsel %vm125, %v1361, 0
    %1386 = vmatprep.subr.bf16.mxu0 0
    %1387 = vmatpush1.bf16.msra.mxu0 %v115
    %1388 = vmatprep.subr.bf16.mxu0 0
    %1389 = vmatpush1.bf16.msra.mxu0 %v116
    %1390 = vmatprep.subr.bf16.mxu0 0
    %1391 = vmatpush1.bf16.msra.mxu0 0
    %1392 = vmatprep.subr.bf16.mxu0 0
    %1393 = vmatpush1.bf16.msra.mxu0 0
    %1394 = vmatprep.subr.bf16.mxu0 0
    %1395 = vmatpush1.bf16.msra.mxu0 0
    %1396 = vmatprep.subr.bf16.mxu0 0
    %1397 = vmatpush1.bf16.msra.mxu0 0
    %1398 = vmatprep.subr.bf16.mxu0 0
    %1399 = vmatpush1.bf16.msra.mxu0 0
    %1400 = vmatprep.subr.bf16.mxu0 0
    %1401 = vmatpush1.bf16.msra.mxu0 0
    %1402 = vmatprep.subr.bf16.mxu0 0
    %1403 = vmatpush1.bf16.msra.mxu0 0
    %1404 = vmatprep.subr.bf16.mxu0 0
    %1405 = vmatpush1.bf16.msra.mxu0 0
    %1406 = vmatprep.subr.bf16.mxu0 0
    %1407 = vmatpush1.bf16.msra.mxu0 0
    %1408 = vmatprep.subr.bf16.mxu0 0
    %1409 = vmatpush1.bf16.msra.mxu0 0
    %1410 = vmatprep.subr.bf16.mxu0 0
    %1411 = vmatpush1.bf16.msra.mxu0 0
    %1412 = vmatprep.subr.bf16.mxu0 0
    %1413 = vmatpush1.bf16.msra.mxu0 0
    %1414 = vmatprep.subr.bf16.mxu0 0
    %1415 = vmatpush1.bf16.msra.mxu0 0
    %1416 = vmatprep.subr.bf16.mxu0 0
    %1417 = vmatpush1.bf16.msra.mxu0 0
    %1418 = vmatprep.mubr.bf16.mxu0 0
    %1419 = vmatmul.mubr.bf16.gmra.mrb[0].mxu0 %v1363
    %v1420 = vpop.f32.mrb[0].mxu0
    %v1421 = vadd.f32 0.0, %v1420
    %v1422 = vpop.f32.mrb[0].mxu0
    %v1423 = vpop.f32.mrb[0].mxu0
    %v1424 = vadd.f32 0.0, %v1423
    %v1425 = vpop.f32.mrb[0].mxu0
    %1426 = vmatprep.mubr.bf16.mxu0 0
    %1427 = vmatmul.mubr.bf16.gmra.mrb[0].mxu0 %v1366
    %v1428 = vpop.f32.mrb[0].mxu0
    %v1429 = vadd.f32 0.0, %v1428
    %v1430 = vpop.f32.mrb[0].mxu0
    %v1431 = vpop.f32.mrb[0].mxu0
    %v1432 = vadd.f32 0.0, %v1431
    %v1433 = vpop.f32.mrb[0].mxu0
    %1434 = vmatprep.mubr.bf16.mxu0 0
    %1435 = vmatmul.mubr.bf16.gmra.mrb[0].mxu0 %v1369
    %v1436 = vpop.f32.mrb[0].mxu0
    %v1437 = vadd.f32 0.0, %v1436
    %v1438 = vpop.f32.mrb[0].mxu0
    %v1439 = vpop.f32.mrb[0].mxu0
    %v1440 = vadd.f32 0.0, %v1439
    %v1441 = vpop.f32.mrb[0].mxu0
    %1442 = vmatprep.mubr.bf16.mxu0 0
    %1443 = vmatmul.mubr.bf16.gmra.mrb[0].mxu0 %v1372
    %v1444 = vpop.f32.mrb[0].mxu0
    %v1445 = vadd.f32 0.0, %v1444
    %v1446 = vpop.f32.mrb[0].mxu0
    %v1447 = vpop.f32.mrb[0].mxu0
    %v1448 = vadd.f32 0.0, %v1447
    %v1449 = vpop.f32.mrb[0].mxu0
    %1450 = vmatprep.mubr.bf16.mxu0 0
    %1451 = vmatmul.mubr.bf16.gmra.mrb[0].mxu0 %v1375
    %v1452 = vpop.f32.mrb[0].mxu0
    %v1453 = vadd.f32 0.0, %v1452
    %v1454 = vpop.f32.mrb[0].mxu0
    %v1455 = vpop.f32.mrb[0].mxu0
    %v1456 = vadd.f32 0.0, %v1455
    %v1457 = vpop.f32.mrb[0].mxu0
    %1458 = vmatprep.mubr.bf16.mxu0 0
    %1459 = vmatmul.mubr.bf16.gmra.mrb[0].mxu0 %v1378
    %v1460 = vpop.f32.mrb[0].mxu0
    %v1461 = vadd.f32 0.0, %v1460
    %v1462 = vpop.f32.mrb[0].mxu0
    %v1463 = vpop.f32.mrb[0].mxu0
    %v1464 = vadd.f32 0.0, %v1463
    %v1465 = vpop.f32.mrb[0].mxu0
    %1466 = vmatprep.mubr.bf16.mxu0 0
    %1467 = vmatmul.mubr.bf16.gmra.mrb[0].mxu0 %v1381
    %v1468 = vpop.f32.mrb[0].mxu0
    %v1469 = vadd.f32 0.0, %v1468
    %v1470 = vpop.f32.mrb[0].mxu0
    %v1471 = vpop.f32.mrb[0].mxu0
    %v1472 = vadd.f32 0.0, %v1471
    %v1473 = vpop.f32.mrb[0].mxu0
    %1474 = vmatprep.mubr.bf16.mxu0 0
    %1475 = vmatmul.mubr.bf16.gmra.mrb[0].mxu0 %v1384
    %v1476 = vpop.f32.mrb[0].mxu0
    %v1477 = vadd.f32 0.0, %v1476
    %v1478 = vpop.f32.mrb[0].mxu0
    %v1479 = vpop.f32.mrb[0].mxu0
    %v1480 = vadd.f32 0.0, %v1479
    %v1481 = vpop.f32.mrb[0].mxu0
    %1482 = vdwg.mxu0
    %v1483 = vpack.c.bf16 %v1108, %v1107
    %v1484 = vpack.c.bf16 %v1110, %v1109
    %v1485 = vpack.c.bf16 %v1112, %v1111
    %v1486 = vpack.c.bf16 %v1114, %v1113
    %v1487 = vpack.c.bf16 %v1116, %v1115
    %v1488 = vpack.c.bf16 %v1118, %v1117
    %v1489 = vpack.c.bf16 %v1120, %v1119
    %v1490 = vpack.c.bf16 %v1122, %v1121
    %v1499 = vunpack.c.l.b16 %v1483
    %v1500 = vunpack.c.h.b16 %v1483
    %v1501 = vunpack.c.l.b16 %v1484
    %v1502 = vunpack.c.h.b16 %v1484
    %v1503 = vunpack.c.l.b16 %v1485
    %v1504 = vunpack.c.h.b16 %v1485
    %v1505 = vunpack.c.l.b16 %v1486
    %v1506 = vunpack.c.h.b16 %v1486
    %v1507 = vunpack.c.l.b16 %v1487
    %v1508 = vunpack.c.h.b16 %v1487
    %v1509 = vunpack.c.l.b16 %v1488
    %v1510 = vunpack.c.h.b16 %v1488
    %v1511 = vunpack.c.l.b16 %v1489
    %v1512 = vunpack.c.h.b16 %v1489
    %v1513 = vunpack.c.l.b16 %v1490
    %v1514 = vunpack.c.h.b16 %v1490
    %v1515 = vpack.c.b16 %v1499, %v1499
    %v1516 = vpack.c.b16 %v1500, %v1500
    %v1517 = vpack.c.b16 %v1501, %v1501
    %v1518 = vpack.c.b16 %v1502, %v1502
    %v1519 = vpack.c.b16 %v1503, %v1503
    %v1520 = vpack.c.b16 %v1504, %v1504
    %v1521 = vpack.c.b16 %v1505, %v1505
    %v1522 = vpack.c.b16 %v1506, %v1506
    %v1523 = vpack.c.b16 %v1507, %v1507
    %v1524 = vpack.c.b16 %v1508, %v1508
    %v1525 = vpack.c.b16 %v1509, %v1509
    %v1526 = vpack.c.b16 %v1510, %v1510
    %v1527 = vpack.c.b16 %v1511, %v1511
    %v1528 = vpack.c.b16 %v1512, %v1512
    %v1529 = vpack.c.b16 %v1513, %v1513
    %v1530 = vpack.c.b16 %v1514, %v1514
    %1547 = vst.msk [vmem:[#allocation12] sm:$0xf] %vm166, %v1515
    %1548 = vst.msk [vmem:[#allocation12 + $0x4] sm:$0xf] %vm166, %v1516
    %1549 = vst.msk [vmem:[#allocation12 + $0x8] sm:$0xf] %vm166, %v1517
    %1550 = vst.msk [vmem:[#allocation12 + $0xc] sm:$0xf] %vm166, %v1518
    %1551 = vst.msk [vmem:[#allocation12 + $0x10] sm:$0xf] %vm166, %v1519
    %1552 = vst.msk [vmem:[#allocation12 + $0x14] sm:$0xf] %vm166, %v1520
    %1553 = vst.msk [vmem:[#allocation12 + $0x18] sm:$0xf] %vm166, %v1521
    %1554 = vst.msk [vmem:[#allocation12 + $0x1c] sm:$0xf] %vm166, %v1522
    %1555 = vst.msk [vmem:[#allocation12 + $0x20] sm:$0xf] %vm166, %v1523
    %1556 = vst.msk [vmem:[#allocation12 + $0x24] sm:$0xf] %vm166, %v1524
    %1557 = vst.msk [vmem:[#allocation12 + $0x28] sm:$0xf] %vm166, %v1525
    %1558 = vst.msk [vmem:[#allocation12 + $0x2c] sm:$0xf] %vm166, %v1526
    %1559 = vst.msk [vmem:[#allocation12 + $0x30] sm:$0xf] %vm166, %v1527
    %1560 = vst.msk [vmem:[#allocation12 + $0x34] sm:$0xf] %vm166, %v1528
    %1561 = vst.msk [vmem:[#allocation12 + $0x38] sm:$0xf] %vm166, %v1529
    %1562 = vst.msk [vmem:[#allocation12 + $0x3c] sm:$0xf] %vm166, %v1530
    %v1563 = vpack.c.bf16 %v1424, %v1421
    %v1564 = vpack.c.bf16 %v1432, %v1429
    %v1565 = vpack.c.bf16 %v1440, %v1437
    %v1566 = vpack.c.bf16 %v1448, %v1445
    %v1567 = vpack.c.bf16 %v1456, %v1453
    %v1568 = vpack.c.bf16 %v1464, %v1461
    %v1569 = vpack.c.bf16 %v1472, %v1469
    %v1570 = vpack.c.bf16 %v1480, %v1477
    %v1579 = vunpack.c.l.b16 %v1563
    %v1580 = vunpack.c.h.b16 %v1563
    %v1581 = vunpack.c.l.b16 %v1564
    %v1582 = vunpack.c.h.b16 %v1564
    %v1583 = vunpack.c.l.b16 %v1565
    %v1584 = vunpack.c.h.b16 %v1565
    %v1585 = vunpack.c.l.b16 %v1566
    %v1586 = vunpack.c.h.b16 %v1566
    %v1587 = vunpack.c.l.b16 %v1567
    %v1588 = vunpack.c.h.b16 %v1567
    %v1589 = vunpack.c.l.b16 %v1568
    %v1590 = vunpack.c.h.b16 %v1568
    %v1591 = vunpack.c.l.b16 %v1569
    %v1592 = vunpack.c.h.b16 %v1569
    %v1593 = vunpack.c.l.b16 %v1570
    %v1594 = vunpack.c.h.b16 %v1570
    %v1595 = vpack.c.b16 %v1579, %v1579
    %v1596 = vpack.c.b16 %v1580, %v1580
    %v1597 = vpack.c.b16 %v1581, %v1581
    %v1598 = vpack.c.b16 %v1582, %v1582
    %v1599 = vpack.c.b16 %v1583, %v1583
    %v1600 = vpack.c.b16 %v1584, %v1584
    %v1601 = vpack.c.b16 %v1585, %v1585
    %v1602 = vpack.c.b16 %v1586, %v1586
    %v1603 = vpack.c.b16 %v1587, %v1587
    %v1604 = vpack.c.b16 %v1588, %v1588
    %v1605 = vpack.c.b16 %v1589, %v1589
    %v1606 = vpack.c.b16 %v1590, %v1590
    %v1607 = vpack.c.b16 %v1591, %v1591
    %v1608 = vpack.c.b16 %v1592, %v1592
    %v1609 = vpack.c.b16 %v1593, %v1593
    %v1610 = vpack.c.b16 %v1594, %v1594
    %1627 = vst.msk [vmem:[#allocation15] sm:$0xf] %vm166, %v1595
    %1628 = vst.msk [vmem:[#allocation15 + $0x4] sm:$0xf] %vm166, %v1596
    %1629 = vst.msk [vmem:[#allocation15 + $0x8] sm:$0xf] %vm166, %v1597
    %1630 = vst.msk [vmem:[#allocation15 + $0xc] sm:$0xf] %vm166, %v1598
    %1631 = vst.msk [vmem:[#allocation15 + $0x10] sm:$0xf] %vm166, %v1599
    %1632 = vst.msk [vmem:[#allocation15 + $0x14] sm:$0xf] %vm166, %v1600
    %1633 = vst.msk [vmem:[#allocation15 + $0x18] sm:$0xf] %vm166, %v1601
    %1634 = vst.msk [vmem:[#allocation15 + $0x1c] sm:$0xf] %vm166, %v1602
    %1635 = vst.msk [vmem:[#allocation15 + $0x20] sm:$0xf] %vm166, %v1603
    %1636 = vst.msk [vmem:[#allocation15 + $0x24] sm:$0xf] %vm166, %v1604
    %1637 = vst.msk [vmem:[#allocation15 + $0x28] sm:$0xf] %vm166, %v1605
    %1638 = vst.msk [vmem:[#allocation15 + $0x2c] sm:$0xf] %vm166, %v1606
    %1639 = vst.msk [vmem:[#allocation15 + $0x30] sm:$0xf] %vm166, %v1607
    %1640 = vst.msk [vmem:[#allocation15 + $0x34] sm:$0xf] %vm166, %v1608
    %1641 = vst.msk [vmem:[#allocation15 + $0x38] sm:$0xf] %vm166, %v1609
    %1642 = vst.msk [vmem:[#allocation15 + $0x3c] sm:$0xf] %vm166, %v1610
    %1643 = vst [vmem:[#allocation18] sm:$0x1] %v1353
    %s1644 = scalar_lea.vmem [#allocation2], 128
    %v1645 = vld [vmem:[%s1644] sm:$0xff]
    %v1646 = vld [vmem:[%s1644 + $0x8] sm:$0xff]
    %v1647 = vld [vmem:[%s1644 + $0x10] sm:$0xff]
    %v1648 = vld [vmem:[%s1644 + $0x18] sm:$0xff]
    %v1649 = vld [vmem:[%s1644 + $0x20] sm:$0xff]
    %v1650 = vld [vmem:[%s1644 + $0x28] sm:$0xff]
    %v1651 = vld [vmem:[%s1644 + $0x30] sm:$0xff]
    %v1652 = vld [vmem:[%s1644 + $0x38] sm:$0xff]
    %v1653 = vld [vmem:[%s1644 + $0x40] sm:$0xff]
    %v1654 = vld [vmem:[%s1644 + $0x48] sm:$0xff]
    %v1655 = vld [vmem:[%s1644 + $0x50] sm:$0xff]
    %v1656 = vld [vmem:[%s1644 + $0x58] sm:$0xff]
    %v1657 = vld [vmem:[%s1644 + $0x60] sm:$0xff]
    %v1658 = vld [vmem:[%s1644 + $0x68] sm:$0xff]
    %v1659 = vld [vmem:[%s1644 + $0x70] sm:$0xff]
    %v1660 = vld [vmem:[%s1644 + $0x78] sm:$0xff]
    %v1661 = vmul.f32 %v1645, %v1645
    %v1662 = vmul.f32 %v1646, %v1646
    %v1663 = vmul.f32 %v1647, %v1647
    %v1664 = vmul.f32 %v1648, %v1648
    %v1665 = vmul.f32 %v1649, %v1649
    %v1666 = vmul.f32 %v1650, %v1650
    %v1667 = vmul.f32 %v1651, %v1651
    %v1668 = vmul.f32 %v1652, %v1652
    %v1669 = vmul.f32 %v1653, %v1653
    %v1670 = vmul.f32 %v1654, %v1654
    %v1671 = vmul.f32 %v1655, %v1655
    %v1672 = vmul.f32 %v1656, %v1656
    %v1673 = vmul.f32 %v1657, %v1657
    %v1674 = vmul.f32 %v1658, %v1658
    %v1675 = vmul.f32 %v1659, %v1659
    %v1676 = vmul.f32 %v1660, %v1660
    %v1677 = vsel %vm125, %v1661, 0.0
    %1678 = vadd.xlane.f32.xlu0 %v1677
    %v1679 = vpop.xlane.xlu0 %1678
    %v1680 = vsel %vm125, %v1662, 0.0
    %1681 = vadd.xlane.f32.xlu0 %v1680
    %v1682 = vpop.xlane.xlu0 %1681
    %v1683 = vsel %vm125, %v1663, 0.0
    %1684 = vadd.xlane.f32.xlu0 %v1683
    %v1685 = vpop.xlane.xlu0 %1684
    %v1686 = vsel %vm125, %v1664, 0.0
    %1687 = vadd.xlane.f32.xlu0 %v1686
    %v1688 = vpop.xlane.xlu0 %1687
    %v1689 = vsel %vm125, %v1665, 0.0
    %1690 = vadd.xlane.f32.xlu0 %v1689
    %v1691 = vpop.xlane.xlu0 %1690
    %v1692 = vsel %vm125, %v1666, 0.0
    %1693 = vadd.xlane.f32.xlu0 %v1692
    %v1694 = vpop.xlane.xlu0 %1693
    %v1695 = vsel %vm125, %v1667, 0.0
    %1696 = vadd.xlane.f32.xlu0 %v1695
    %v1697 = vpop.xlane.xlu0 %1696
    %v1698 = vsel %vm125, %v1668, 0.0
    %1699 = vadd.xlane.f32.xlu0 %v1698
    %v1700 = vpop.xlane.xlu0 %1699
    %v1701 = vsel %vm125, %v1669, 0.0
    %1702 = vadd.xlane.f32.xlu0 %v1701
    %v1703 = vpop.xlane.xlu0 %1702
    %v1704 = vsel %vm125, %v1670, 0.0
    %1705 = vadd.xlane.f32.xlu0 %v1704
    %v1706 = vpop.xlane.xlu0 %1705
    %v1707 = vsel %vm125, %v1671, 0.0
    %1708 = vadd.xlane.f32.xlu0 %v1707
    %v1709 = vpop.xlane.xlu0 %1708
    %v1710 = vsel %vm125, %v1672, 0.0
    %1711 = vadd.xlane.f32.xlu0 %v1710
    %v1712 = vpop.xlane.xlu0 %1711
    %v1713 = vsel %vm125, %v1673, 0.0
    %1714 = vadd.xlane.f32.xlu0 %v1713
    %v1715 = vpop.xlane.xlu0 %1714
    %v1716 = vsel %vm125, %v1674, 0.0
    %1717 = vadd.xlane.f32.xlu0 %v1716
    %v1718 = vpop.xlane.xlu0 %1717
    %v1719 = vsel %vm125, %v1675, 0.0
    %1720 = vadd.xlane.f32.xlu0 %v1719
    %v1721 = vpop.xlane.xlu0 %1720
    %v1722 = vsel %vm125, %v1676, 0.0
    %1723 = vadd.xlane.f32.xlu0 %v1722
    %v1724 = vpop.xlane.xlu0 %1723
    %v1725 = vmax.f32 %v1679, 1e-24
    %v1726 = vmax.f32 %v1682, 1e-24
    %v1727 = vmax.f32 %v1685, 1e-24
    %v1728 = vmax.f32 %v1688, 1e-24
    %v1729 = vmax.f32 %v1691, 1e-24
    %v1730 = vmax.f32 %v1694, 1e-24
    %v1731 = vmax.f32 %v1697, 1e-24
    %v1732 = vmax.f32 %v1700, 1e-24
    %v1733 = vmax.f32 %v1703, 1e-24
    %v1734 = vmax.f32 %v1706, 1e-24
    %v1735 = vmax.f32 %v1709, 1e-24
    %v1736 = vmax.f32 %v1712, 1e-24
    %v1737 = vmax.f32 %v1715, 1e-24
    %v1738 = vmax.f32 %v1718, 1e-24
    %v1739 = vmax.f32 %v1721, 1e-24
    %v1740 = vmax.f32 %v1724, 1e-24
    %v1741 = vrsqrt.pop %v1725
    %v1742 = vrsqrt.pop %v1726
    %v1743 = vrsqrt.pop %v1727
    %v1744 = vrsqrt.pop %v1728
    %v1745 = vrsqrt.pop %v1729
    %v1746 = vrsqrt.pop %v1730
    %v1747 = vrsqrt.pop %v1731
    %v1748 = vrsqrt.pop %v1732
    %v1749 = vrsqrt.pop %v1733
    %v1750 = vrsqrt.pop %v1734
    %v1751 = vrsqrt.pop %v1735
    %v1752 = vrsqrt.pop %v1736
    %v1753 = vrsqrt.pop %v1737
    %v1754 = vrsqrt.pop %v1738
    %v1755 = vrsqrt.pop %v1739
    %v1756 = vrsqrt.pop %v1740
    %v1757 = vmul.f32 %v1645, %v1741
    %v1758 = vmul.f32 %v1646, %v1742
    %v1759 = vmul.f32 %v1647, %v1743
    %v1760 = vmul.f32 %v1648, %v1744
    %v1761 = vmul.f32 %v1649, %v1745
    %v1762 = vmul.f32 %v1650, %v1746
    %v1763 = vmul.f32 %v1651, %v1747
    %v1764 = vmul.f32 %v1652, %v1748
    %v1765 = vmul.f32 %v1653, %v1749
    %v1766 = vmul.f32 %v1654, %v1750
    %v1767 = vmul.f32 %v1655, %v1751
    %v1768 = vmul.f32 %v1656, %v1752
    %v1769 = vmul.f32 %v1657, %v1753
    %v1770 = vmul.f32 %v1658, %v1754
    %v1771 = vmul.f32 %v1659, %v1755
    %v1772 = vmul.f32 %v1660, %v1756
    %v1774 = vsel %vm125, %v1757, 0
    %v1777 = vsel %vm125, %v1758, 0
    %v1780 = vsel %vm125, %v1759, 0
    %v1783 = vsel %vm125, %v1760, 0
    %v1786 = vsel %vm125, %v1761, 0
    %v1789 = vsel %vm125, %v1762, 0
    %v1792 = vsel %vm125, %v1763, 0
    %v1795 = vsel %vm125, %v1764, 0
    %v1798 = vsel %vm125, %v1765, 0
    %v1801 = vsel %vm125, %v1766, 0
    %v1804 = vsel %vm125, %v1767, 0
    %v1807 = vsel %vm125, %v1768, 0
    %v1810 = vsel %vm125, %v1769, 0
    %v1813 = vsel %vm125, %v1770, 0
    %v1816 = vsel %vm125, %v1771, 0
    %v1819 = vsel %vm125, %v1772, 0
    %1821 = vmatprep.subr.mxu0 0.0
    %1822 = vmatpush1.xpose.msra.mxu0 %v1774
    %1823 = vmatprep.subr.mxu0 0.0
    %1824 = vmatpush1.xpose.msra.mxu0 %v1777
    %1825 = vmatprep.subr.mxu0 0.0
    %1826 = vmatpush1.xpose.msra.mxu0 %v1780
    %1827 = vmatprep.subr.mxu0 0.0
    %1828 = vmatpush1.xpose.msra.mxu0 %v1783
    %1829 = vmatprep.subr.mxu0 0.0
    %1830 = vmatpush1.xpose.msra.mxu0 %v1786
    %1831 = vmatprep.subr.mxu0 0.0
    %1832 = vmatpush1.xpose.msra.mxu0 %v1789
    %1833 = vmatprep.subr.mxu0 0.0
    %1834 = vmatpush1.xpose.msra.mxu0 %v1792
    %1835 = vmatprep.subr.mxu0 0.0
    %1836 = vmatpush1.xpose.msra.mxu0 %v1795
    %1837 = vmatprep.subr.mxu0 0.0
    %1838 = vmatpush1.xpose.msra.mxu0 %v1798
    %1839 = vmatprep.subr.mxu0 0.0
    %1840 = vmatpush1.xpose.msra.mxu0 %v1801
    %1841 = vmatprep.subr.mxu0 0.0
    %1842 = vmatpush1.xpose.msra.mxu0 %v1804
    %1843 = vmatprep.subr.mxu0 0.0
    %1844 = vmatpush1.xpose.msra.mxu0 %v1807
    %1845 = vmatprep.subr.mxu0 0.0
    %1846 = vmatpush1.xpose.msra.mxu0 %v1810
    %1847 = vmatprep.subr.mxu0 0.0
    %1848 = vmatpush1.xpose.msra.mxu0 %v1813
    %1849 = vmatprep.subr.mxu0 0.0
    %1850 = vmatpush1.xpose.msra.mxu0 %v1816
    %1851 = vmatprep.subr.mxu0 0.0
    %1852 = vmatpush1.xpose.msra.mxu0 %v1819
    %1853 = vmatprep.subr.mxu0 0.0
    %1854 = vmatpush1.xpose.msra.mxu0 0.0
    %1855 = vmatprep.subr.mxu0 0.0
    %1856 = vmatpush1.xpose.msra.mxu0 0.0
    %1857 = vmatprep.subr.mxu0 0.0
    %1858 = vmatpush1.xpose.msra.mxu0 0.0
    %1859 = vmatprep.subr.mxu0 0.0
    %1860 = vmatpush1.xpose.msra.mxu0 0.0
    %1861 = vmatprep.subr.mxu0 0.0
    %1862 = vmatpush1.xpose.msra.mxu0 0.0
    %1863 = vmatprep.subr.mxu0 0.0
    %1864 = vmatpush1.xpose.msra.mxu0 0.0
    %1865 = vmatprep.subr.mxu0 0.0
    %1866 = vmatpush1.xpose.msra.mxu0 0.0
    %1867 = vmatprep.subr.mxu0 0.0
    %1868 = vmatpush1.xpose.msra.mxu0 0.0
    %1869 = vmatprep.subr.mxu0 0.0
    %1870 = vmatpush1.xpose.msra.mxu0 0.0
    %1871 = vmatprep.subr.mxu0 0.0
    %1872 = vmatpush1.xpose.msra.mxu0 0.0
    %1873 = vmatprep.subr.mxu0 0.0
    %1874 = vmatpush1.xpose.msra.mxu0 0.0
    %1875 = vmatprep.subr.mxu0 0.0
    %1876 = vmatpush1.xpose.msra.mxu0 0.0
    %1877 = vmatprep.subr.mxu0 0.0
    %1878 = vmatpush1.xpose.msra.mxu0 0.0
    %1879 = vmatprep.subr.mxu0 0.0
    %1880 = vmatpush1.xpose.msra.mxu0 0.0
    %1881 = vmatprep.subr.mxu0 0.0
    %1882 = vmatpush1.xpose.msra.mxu0 0.0
    %1883 = vmatprep.subr.mxu0 0.0
    %1884 = vmatpush1.xpose.msra.mxu0 0.0
    %1885 = vmatprep.mubr.f32.mxu0 0.0
    %1886 = vmatmul.mubr.f32.gmra.mrb[0].mxu0 %v1774
    %v1887 = vpop.f32.mrb[0].mxu0
    %v1888 = vadd.f32 0.0, %v1887
    %v1889 = vpop.f32.mrb[0].mxu0
    %1890 = vmatprep.mubr.f32.mxu0 0.0
    %1891 = vmatmul.mubr.f32.gmra.mrb[0].mxu0 %v1777
    %v1892 = vpop.f32.mrb[0].mxu0
    %v1893 = vadd.f32 0.0, %v1892
    %v1894 = vpop.f32.mrb[0].mxu0
    %1895 = vmatprep.mubr.f32.mxu0 0.0
    %1896 = vmatmul.mubr.f32.gmra.mrb[0].mxu0 %v1780
    %v1897 = vpop.f32.mrb[0].mxu0
    %v1898 = vadd.f32 0.0, %v1897
    %v1899 = vpop.f32.mrb[0].mxu0
    %1900 = vmatprep.mubr.f32.mxu0 0.0
    %1901 = vmatmul.mubr.f32.gmra.mrb[0].mxu0 %v1783
    %v1902 = vpop.f32.mrb[0].mxu0
    %v1903 = vadd.f32 0.0, %v1902
    %v1904 = vpop.f32.mrb[0].mxu0
    %1905 = vmatprep.mubr.f32.mxu0 0.0
    %1906 = vmatmul.mubr.f32.gmra.mrb[0].mxu0 %v1786
    %v1907 = vpop.f32.mrb[0].mxu0
    %v1908 = vadd.f32 0.0, %v1907
    %v1909 = vpop.f32.mrb[0].mxu0
    %1910 = vmatprep.mubr.f32.mxu0 0.0
    %1911 = vmatmul.mubr.f32.gmra.mrb[0].mxu0 %v1789
    %v1912 = vpop.f32.mrb[0].mxu0
    %v1913 = vadd.f32 0.0, %v1912
    %v1914 = vpop.f32.mrb[0].mxu0
    %1915 = vmatprep.mubr.f32.mxu0 0.0
    %1916 = vmatmul.mubr.f32.gmra.mrb[0].mxu0 %v1792
    %v1917 = vpop.f32.mrb[0].mxu0
    %v1918 = vadd.f32 0.0, %v1917
    %v1919 = vpop.f32.mrb[0].mxu0
    %1920 = vmatprep.mubr.f32.mxu0 0.0
    %1921 = vmatmul.mubr.f32.gmra.mrb[0].mxu0 %v1795
    %v1922 = vpop.f32.mrb[0].mxu0
    %v1923 = vadd.f32 0.0, %v1922
    %v1924 = vpop.f32.mrb[0].mxu0
    %1925 = vmatprep.mubr.f32.mxu0 0.0
    %1926 = vmatmul.mubr.f32.gmra.mrb[0].mxu0 %v1798
    %v1927 = vpop.f32.mrb[0].mxu0
    %v1928 = vadd.f32 0.0, %v1927
    %v1929 = vpop.f32.mrb[0].mxu0
    %1930 = vmatprep.mubr.f32.mxu0 0.0
    %1931 = vmatmul.mubr.f32.gmra.mrb[0].mxu0 %v1801
    %v1932 = vpop.f32.mrb[0].mxu0
    %v1933 = vadd.f32 0.0, %v1932
    %v1934 = vpop.f32.mrb[0].mxu0
    %1935 = vmatprep.mubr.f32.mxu0 0.0
    %1936 = vmatmul.mubr.f32.gmra.mrb[0].mxu0 %v1804
    %v1937 = vpop.f32.mrb[0].mxu0
    %v1938 = vadd.f32 0.0, %v1937
    %v1939 = vpop.f32.mrb[0].mxu0
    %1940 = vmatprep.mubr.f32.mxu0 0.0
    %1941 = vmatmul.mubr.f32.gmra.mrb[0].mxu0 %v1807
    %v1942 = vpop.f32.mrb[0].mxu0
    %v1943 = vadd.f32 0.0, %v1942
    %v1944 = vpop.f32.mrb[0].mxu0
    %1945 = vmatprep.mubr.f32.mxu0 0.0
    %1946 = vmatmul.mubr.f32.gmra.mrb[0].mxu0 %v1810
    %v1947 = vpop.f32.mrb[0].mxu0
    %v1948 = vadd.f32 0.0, %v1947
    %v1949 = vpop.f32.mrb[0].mxu0
    %1950 = vmatprep.mubr.f32.mxu0 0.0
    %1951 = vmatmul.mubr.f32.gmra.mrb[0].mxu0 %v1813
    %v1952 = vpop.f32.mrb[0].mxu0
    %v1953 = vadd.f32 0.0, %v1952
    %v1954 = vpop.f32.mrb[0].mxu0
    %1955 = vmatprep.mubr.f32.mxu0 0.0
    %1956 = vmatmul.mubr.f32.gmra.mrb[0].mxu0 %v1816
    %v1957 = vpop.f32.mrb[0].mxu0
    %v1958 = vadd.f32 0.0, %v1957
    %v1959 = vpop.f32.mrb[0].mxu0
    %1960 = vmatprep.mubr.f32.mxu0 0.0
    %1961 = vmatmul.mubr.f32.gmra.mrb[0].mxu0 %v1819
    %v1962 = vpop.f32.mrb[0].mxu0
    %v1963 = vadd.f32 0.0, %v1962
    %v1964 = vpop.f32.mrb[0].mxu0
    %1965 = vdwg.mxu0
    %v1966 = vmax.f32 %v1888, 0.0
    %v1967 = vmax.f32 %v1893, 0.0
    %v1968 = vmax.f32 %v1898, 0.0
    %v1969 = vmax.f32 %v1903, 0.0
    %v1970 = vmax.f32 %v1908, 0.0
    %v1971 = vmax.f32 %v1913, 0.0
    %v1972 = vmax.f32 %v1918, 0.0
    %v1973 = vmax.f32 %v1923, 0.0
    %v1974 = vmax.f32 %v1928, 0.0
    %v1975 = vmax.f32 %v1933, 0.0
    %v1976 = vmax.f32 %v1938, 0.0
    %v1977 = vmax.f32 %v1943, 0.0
    %v1978 = vmax.f32 %v1948, 0.0
    %v1979 = vmax.f32 %v1953, 0.0
    %v1980 = vmax.f32 %v1958, 0.0
    %v1981 = vmax.f32 %v1963, 0.0
    %v1982 = vadd.f32 %v1966, %v1967
    %v1983 = vadd.f32 %v1982, %v1968
    %v1984 = vadd.f32 %v1983, %v1969
    %v1985 = vadd.f32 %v1984, %v1970
    %v1986 = vadd.f32 %v1985, %v1971
    %v1987 = vadd.f32 %v1986, %v1972
    %v1988 = vadd.f32 %v1987, %v1973
    %v1989 = vadd.f32 %v1988, %v1974
    %v1990 = vadd.f32 %v1989, %v1975
    %v1991 = vadd.f32 %v1990, %v1976
    %v1992 = vadd.f32 %v1991, %v1977
    %v1993 = vadd.f32 %v1992, %v1978
    %v1994 = vadd.f32 %v1993, %v1979
    %v1995 = vadd.f32 %v1994, %v1980
    %v1996 = vadd.f32 %v1995, %v1981
    %v1997 = vrot.slane %v1996, 4
    %v1998 = vadd.f32 %v1996, %v1997
    %v1999 = vrot.slane %v1998, 2
    %v2000 = vadd.f32 %v1998, %v1999
    %v2001 = vrot.slane %v2000, 1
    %v2002 = vadd.f32 %v2000, %v2001
    %v2003 = vadd.f32 %v2002, 1.0
    %v2004 = vpack.c.bf16 %v1646, %v1645
    %v2005 = vpack.c.bf16 %v1648, %v1647
    %v2006 = vpack.c.bf16 %v1650, %v1649
    %v2007 = vpack.c.bf16 %v1652, %v1651
    %v2008 = vpack.c.bf16 %v1654, %v1653
    %v2009 = vpack.c.bf16 %v1656, %v1655
    %v2010 = vpack.c.bf16 %v1658, %v1657
    %v2011 = vpack.c.bf16 %v1660, %v1659
    %v2013 = vsel %vm125, %v2004, 0
    %v2016 = vsel %vm125, %v2005, 0
    %v2019 = vsel %vm125, %v2006, 0
    %v2022 = vsel %vm125, %v2007, 0
    %v2025 = vsel %vm125, %v2008, 0
    %v2028 = vsel %vm125, %v2009, 0
    %v2031 = vsel %vm125, %v2010, 0
    %v2034 = vsel %vm125, %v2011, 0
    %2036 = vmatprep.subr.bf16.mxu0 0
    %2037 = vmatpush1.bf16.msra.mxu0 %v109
    %2038 = vmatprep.subr.bf16.mxu0 0
    %2039 = vmatpush1.bf16.msra.mxu0 %v110
    %2040 = vmatprep.subr.bf16.mxu0 0
    %2041 = vmatpush1.bf16.msra.mxu0 0
    %2042 = vmatprep.subr.bf16.mxu0 0
    %2043 = vmatpush1.bf16.msra.mxu0 0
    %2044 = vmatprep.subr.bf16.mxu0 0
    %2045 = vmatpush1.bf16.msra.mxu0 0
    %2046 = vmatprep.subr.bf16.mxu0 0
    %2047 = vmatpush1.bf16.msra.mxu0 0
    %2048 = vmatprep.subr.bf16.mxu0 0
    %2049 = vmatpush1.bf16.msra.mxu0 0
    %2050 = vmatprep.subr.bf16.mxu0 0
    %2051 = vmatpush1.bf16.msra.mxu0 0
    %2052 = vmatprep.subr.bf16.mxu0 0
    %2053 = vmatpush1.bf16.msra.mxu0 0
    %2054 = vmatprep.subr.bf16.mxu0 0
    %2055 = vmatpush1.bf16.msra.mxu0 0
    %2056 = vmatprep.subr.bf16.mxu0 0
    %2057 = vmatpush1.bf16.msra.mxu0 0
    %2058 = vmatprep.subr.bf16.mxu0 0
    %2059 = vmatpush1.bf16.msra.mxu0 0
    %2060 = vmatprep.subr.bf16.mxu0 0
    %2061 = vmatpush1.bf16.msra.mxu0 0
    %2062 = vmatprep.subr.bf16.mxu0 0
    %2063 = vmatpush1.bf16.msra.mxu0 0
    %2064 = vmatprep.subr.bf16.mxu0 0
    %2065 = vmatpush1.bf16.msra.mxu0 0
    %2066 = vmatprep.subr.bf16.mxu0 0
    %2067 = vmatpush1.bf16.msra.mxu0 0
    %2068 = vmatprep.mubr.bf16.mxu0 0
    %2069 = vmatmul.mubr.bf16.gmra.mrb[0].mxu0 %v2013
    %v2070 = vpop.f32.mrb[0].mxu0
    %v2071 = vadd.f32 0.0, %v2070
    %v2072 = vpop.f32.mrb[0].mxu0
    %v2073 = vpop.f32.mrb[0].mxu0
    %v2074 = vadd.f32 0.0, %v2073
    %v2075 = vpop.f32.mrb[0].mxu0
    %2076 = vmatprep.mubr.bf16.mxu0 0
    %2077 = vmatmul.mubr.bf16.gmra.mrb[0].mxu0 %v2016
    %v2078 = vpop.f32.mrb[0].mxu0
    %v2079 = vadd.f32 0.0, %v2078
    %v2080 = vpop.f32.mrb[0].mxu0
    %v2081 = vpop.f32.mrb[0].mxu0
    %v2082 = vadd.f32 0.0, %v2081
    %v2083 = vpop.f32.mrb[0].mxu0
    %2084 = vmatprep.mubr.bf16.mxu0 0
    %2085 = vmatmul.mubr.bf16.gmra.mrb[0].mxu0 %v2019
    %v2086 = vpop.f32.mrb[0].mxu0
    %v2087 = vadd.f32 0.0, %v2086
    %v2088 = vpop.f32.mrb[0].mxu0
    %v2089 = vpop.f32.mrb[0].mxu0
    %v2090 = vadd.f32 0.0, %v2089
    %v2091 = vpop.f32.mrb[0].mxu0
    %2092 = vmatprep.mubr.bf16.mxu0 0
    %2093 = vmatmul.mubr.bf16.gmra.mrb[0].mxu0 %v2022
    %v2094 = vpop.f32.mrb[0].mxu0
    %v2095 = vadd.f32 0.0, %v2094
    %v2096 = vpop.f32.mrb[0].mxu0
    %v2097 = vpop.f32.mrb[0].mxu0
    %v2098 = vadd.f32 0.0, %v2097
    %v2099 = vpop.f32.mrb[0].mxu0
    %2100 = vmatprep.mubr.bf16.mxu0 0
    %2101 = vmatmul.mubr.bf16.gmra.mrb[0].mxu0 %v2025
    %v2102 = vpop.f32.mrb[0].mxu0
    %v2103 = vadd.f32 0.0, %v2102
    %v2104 = vpop.f32.mrb[0].mxu0
    %v2105 = vpop.f32.mrb[0].mxu0
    %v2106 = vadd.f32 0.0, %v2105
    %v2107 = vpop.f32.mrb[0].mxu0
    %2108 = vmatprep.mubr.bf16.mxu0 0
    %2109 = vmatmul.mubr.bf16.gmra.mrb[0].mxu0 %v2028
    %v2110 = vpop.f32.mrb[0].mxu0
    %v2111 = vadd.f32 0.0, %v2110
    %v2112 = vpop.f32.mrb[0].mxu0
    %v2113 = vpop.f32.mrb[0].mxu0
    %v2114 = vadd.f32 0.0, %v2113
    %v2115 = vpop.f32.mrb[0].mxu0
    %2116 = vmatprep.mubr.bf16.mxu0 0
    %2117 = vmatmul.mubr.bf16.gmra.mrb[0].mxu0 %v2031
    %v2118 = vpop.f32.mrb[0].mxu0
    %v2119 = vadd.f32 0.0, %v2118
    %v2120 = vpop.f32.mrb[0].mxu0
    %v2121 = vpop.f32.mrb[0].mxu0
    %v2122 = vadd.f32 0.0, %v2121
    %v2123 = vpop.f32.mrb[0].mxu0
    %2124 = vmatprep.mubr.bf16.mxu0 0
    %2125 = vmatmul.mubr.bf16.gmra.mrb[0].mxu0 %v2034
    %v2126 = vpop.f32.mrb[0].mxu0
    %v2127 = vadd.f32 0.0, %v2126
    %v2128 = vpop.f32.mrb[0].mxu0
    %v2129 = vpop.f32.mrb[0].mxu0
    %v2130 = vadd.f32 0.0, %v2129
    %v2131 = vpop.f32.mrb[0].mxu0
    %2132 = vdwg.mxu0
    %v2133 = vpack.c.bf16 %v1758, %v1757
    %v2134 = vpack.c.bf16 %v1760, %v1759
    %v2135 = vpack.c.bf16 %v1762, %v1761
    %v2136 = vpack.c.bf16 %v1764, %v1763
    %v2137 = vpack.c.bf16 %v1766, %v1765
    %v2138 = vpack.c.bf16 %v1768, %v1767
    %v2139 = vpack.c.bf16 %v1770, %v1769
    %v2140 = vpack.c.bf16 %v1772, %v1771
    %v2149 = vunpack.c.l.b16 %v2133
    %v2150 = vunpack.c.h.b16 %v2133
    %v2151 = vunpack.c.l.b16 %v2134
    %v2152 = vunpack.c.h.b16 %v2134
    %v2153 = vunpack.c.l.b16 %v2135
    %v2154 = vunpack.c.h.b16 %v2135
    %v2155 = vunpack.c.l.b16 %v2136
    %v2156 = vunpack.c.h.b16 %v2136
    %v2157 = vunpack.c.l.b16 %v2137
    %v2158 = vunpack.c.h.b16 %v2137
    %v2159 = vunpack.c.l.b16 %v2138
    %v2160 = vunpack.c.h.b16 %v2138
    %v2161 = vunpack.c.l.b16 %v2139
    %v2162 = vunpack.c.h.b16 %v2139
    %v2163 = vunpack.c.l.b16 %v2140
    %v2164 = vunpack.c.h.b16 %v2140
    %v2165 = vpack.c.b16 %v2149, %v2149
    %v2166 = vpack.c.b16 %v2150, %v2150
    %v2167 = vpack.c.b16 %v2151, %v2151
    %v2168 = vpack.c.b16 %v2152, %v2152
    %v2169 = vpack.c.b16 %v2153, %v2153
    %v2170 = vpack.c.b16 %v2154, %v2154
    %v2171 = vpack.c.b16 %v2155, %v2155
    %v2172 = vpack.c.b16 %v2156, %v2156
    %v2173 = vpack.c.b16 %v2157, %v2157
    %v2174 = vpack.c.b16 %v2158, %v2158
    %v2175 = vpack.c.b16 %v2159, %v2159
    %v2176 = vpack.c.b16 %v2160, %v2160
    %v2177 = vpack.c.b16 %v2161, %v2161
    %v2178 = vpack.c.b16 %v2162, %v2162
    %v2179 = vpack.c.b16 %v2163, %v2163
    %v2180 = vpack.c.b16 %v2164, %v2164
    %s2197 = scalar_lea.vmem [#allocation11], 64
    %2198 = vst.msk [vmem:[%s2197] sm:$0xf] %vm166, %v2165
    %2199 = vst.msk [vmem:[%s2197 + $0x4] sm:$0xf] %vm166, %v2166
    %2200 = vst.msk [vmem:[%s2197 + $0x8] sm:$0xf] %vm166, %v2167
    %2201 = vst.msk [vmem:[%s2197 + $0xc] sm:$0xf] %vm166, %v2168
    %2202 = vst.msk [vmem:[%s2197 + $0x10] sm:$0xf] %vm166, %v2169
    %2203 = vst.msk [vmem:[%s2197 + $0x14] sm:$0xf] %vm166, %v2170
    %2204 = vst.msk [vmem:[%s2197 + $0x18] sm:$0xf] %vm166, %v2171
    %2205 = vst.msk [vmem:[%s2197 + $0x1c] sm:$0xf] %vm166, %v2172
    %2206 = vst.msk [vmem:[%s2197 + $0x20] sm:$0xf] %vm166, %v2173
    %2207 = vst.msk [vmem:[%s2197 + $0x24] sm:$0xf] %vm166, %v2174
    %2208 = vst.msk [vmem:[%s2197 + $0x28] sm:$0xf] %vm166, %v2175
    %2209 = vst.msk [vmem:[%s2197 + $0x2c] sm:$0xf] %vm166, %v2176
    %2210 = vst.msk [vmem:[%s2197 + $0x30] sm:$0xf] %vm166, %v2177
    %2211 = vst.msk [vmem:[%s2197 + $0x34] sm:$0xf] %vm166, %v2178
    %2212 = vst.msk [vmem:[%s2197 + $0x38] sm:$0xf] %vm166, %v2179
    %2213 = vst.msk [vmem:[%s2197 + $0x3c] sm:$0xf] %vm166, %v2180
    %v2214 = vpack.c.bf16 %v2074, %v2071
    %v2215 = vpack.c.bf16 %v2082, %v2079
    %v2216 = vpack.c.bf16 %v2090, %v2087
    %v2217 = vpack.c.bf16 %v2098, %v2095
    %v2218 = vpack.c.bf16 %v2106, %v2103
    %v2219 = vpack.c.bf16 %v2114, %v2111
    %v2220 = vpack.c.bf16 %v2122, %v2119
    %v2221 = vpack.c.bf16 %v2130, %v2127
    %v2230 = vunpack.c.l.b16 %v2214
    %v2231 = vunpack.c.h.b16 %v2214
    %v2232 = vunpack.c.l.b16 %v2215
    %v2233 = vunpack.c.h.b16 %v2215
    %v2234 = vunpack.c.l.b16 %v2216
    %v2235 = vunpack.c.h.b16 %v2216
    %v2236 = vunpack.c.l.b16 %v2217
    %v2237 = vunpack.c.h.b16 %v2217
    %v2238 = vunpack.c.l.b16 %v2218
    %v2239 = vunpack.c.h.b16 %v2218
    %v2240 = vunpack.c.l.b16 %v2219
    %v2241 = vunpack.c.h.b16 %v2219
    %v2242 = vunpack.c.l.b16 %v2220
    %v2243 = vunpack.c.h.b16 %v2220
    %v2244 = vunpack.c.l.b16 %v2221
    %v2245 = vunpack.c.h.b16 %v2221
    %v2246 = vpack.c.b16 %v2230, %v2230
    %v2247 = vpack.c.b16 %v2231, %v2231
    %v2248 = vpack.c.b16 %v2232, %v2232
    %v2249 = vpack.c.b16 %v2233, %v2233
    %v2250 = vpack.c.b16 %v2234, %v2234
    %v2251 = vpack.c.b16 %v2235, %v2235
    %v2252 = vpack.c.b16 %v2236, %v2236
    %v2253 = vpack.c.b16 %v2237, %v2237
    %v2254 = vpack.c.b16 %v2238, %v2238
    %v2255 = vpack.c.b16 %v2239, %v2239
    %v2256 = vpack.c.b16 %v2240, %v2240
    %v2257 = vpack.c.b16 %v2241, %v2241
    %v2258 = vpack.c.b16 %v2242, %v2242
    %v2259 = vpack.c.b16 %v2243, %v2243
    %v2260 = vpack.c.b16 %v2244, %v2244
    %v2261 = vpack.c.b16 %v2245, %v2245
    %s2278 = scalar_lea.vmem [#allocation14], 64
    %2279 = vst.msk [vmem:[%s2278] sm:$0xf] %vm166, %v2246
    %2280 = vst.msk [vmem:[%s2278 + $0x4] sm:$0xf] %vm166, %v2247
    %2281 = vst.msk [vmem:[%s2278 + $0x8] sm:$0xf] %vm166, %v2248
    %2282 = vst.msk [vmem:[%s2278 + $0xc] sm:$0xf] %vm166, %v2249
    %2283 = vst.msk [vmem:[%s2278 + $0x10] sm:$0xf] %vm166, %v2250
    %2284 = vst.msk [vmem:[%s2278 + $0x14] sm:$0xf] %vm166, %v2251
    %2285 = vst.msk [vmem:[%s2278 + $0x18] sm:$0xf] %vm166, %v2252
    %2286 = vst.msk [vmem:[%s2278 + $0x1c] sm:$0xf] %vm166, %v2253
    %2287 = vst.msk [vmem:[%s2278 + $0x20] sm:$0xf] %vm166, %v2254
    %2288 = vst.msk [vmem:[%s2278 + $0x24] sm:$0xf] %vm166, %v2255
    %2289 = vst.msk [vmem:[%s2278 + $0x28] sm:$0xf] %vm166, %v2256
    %2290 = vst.msk [vmem:[%s2278 + $0x2c] sm:$0xf] %vm166, %v2257
    %2291 = vst.msk [vmem:[%s2278 + $0x30] sm:$0xf] %vm166, %v2258
    %2292 = vst.msk [vmem:[%s2278 + $0x34] sm:$0xf] %vm166, %v2259
    %2293 = vst.msk [vmem:[%s2278 + $0x38] sm:$0xf] %vm166, %v2260
    %2294 = vst.msk [vmem:[%s2278 + $0x3c] sm:$0xf] %vm166, %v2261
    %s2295 = scalar_lea.vmem [#allocation17], 1
    %2296 = vst [vmem:[%s2295] sm:$0x1] %v2003
    %s2297 = scalar_lea.vmem [#allocation5], 128
    %v2298 = vld [vmem:[%s2297] sm:$0xff]
    %v2299 = vld [vmem:[%s2297 + $0x8] sm:$0xff]
    %v2300 = vld [vmem:[%s2297 + $0x10] sm:$0xff]
    %v2301 = vld [vmem:[%s2297 + $0x18] sm:$0xff]
    %v2302 = vld [vmem:[%s2297 + $0x20] sm:$0xff]
    %v2303 = vld [vmem:[%s2297 + $0x28] sm:$0xff]
    %v2304 = vld [vmem:[%s2297 + $0x30] sm:$0xff]
    %v2305 = vld [vmem:[%s2297 + $0x38] sm:$0xff]
    %v2306 = vld [vmem:[%s2297 + $0x40] sm:$0xff]
    %v2307 = vld [vmem:[%s2297 + $0x48] sm:$0xff]
    %v2308 = vld [vmem:[%s2297 + $0x50] sm:$0xff]
    %v2309 = vld [vmem:[%s2297 + $0x58] sm:$0xff]
    %v2310 = vld [vmem:[%s2297 + $0x60] sm:$0xff]
    %v2311 = vld [vmem:[%s2297 + $0x68] sm:$0xff]
    %v2312 = vld [vmem:[%s2297 + $0x70] sm:$0xff]
    %v2313 = vld [vmem:[%s2297 + $0x78] sm:$0xff]
    %v2314 = vmul.f32 %v2298, %v2298
    %v2315 = vmul.f32 %v2299, %v2299
    %v2316 = vmul.f32 %v2300, %v2300
    %v2317 = vmul.f32 %v2301, %v2301
    %v2318 = vmul.f32 %v2302, %v2302
    %v2319 = vmul.f32 %v2303, %v2303
    %v2320 = vmul.f32 %v2304, %v2304
    %v2321 = vmul.f32 %v2305, %v2305
    %v2322 = vmul.f32 %v2306, %v2306
    %v2323 = vmul.f32 %v2307, %v2307
    %v2324 = vmul.f32 %v2308, %v2308
    %v2325 = vmul.f32 %v2309, %v2309
    %v2326 = vmul.f32 %v2310, %v2310
    %v2327 = vmul.f32 %v2311, %v2311
    %v2328 = vmul.f32 %v2312, %v2312
    %v2329 = vmul.f32 %v2313, %v2313
    %v2330 = vsel %vm125, %v2314, 0.0
    %2331 = vadd.xlane.f32.xlu0 %v2330
    %v2332 = vpop.xlane.xlu0 %2331
    %v2333 = vsel %vm125, %v2315, 0.0
    %2334 = vadd.xlane.f32.xlu0 %v2333
    %v2335 = vpop.xlane.xlu0 %2334
    %v2336 = vsel %vm125, %v2316, 0.0
    %2337 = vadd.xlane.f32.xlu0 %v2336
    %v2338 = vpop.xlane.xlu0 %2337
    %v2339 = vsel %vm125, %v2317, 0.0
    %2340 = vadd.xlane.f32.xlu0 %v2339
    %v2341 = vpop.xlane.xlu0 %2340
    %v2342 = vsel %vm125, %v2318, 0.0
    %2343 = vadd.xlane.f32.xlu0 %v2342
    %v2344 = vpop.xlane.xlu0 %2343
    %v2345 = vsel %vm125, %v2319, 0.0
    %2346 = vadd.xlane.f32.xlu0 %v2345
    %v2347 = vpop.xlane.xlu0 %2346
    %v2348 = vsel %vm125, %v2320, 0.0
    %2349 = vadd.xlane.f32.xlu0 %v2348
    %v2350 = vpop.xlane.xlu0 %2349
    %v2351 = vsel %vm125, %v2321, 0.0
    %2352 = vadd.xlane.f32.xlu0 %v2351
    %v2353 = vpop.xlane.xlu0 %2352
    %v2354 = vsel %vm125, %v2322, 0.0
    %2355 = vadd.xlane.f32.xlu0 %v2354
    %v2356 = vpop.xlane.xlu0 %2355
    %v2357 = vsel %vm125, %v2323, 0.0
    %2358 = vadd.xlane.f32.xlu0 %v2357
    %v2359 = vpop.xlane.xlu0 %2358
    %v2360 = vsel %vm125, %v2324, 0.0
    %2361 = vadd.xlane.f32.xlu0 %v2360
    %v2362 = vpop.xlane.xlu0 %2361
    %v2363 = vsel %vm125, %v2325, 0.0
    %2364 = vadd.xlane.f32.xlu0 %v2363
    %v2365 = vpop.xlane.xlu0 %2364
    %v2366 = vsel %vm125, %v2326, 0.0
    %2367 = vadd.xlane.f32.xlu0 %v2366
    %v2368 = vpop.xlane.xlu0 %2367
    %v2369 = vsel %vm125, %v2327, 0.0
    %2370 = vadd.xlane.f32.xlu0 %v2369
    %v2371 = vpop.xlane.xlu0 %2370
    %v2372 = vsel %vm125, %v2328, 0.0
    %2373 = vadd.xlane.f32.xlu0 %v2372
    %v2374 = vpop.xlane.xlu0 %2373
    %v2375 = vsel %vm125, %v2329, 0.0
    %2376 = vadd.xlane.f32.xlu0 %v2375
    %v2377 = vpop.xlane.xlu0 %2376
    %v2378 = vmax.f32 %v2332, 1e-24
    %v2379 = vmax.f32 %v2335, 1e-24
    %v2380 = vmax.f32 %v2338, 1e-24
    %v2381 = vmax.f32 %v2341, 1e-24
    %v2382 = vmax.f32 %v2344, 1e-24
    %v2383 = vmax.f32 %v2347, 1e-24
    %v2384 = vmax.f32 %v2350, 1e-24
    %v2385 = vmax.f32 %v2353, 1e-24
    %v2386 = vmax.f32 %v2356, 1e-24
    %v2387 = vmax.f32 %v2359, 1e-24
    %v2388 = vmax.f32 %v2362, 1e-24
    %v2389 = vmax.f32 %v2365, 1e-24
    %v2390 = vmax.f32 %v2368, 1e-24
    %v2391 = vmax.f32 %v2371, 1e-24
    %v2392 = vmax.f32 %v2374, 1e-24
    %v2393 = vmax.f32 %v2377, 1e-24
    %v2394 = vrsqrt.pop %v2378
    %v2395 = vrsqrt.pop %v2379
    %v2396 = vrsqrt.pop %v2380
    %v2397 = vrsqrt.pop %v2381
    %v2398 = vrsqrt.pop %v2382
    %v2399 = vrsqrt.pop %v2383
    %v2400 = vrsqrt.pop %v2384
    %v2401 = vrsqrt.pop %v2385
    %v2402 = vrsqrt.pop %v2386
    %v2403 = vrsqrt.pop %v2387
    %v2404 = vrsqrt.pop %v2388
    %v2405 = vrsqrt.pop %v2389
    %v2406 = vrsqrt.pop %v2390
    %v2407 = vrsqrt.pop %v2391
    %v2408 = vrsqrt.pop %v2392
    %v2409 = vrsqrt.pop %v2393
    %v2410 = vmul.f32 %v2298, %v2394
    %v2411 = vmul.f32 %v2299, %v2395
    %v2412 = vmul.f32 %v2300, %v2396
    %v2413 = vmul.f32 %v2301, %v2397
    %v2414 = vmul.f32 %v2302, %v2398
    %v2415 = vmul.f32 %v2303, %v2399
    %v2416 = vmul.f32 %v2304, %v2400
    %v2417 = vmul.f32 %v2305, %v2401
    %v2418 = vmul.f32 %v2306, %v2402
    %v2419 = vmul.f32 %v2307, %v2403
    %v2420 = vmul.f32 %v2308, %v2404
    %v2421 = vmul.f32 %v2309, %v2405
    %v2422 = vmul.f32 %v2310, %v2406
    %v2423 = vmul.f32 %v2311, %v2407
    %v2424 = vmul.f32 %v2312, %v2408
    %v2425 = vmul.f32 %v2313, %v2409
    %v2427 = vsel %vm125, %v2410, 0
    %v2430 = vsel %vm125, %v2411, 0
    %v2433 = vsel %vm125, %v2412, 0
    %v2436 = vsel %vm125, %v2413, 0
    %v2439 = vsel %vm125, %v2414, 0
    %v2442 = vsel %vm125, %v2415, 0
    %v2445 = vsel %vm125, %v2416, 0
    %v2448 = vsel %vm125, %v2417, 0
    %v2451 = vsel %vm125, %v2418, 0
    %v2454 = vsel %vm125, %v2419, 0
    %v2457 = vsel %vm125, %v2420, 0
    %v2460 = vsel %vm125, %v2421, 0
    %v2463 = vsel %vm125, %v2422, 0
    %v2466 = vsel %vm125, %v2423, 0
    %v2469 = vsel %vm125, %v2424, 0
    %v2472 = vsel %vm125, %v2425, 0
    %2474 = vmatprep.subr.mxu0 0.0
    %2475 = vmatpush1.xpose.msra.mxu0 %v2427
    %2476 = vmatprep.subr.mxu0 0.0
    %2477 = vmatpush1.xpose.msra.mxu0 %v2430
    %2478 = vmatprep.subr.mxu0 0.0
    %2479 = vmatpush1.xpose.msra.mxu0 %v2433
    %2480 = vmatprep.subr.mxu0 0.0
    %2481 = vmatpush1.xpose.msra.mxu0 %v2436
    %2482 = vmatprep.subr.mxu0 0.0
    %2483 = vmatpush1.xpose.msra.mxu0 %v2439
    %2484 = vmatprep.subr.mxu0 0.0
    %2485 = vmatpush1.xpose.msra.mxu0 %v2442
    %2486 = vmatprep.subr.mxu0 0.0
    %2487 = vmatpush1.xpose.msra.mxu0 %v2445
    %2488 = vmatprep.subr.mxu0 0.0
    %2489 = vmatpush1.xpose.msra.mxu0 %v2448
    %2490 = vmatprep.subr.mxu0 0.0
    %2491 = vmatpush1.xpose.msra.mxu0 %v2451
    %2492 = vmatprep.subr.mxu0 0.0
    %2493 = vmatpush1.xpose.msra.mxu0 %v2454
    %2494 = vmatprep.subr.mxu0 0.0
    %2495 = vmatpush1.xpose.msra.mxu0 %v2457
    %2496 = vmatprep.subr.mxu0 0.0
    %2497 = vmatpush1.xpose.msra.mxu0 %v2460
    %2498 = vmatprep.subr.mxu0 0.0
    %2499 = vmatpush1.xpose.msra.mxu0 %v2463
    %2500 = vmatprep.subr.mxu0 0.0
    %2501 = vmatpush1.xpose.msra.mxu0 %v2466
    %2502 = vmatprep.subr.mxu0 0.0
    %2503 = vmatpush1.xpose.msra.mxu0 %v2469
    %2504 = vmatprep.subr.mxu0 0.0
    %2505 = vmatpush1.xpose.msra.mxu0 %v2472
    %2506 = vmatprep.subr.mxu0 0.0
    %2507 = vmatpush1.xpose.msra.mxu0 0.0
    %2508 = vmatprep.subr.mxu0 0.0
    %2509 = vmatpush1.xpose.msra.mxu0 0.0
    %2510 = vmatprep.subr.mxu0 0.0
    %2511 = vmatpush1.xpose.msra.mxu0 0.0
    %2512 = vmatprep.subr.mxu0 0.0
    %2513 = vmatpush1.xpose.msra.mxu0 0.0
    %2514 = vmatprep.subr.mxu0 0.0
    %2515 = vmatpush1.xpose.msra.mxu0 0.0
    %2516 = vmatprep.subr.mxu0 0.0
    %2517 = vmatpush1.xpose.msra.mxu0 0.0
    %2518 = vmatprep.subr.mxu0 0.0
    %2519 = vmatpush1.xpose.msra.mxu0 0.0
    %2520 = vmatprep.subr.mxu0 0.0
    %2521 = vmatpush1.xpose.msra.mxu0 0.0
    %2522 = vmatprep.subr.mxu0 0.0
    %2523 = vmatpush1.xpose.msra.mxu0 0.0
    %2524 = vmatprep.subr.mxu0 0.0
    %2525 = vmatpush1.xpose.msra.mxu0 0.0
    %2526 = vmatprep.subr.mxu0 0.0
    %2527 = vmatpush1.xpose.msra.mxu0 0.0
    %2528 = vmatprep.subr.mxu0 0.0
    %2529 = vmatpush1.xpose.msra.mxu0 0.0
    %2530 = vmatprep.subr.mxu0 0.0
    %2531 = vmatpush1.xpose.msra.mxu0 0.0
    %2532 = vmatprep.subr.mxu0 0.0
    %2533 = vmatpush1.xpose.msra.mxu0 0.0
    %2534 = vmatprep.subr.mxu0 0.0
    %2535 = vmatpush1.xpose.msra.mxu0 0.0
    %2536 = vmatprep.subr.mxu0 0.0
    %2537 = vmatpush1.xpose.msra.mxu0 0.0
    %2538 = vmatprep.mubr.f32.mxu0 0.0
    %2539 = vmatmul.mubr.f32.gmra.mrb[0].mxu0 %v2427
    %v2540 = vpop.f32.mrb[0].mxu0
    %v2541 = vadd.f32 0.0, %v2540
    %v2542 = vpop.f32.mrb[0].mxu0
    %2543 = vmatprep.mubr.f32.mxu0 0.0
    %2544 = vmatmul.mubr.f32.gmra.mrb[0].mxu0 %v2430
    %v2545 = vpop.f32.mrb[0].mxu0
    %v2546 = vadd.f32 0.0, %v2545
    %v2547 = vpop.f32.mrb[0].mxu0
    %2548 = vmatprep.mubr.f32.mxu0 0.0
    %2549 = vmatmul.mubr.f32.gmra.mrb[0].mxu0 %v2433
    %v2550 = vpop.f32.mrb[0].mxu0
    %v2551 = vadd.f32 0.0, %v2550
    %v2552 = vpop.f32.mrb[0].mxu0
    %2553 = vmatprep.mubr.f32.mxu0 0.0
    %2554 = vmatmul.mubr.f32.gmra.mrb[0].mxu0 %v2436
    %v2555 = vpop.f32.mrb[0].mxu0
    %v2556 = vadd.f32 0.0, %v2555
    %v2557 = vpop.f32.mrb[0].mxu0
    %2558 = vmatprep.mubr.f32.mxu0 0.0
    %2559 = vmatmul.mubr.f32.gmra.mrb[0].mxu0 %v2439
    %v2560 = vpop.f32.mrb[0].mxu0
    %v2561 = vadd.f32 0.0, %v2560
    %v2562 = vpop.f32.mrb[0].mxu0
    %2563 = vmatprep.mubr.f32.mxu0 0.0
    %2564 = vmatmul.mubr.f32.gmra.mrb[0].mxu0 %v2442
    %v2565 = vpop.f32.mrb[0].mxu0
    %v2566 = vadd.f32 0.0, %v2565
    %v2567 = vpop.f32.mrb[0].mxu0
    %2568 = vmatprep.mubr.f32.mxu0 0.0
    %2569 = vmatmul.mubr.f32.gmra.mrb[0].mxu0 %v2445
    %v2570 = vpop.f32.mrb[0].mxu0
    %v2571 = vadd.f32 0.0, %v2570
    %v2572 = vpop.f32.mrb[0].mxu0
    %2573 = vmatprep.mubr.f32.mxu0 0.0
    %2574 = vmatmul.mubr.f32.gmra.mrb[0].mxu0 %v2448
    %v2575 = vpop.f32.mrb[0].mxu0
    %v2576 = vadd.f32 0.0, %v2575
    %v2577 = vpop.f32.mrb[0].mxu0
    %2578 = vmatprep.mubr.f32.mxu0 0.0
    %2579 = vmatmul.mubr.f32.gmra.mrb[0].mxu0 %v2451
    %v2580 = vpop.f32.mrb[0].mxu0
    %v2581 = vadd.f32 0.0, %v2580
    %v2582 = vpop.f32.mrb[0].mxu0
    %2583 = vmatprep.mubr.f32.mxu0 0.0
    %2584 = vmatmul.mubr.f32.gmra.mrb[0].mxu0 %v2454
    %v2585 = vpop.f32.mrb[0].mxu0
    %v2586 = vadd.f32 0.0, %v2585
    %v2587 = vpop.f32.mrb[0].mxu0
    %2588 = vmatprep.mubr.f32.mxu0 0.0
    %2589 = vmatmul.mubr.f32.gmra.mrb[0].mxu0 %v2457
    %v2590 = vpop.f32.mrb[0].mxu0
    %v2591 = vadd.f32 0.0, %v2590
    %v2592 = vpop.f32.mrb[0].mxu0
    %2593 = vmatprep.mubr.f32.mxu0 0.0
    %2594 = vmatmul.mubr.f32.gmra.mrb[0].mxu0 %v2460
    %v2595 = vpop.f32.mrb[0].mxu0
    %v2596 = vadd.f32 0.0, %v2595
    %v2597 = vpop.f32.mrb[0].mxu0
    %2598 = vmatprep.mubr.f32.mxu0 0.0
    %2599 = vmatmul.mubr.f32.gmra.mrb[0].mxu0 %v2463
    %v2600 = vpop.f32.mrb[0].mxu0
    %v2601 = vadd.f32 0.0, %v2600
    %v2602 = vpop.f32.mrb[0].mxu0
    %2603 = vmatprep.mubr.f32.mxu0 0.0
    %2604 = vmatmul.mubr.f32.gmra.mrb[0].mxu0 %v2466
    %v2605 = vpop.f32.mrb[0].mxu0
    %v2606 = vadd.f32 0.0, %v2605
    %v2607 = vpop.f32.mrb[0].mxu0
    %2608 = vmatprep.mubr.f32.mxu0 0.0
    %2609 = vmatmul.mubr.f32.gmra.mrb[0].mxu0 %v2469
    %v2610 = vpop.f32.mrb[0].mxu0
    %v2611 = vadd.f32 0.0, %v2610
    %v2612 = vpop.f32.mrb[0].mxu0
    %2613 = vmatprep.mubr.f32.mxu0 0.0
    %2614 = vmatmul.mubr.f32.gmra.mrb[0].mxu0 %v2472
    %v2615 = vpop.f32.mrb[0].mxu0
    %v2616 = vadd.f32 0.0, %v2615
    %v2617 = vpop.f32.mrb[0].mxu0
    %2618 = vdwg.mxu0
    %v2619 = vmax.f32 %v2541, 0.0
    %v2620 = vmax.f32 %v2546, 0.0
    %v2621 = vmax.f32 %v2551, 0.0
    %v2622 = vmax.f32 %v2556, 0.0
    %v2623 = vmax.f32 %v2561, 0.0
    %v2624 = vmax.f32 %v2566, 0.0
    %v2625 = vmax.f32 %v2571, 0.0
    %v2626 = vmax.f32 %v2576, 0.0
    %v2627 = vmax.f32 %v2581, 0.0
    %v2628 = vmax.f32 %v2586, 0.0
    %v2629 = vmax.f32 %v2591, 0.0
    %v2630 = vmax.f32 %v2596, 0.0
    %v2631 = vmax.f32 %v2601, 0.0
    %v2632 = vmax.f32 %v2606, 0.0
    %v2633 = vmax.f32 %v2611, 0.0
    %v2634 = vmax.f32 %v2616, 0.0
    %v2635 = vadd.f32 %v2619, %v2620
    %v2636 = vadd.f32 %v2635, %v2621
    %v2637 = vadd.f32 %v2636, %v2622
    %v2638 = vadd.f32 %v2637, %v2623
    %v2639 = vadd.f32 %v2638, %v2624
    %v2640 = vadd.f32 %v2639, %v2625
    %v2641 = vadd.f32 %v2640, %v2626
    %v2642 = vadd.f32 %v2641, %v2627
    %v2643 = vadd.f32 %v2642, %v2628
    %v2644 = vadd.f32 %v2643, %v2629
    %v2645 = vadd.f32 %v2644, %v2630
    %v2646 = vadd.f32 %v2645, %v2631
    %v2647 = vadd.f32 %v2646, %v2632
    %v2648 = vadd.f32 %v2647, %v2633
    %v2649 = vadd.f32 %v2648, %v2634
    %v2650 = vrot.slane %v2649, 4
    %v2651 = vadd.f32 %v2649, %v2650
    %v2652 = vrot.slane %v2651, 2
    %v2653 = vadd.f32 %v2651, %v2652
    %v2654 = vrot.slane %v2653, 1
    %v2655 = vadd.f32 %v2653, %v2654
    %v2656 = vadd.f32 %v2655, 1.0
    %v2657 = vpack.c.bf16 %v2299, %v2298
    %v2658 = vpack.c.bf16 %v2301, %v2300
    %v2659 = vpack.c.bf16 %v2303, %v2302
    %v2660 = vpack.c.bf16 %v2305, %v2304
    %v2661 = vpack.c.bf16 %v2307, %v2306
    %v2662 = vpack.c.bf16 %v2309, %v2308
    %v2663 = vpack.c.bf16 %v2311, %v2310
    %v2664 = vpack.c.bf16 %v2313, %v2312
    %v2666 = vsel %vm125, %v2657, 0
    %v2669 = vsel %vm125, %v2658, 0
    %v2672 = vsel %vm125, %v2659, 0
    %v2675 = vsel %vm125, %v2660, 0
    %v2678 = vsel %vm125, %v2661, 0
    %v2681 = vsel %vm125, %v2662, 0
    %v2684 = vsel %vm125, %v2663, 0
    %v2687 = vsel %vm125, %v2664, 0
    %2689 = vmatprep.subr.bf16.mxu0 0
    %2690 = vmatpush1.bf16.msra.mxu0 %v115
    %2691 = vmatprep.subr.bf16.mxu0 0
    %2692 = vmatpush1.bf16.msra.mxu0 %v116
    %2693 = vmatprep.subr.bf16.mxu0 0
    %2694 = vmatpush1.bf16.msra.mxu0 0
    %2695 = vmatprep.subr.bf16.mxu0 0
    %2696 = vmatpush1.bf16.msra.mxu0 0
    %2697 = vmatprep.subr.bf16.mxu0 0
    %2698 = vmatpush1.bf16.msra.mxu0 0
    %2699 = vmatprep.subr.bf16.mxu0 0
    %2700 = vmatpush1.bf16.msra.mxu0 0
    %2701 = vmatprep.subr.bf16.mxu0 0
    %2702 = vmatpush1.bf16.msra.mxu0 0
    %2703 = vmatprep.subr.bf16.mxu0 0
    %2704 = vmatpush1.bf16.msra.mxu0 0
    %2705 = vmatprep.subr.bf16.mxu0 0
    %2706 = vmatpush1.bf16.msra.mxu0 0
    %2707 = vmatprep.subr.bf16.mxu0 0
    %2708 = vmatpush1.bf16.msra.mxu0 0
    %2709 = vmatprep.subr.bf16.mxu0 0
    %2710 = vmatpush1.bf16.msra.mxu0 0
    %2711 = vmatprep.subr.bf16.mxu0 0
    %2712 = vmatpush1.bf16.msra.mxu0 0
    %2713 = vmatprep.subr.bf16.mxu0 0
    %2714 = vmatpush1.bf16.msra.mxu0 0
    %2715 = vmatprep.subr.bf16.mxu0 0
    %2716 = vmatpush1.bf16.msra.mxu0 0
    %2717 = vmatprep.subr.bf16.mxu0 0
    %2718 = vmatpush1.bf16.msra.mxu0 0
    %2719 = vmatprep.subr.bf16.mxu0 0
    %2720 = vmatpush1.bf16.msra.mxu0 0
    %2721 = vmatprep.mubr.bf16.mxu0 0
    %2722 = vmatmul.mubr.bf16.gmra.mrb[0].mxu0 %v2666
    %v2723 = vpop.f32.mrb[0].mxu0
    %v2724 = vadd.f32 0.0, %v2723
    %v2725 = vpop.f32.mrb[0].mxu0
    %v2726 = vpop.f32.mrb[0].mxu0
    %v2727 = vadd.f32 0.0, %v2726
    %v2728 = vpop.f32.mrb[0].mxu0
    %2729 = vmatprep.mubr.bf16.mxu0 0
    %2730 = vmatmul.mubr.bf16.gmra.mrb[0].mxu0 %v2669
    %v2731 = vpop.f32.mrb[0].mxu0
    %v2732 = vadd.f32 0.0, %v2731
    %v2733 = vpop.f32.mrb[0].mxu0
    %v2734 = vpop.f32.mrb[0].mxu0
    %v2735 = vadd.f32 0.0, %v2734
    %v2736 = vpop.f32.mrb[0].mxu0
    %2737 = vmatprep.mubr.bf16.mxu0 0
    %2738 = vmatmul.mubr.bf16.gmra.mrb[0].mxu0 %v2672
    %v2739 = vpop.f32.mrb[0].mxu0
    %v2740 = vadd.f32 0.0, %v2739
    %v2741 = vpop.f32.mrb[0].mxu0
    %v2742 = vpop.f32.mrb[0].mxu0
    %v2743 = vadd.f32 0.0, %v2742
    %v2744 = vpop.f32.mrb[0].mxu0
    %2745 = vmatprep.mubr.bf16.mxu0 0
    %2746 = vmatmul.mubr.bf16.gmra.mrb[0].mxu0 %v2675
    %v2747 = vpop.f32.mrb[0].mxu0
    %v2748 = vadd.f32 0.0, %v2747
    %v2749 = vpop.f32.mrb[0].mxu0
    %v2750 = vpop.f32.mrb[0].mxu0
    %v2751 = vadd.f32 0.0, %v2750
    %v2752 = vpop.f32.mrb[0].mxu0
    %2753 = vmatprep.mubr.bf16.mxu0 0
    %2754 = vmatmul.mubr.bf16.gmra.mrb[0].mxu0 %v2678
    %v2755 = vpop.f32.mrb[0].mxu0
    %v2756 = vadd.f32 0.0, %v2755
    %v2757 = vpop.f32.mrb[0].mxu0
    %v2758 = vpop.f32.mrb[0].mxu0
    %v2759 = vadd.f32 0.0, %v2758
    %v2760 = vpop.f32.mrb[0].mxu0
    %2761 = vmatprep.mubr.bf16.mxu0 0
    %2762 = vmatmul.mubr.bf16.gmra.mrb[0].mxu0 %v2681
    %v2763 = vpop.f32.mrb[0].mxu0
    %v2764 = vadd.f32 0.0, %v2763
    %v2765 = vpop.f32.mrb[0].mxu0
    %v2766 = vpop.f32.mrb[0].mxu0
    %v2767 = vadd.f32 0.0, %v2766
    %v2768 = vpop.f32.mrb[0].mxu0
    %2769 = vmatprep.mubr.bf16.mxu0 0
    %2770 = vmatmul.mubr.bf16.gmra.mrb[0].mxu0 %v2684
    %v2771 = vpop.f32.mrb[0].mxu0
    %v2772 = vadd.f32 0.0, %v2771
    %v2773 = vpop.f32.mrb[0].mxu0
    %v2774 = vpop.f32.mrb[0].mxu0
    %v2775 = vadd.f32 0.0, %v2774
    %v2776 = vpop.f32.mrb[0].mxu0
    %2777 = vmatprep.mubr.bf16.mxu0 0
    %2778 = vmatmul.mubr.bf16.gmra.mrb[0].mxu0 %v2687
    %v2779 = vpop.f32.mrb[0].mxu0
    %v2780 = vadd.f32 0.0, %v2779
    %v2781 = vpop.f32.mrb[0].mxu0
    %v2782 = vpop.f32.mrb[0].mxu0
    %v2783 = vadd.f32 0.0, %v2782
    %v2784 = vpop.f32.mrb[0].mxu0
    %2785 = vdwg.mxu0
    %v2786 = vpack.c.bf16 %v2411, %v2410
    %v2787 = vpack.c.bf16 %v2413, %v2412
    %v2788 = vpack.c.bf16 %v2415, %v2414
    %v2789 = vpack.c.bf16 %v2417, %v2416
    %v2790 = vpack.c.bf16 %v2419, %v2418
    %v2791 = vpack.c.bf16 %v2421, %v2420
    %v2792 = vpack.c.bf16 %v2423, %v2422
    %v2793 = vpack.c.bf16 %v2425, %v2424
    %v2802 = vunpack.c.l.b16 %v2786
    %v2803 = vunpack.c.h.b16 %v2786
    %v2804 = vunpack.c.l.b16 %v2787
    %v2805 = vunpack.c.h.b16 %v2787
    %v2806 = vunpack.c.l.b16 %v2788
    %v2807 = vunpack.c.h.b16 %v2788
    %v2808 = vunpack.c.l.b16 %v2789
    %v2809 = vunpack.c.h.b16 %v2789
    %v2810 = vunpack.c.l.b16 %v2790
    %v2811 = vunpack.c.h.b16 %v2790
    %v2812 = vunpack.c.l.b16 %v2791
    %v2813 = vunpack.c.h.b16 %v2791
    %v2814 = vunpack.c.l.b16 %v2792
    %v2815 = vunpack.c.h.b16 %v2792
    %v2816 = vunpack.c.l.b16 %v2793
    %v2817 = vunpack.c.h.b16 %v2793
    %v2818 = vpack.c.b16 %v2802, %v2802
    %v2819 = vpack.c.b16 %v2803, %v2803
    %v2820 = vpack.c.b16 %v2804, %v2804
    %v2821 = vpack.c.b16 %v2805, %v2805
    %v2822 = vpack.c.b16 %v2806, %v2806
    %v2823 = vpack.c.b16 %v2807, %v2807
    %v2824 = vpack.c.b16 %v2808, %v2808
    %v2825 = vpack.c.b16 %v2809, %v2809
    %v2826 = vpack.c.b16 %v2810, %v2810
    %v2827 = vpack.c.b16 %v2811, %v2811
    %v2828 = vpack.c.b16 %v2812, %v2812
    %v2829 = vpack.c.b16 %v2813, %v2813
    %v2830 = vpack.c.b16 %v2814, %v2814
    %v2831 = vpack.c.b16 %v2815, %v2815
    %v2832 = vpack.c.b16 %v2816, %v2816
    %v2833 = vpack.c.b16 %v2817, %v2817
    %s2850 = scalar_lea.vmem [#allocation12], 64
    %2851 = vst.msk [vmem:[%s2850] sm:$0xf] %vm166, %v2818
    %2852 = vst.msk [vmem:[%s2850 + $0x4] sm:$0xf] %vm166, %v2819
    %2853 = vst.msk [vmem:[%s2850 + $0x8] sm:$0xf] %vm166, %v2820
    %2854 = vst.msk [vmem:[%s2850 + $0xc] sm:$0xf] %vm166, %v2821
    %2855 = vst.msk [vmem:[%s2850 + $0x10] sm:$0xf] %vm166, %v2822
    %2856 = vst.msk [vmem:[%s2850 + $0x14] sm:$0xf] %vm166, %v2823
    %2857 = vst.msk [vmem:[%s2850 + $0x18] sm:$0xf] %vm166, %v2824
    %2858 = vst.msk [vmem:[%s2850 + $0x1c] sm:$0xf] %vm166, %v2825
    %2859 = vst.msk [vmem:[%s2850 + $0x20] sm:$0xf] %vm166, %v2826
    %2860 = vst.msk [vmem:[%s2850 + $0x24] sm:$0xf] %vm166, %v2827
    %2861 = vst.msk [vmem:[%s2850 + $0x28] sm:$0xf] %vm166, %v2828
    %2862 = vst.msk [vmem:[%s2850 + $0x2c] sm:$0xf] %vm166, %v2829
    %2863 = vst.msk [vmem:[%s2850 + $0x30] sm:$0xf] %vm166, %v2830
    %2864 = vst.msk [vmem:[%s2850 + $0x34] sm:$0xf] %vm166, %v2831
    %2865 = vst.msk [vmem:[%s2850 + $0x38] sm:$0xf] %vm166, %v2832
    %2866 = vst.msk [vmem:[%s2850 + $0x3c] sm:$0xf] %vm166, %v2833
    %v2867 = vpack.c.bf16 %v2727, %v2724
    %v2868 = vpack.c.bf16 %v2735, %v2732
    %v2869 = vpack.c.bf16 %v2743, %v2740
    %v2870 = vpack.c.bf16 %v2751, %v2748
    %v2871 = vpack.c.bf16 %v2759, %v2756
    %v2872 = vpack.c.bf16 %v2767, %v2764
    %v2873 = vpack.c.bf16 %v2775, %v2772
    %v2874 = vpack.c.bf16 %v2783, %v2780
    %v2883 = vunpack.c.l.b16 %v2867
    %v2884 = vunpack.c.h.b16 %v2867
    %v2885 = vunpack.c.l.b16 %v2868
    %v2886 = vunpack.c.h.b16 %v2868
    %v2887 = vunpack.c.l.b16 %v2869
    %v2888 = vunpack.c.h.b16 %v2869
    %v2889 = vunpack.c.l.b16 %v2870
    %v2890 = vunpack.c.h.b16 %v2870
    %v2891 = vunpack.c.l.b16 %v2871
    %v2892 = vunpack.c.h.b16 %v2871
    %v2893 = vunpack.c.l.b16 %v2872
    %v2894 = vunpack.c.h.b16 %v2872
    %v2895 = vunpack.c.l.b16 %v2873
    %v2896 = vunpack.c.h.b16 %v2873
    %v2897 = vunpack.c.l.b16 %v2874
    %v2898 = vunpack.c.h.b16 %v2874
    %v2899 = vpack.c.b16 %v2883, %v2883
    %v2900 = vpack.c.b16 %v2884, %v2884
    %v2901 = vpack.c.b16 %v2885, %v2885
    %v2902 = vpack.c.b16 %v2886, %v2886
    %v2903 = vpack.c.b16 %v2887, %v2887
    %v2904 = vpack.c.b16 %v2888, %v2888
    %v2905 = vpack.c.b16 %v2889, %v2889
    %v2906 = vpack.c.b16 %v2890, %v2890
    %v2907 = vpack.c.b16 %v2891, %v2891
    %v2908 = vpack.c.b16 %v2892, %v2892
    %v2909 = vpack.c.b16 %v2893, %v2893
    %v2910 = vpack.c.b16 %v2894, %v2894
    %v2911 = vpack.c.b16 %v2895, %v2895
    %v2912 = vpack.c.b16 %v2896, %v2896
    %v2913 = vpack.c.b16 %v2897, %v2897
    %v2914 = vpack.c.b16 %v2898, %v2898
    %s2931 = scalar_lea.vmem [#allocation15], 64
    %2932 = vst.msk [vmem:[%s2931] sm:$0xf] %vm166, %v2899
    %2933 = vst.msk [vmem:[%s2931 + $0x4] sm:$0xf] %vm166, %v2900
    %2934 = vst.msk [vmem:[%s2931 + $0x8] sm:$0xf] %vm166, %v2901
    %2935 = vst.msk [vmem:[%s2931 + $0xc] sm:$0xf] %vm166, %v2902
    %2936 = vst.msk [vmem:[%s2931 + $0x10] sm:$0xf] %vm166, %v2903
    %2937 = vst.msk [vmem:[%s2931 + $0x14] sm:$0xf] %vm166, %v2904
    %2938 = vst.msk [vmem:[%s2931 + $0x18] sm:$0xf] %vm166, %v2905
    %2939 = vst.msk [vmem:[%s2931 + $0x1c] sm:$0xf] %vm166, %v2906
    %2940 = vst.msk [vmem:[%s2931 + $0x20] sm:$0xf] %vm166, %v2907
    %2941 = vst.msk [vmem:[%s2931 + $0x24] sm:$0xf] %vm166, %v2908
    %2942 = vst.msk [vmem:[%s2931 + $0x28] sm:$0xf] %vm166, %v2909
    %2943 = vst.msk [vmem:[%s2931 + $0x2c] sm:$0xf] %vm166, %v2910
    %2944 = vst.msk [vmem:[%s2931 + $0x30] sm:$0xf] %vm166, %v2911
    %2945 = vst.msk [vmem:[%s2931 + $0x34] sm:$0xf] %vm166, %v2912
    %2946 = vst.msk [vmem:[%s2931 + $0x38] sm:$0xf] %vm166, %v2913
    %2947 = vst.msk [vmem:[%s2931 + $0x3c] sm:$0xf] %vm166, %v2914
    %s2948 = scalar_lea.vmem [#allocation18], 1
    %2949 = vst [vmem:[%s2948] sm:$0x1] %v2656
    %s2950 = scalar_lea.vmem [#allocation2], 256
    %v2951 = vld [vmem:[%s2950] sm:$0xff]
    %v2952 = vld [vmem:[%s2950 + $0x8] sm:$0xff]
    %v2953 = vld [vmem:[%s2950 + $0x10] sm:$0xff]
    %v2954 = vld [vmem:[%s2950 + $0x18] sm:$0xff]
    %v2955 = vld [vmem:[%s2950 + $0x20] sm:$0xff]
    %v2956 = vld [vmem:[%s2950 + $0x28] sm:$0xff]
    %v2957 = vld [vmem:[%s2950 + $0x30] sm:$0xff]
    %v2958 = vld [vmem:[%s2950 + $0x38] sm:$0xff]
    %v2959 = vld [vmem:[%s2950 + $0x40] sm:$0xff]
    %v2960 = vld [vmem:[%s2950 + $0x48] sm:$0xff]
    %v2961 = vld [vmem:[%s2950 + $0x50] sm:$0xff]
    %v2962 = vld [vmem:[%s2950 + $0x58] sm:$0xff]
    %v2963 = vld [vmem:[%s2950 + $0x60] sm:$0xff]
    %v2964 = vld [vmem:[%s2950 + $0x68] sm:$0xff]
    %v2965 = vld [vmem:[%s2950 + $0x70] sm:$0xff]
    %v2966 = vld [vmem:[%s2950 + $0x78] sm:$0xff]
    %v2967 = vmul.f32 %v2951, %v2951
    %v2968 = vmul.f32 %v2952, %v2952
    %v2969 = vmul.f32 %v2953, %v2953
    %v2970 = vmul.f32 %v2954, %v2954
    %v2971 = vmul.f32 %v2955, %v2955
    %v2972 = vmul.f32 %v2956, %v2956
    %v2973 = vmul.f32 %v2957, %v2957
    %v2974 = vmul.f32 %v2958, %v2958
    %v2975 = vmul.f32 %v2959, %v2959
    %v2976 = vmul.f32 %v2960, %v2960
    %v2977 = vmul.f32 %v2961, %v2961
    %v2978 = vmul.f32 %v2962, %v2962
    %v2979 = vmul.f32 %v2963, %v2963
    %v2980 = vmul.f32 %v2964, %v2964
    %v2981 = vmul.f32 %v2965, %v2965
    %v2982 = vmul.f32 %v2966, %v2966
    %v2983 = vsel %vm125, %v2967, 0.0
    %2984 = vadd.xlane.f32.xlu0 %v2983
    %v2985 = vpop.xlane.xlu0 %2984
    %v2986 = vsel %vm125, %v2968, 0.0
    %2987 = vadd.xlane.f32.xlu0 %v2986
    %v2988 = vpop.xlane.xlu0 %2987
    %v2989 = vsel %vm125, %v2969, 0.0
    %2990 = vadd.xlane.f32.xlu0 %v2989
    %v2991 = vpop.xlane.xlu0 %2990
    %v2992 = vsel %vm125, %v2970, 0.0
    %2993 = vadd.xlane.f32.xlu0 %v2992
    %v2994 = vpop.xlane.xlu0 %2993
    %v2995 = vsel %vm125, %v2971, 0.0
    %2996 = vadd.xlane.f32.xlu0 %v2995
    %v2997 = vpop.xlane.xlu0 %2996
    %v2998 = vsel %vm125, %v2972, 0.0
    %2999 = vadd.xlane.f32.xlu0 %v2998
    %v3000 = vpop.xlane.xlu0 %2999
    %v3001 = vsel %vm125, %v2973, 0.0
    %3002 = vadd.xlane.f32.xlu0 %v3001
    %v3003 = vpop.xlane.xlu0 %3002
    %v3004 = vsel %vm125, %v2974, 0.0
    %3005 = vadd.xlane.f32.xlu0 %v3004
    %v3006 = vpop.xlane.xlu0 %3005
    %v3007 = vsel %vm125, %v2975, 0.0
    %3008 = vadd.xlane.f32.xlu0 %v3007
    %v3009 = vpop.xlane.xlu0 %3008
    %v3010 = vsel %vm125, %v2976, 0.0
    %3011 = vadd.xlane.f32.xlu0 %v3010
    %v3012 = vpop.xlane.xlu0 %3011
    %v3013 = vsel %vm125, %v2977, 0.0
    %3014 = vadd.xlane.f32.xlu0 %v3013
    %v3015 = vpop.xlane.xlu0 %3014
    %v3016 = vsel %vm125, %v2978, 0.0
    %3017 = vadd.xlane.f32.xlu0 %v3016
    %v3018 = vpop.xlane.xlu0 %3017
    %v3019 = vsel %vm125, %v2979, 0.0
    %3020 = vadd.xlane.f32.xlu0 %v3019
    %v3021 = vpop.xlane.xlu0 %3020
    %v3022 = vsel %vm125, %v2980, 0.0
    %3023 = vadd.xlane.f32.xlu0 %v3022
    %v3024 = vpop.xlane.xlu0 %3023
    %v3025 = vsel %vm125, %v2981, 0.0
    %3026 = vadd.xlane.f32.xlu0 %v3025
    %v3027 = vpop.xlane.xlu0 %3026
    %v3028 = vsel %vm125, %v2982, 0.0
    %3029 = vadd.xlane.f32.xlu0 %v3028
    %v3030 = vpop.xlane.xlu0 %3029
    %v3031 = vmax.f32 %v2985, 1e-24
    %v3032 = vmax.f32 %v2988, 1e-24
    %v3033 = vmax.f32 %v2991, 1e-24
    %v3034 = vmax.f32 %v2994, 1e-24
    %v3035 = vmax.f32 %v2997, 1e-24
    %v3036 = vmax.f32 %v3000, 1e-24
    %v3037 = vmax.f32 %v3003, 1e-24
    %v3038 = vmax.f32 %v3006, 1e-24
    %v3039 = vmax.f32 %v3009, 1e-24
    %v3040 = vmax.f32 %v3012, 1e-24
    %v3041 = vmax.f32 %v3015, 1e-24
    %v3042 = vmax.f32 %v3018, 1e-24
    %v3043 = vmax.f32 %v3021, 1e-24
    %v3044 = vmax.f32 %v3024, 1e-24
    %v3045 = vmax.f32 %v3027, 1e-24
    %v3046 = vmax.f32 %v3030, 1e-24
    %v3047 = vrsqrt.pop %v3031
    %v3048 = vrsqrt.pop %v3032
    %v3049 = vrsqrt.pop %v3033
    %v3050 = vrsqrt.pop %v3034
    %v3051 = vrsqrt.pop %v3035
    %v3052 = vrsqrt.pop %v3036
    %v3053 = vrsqrt.pop %v3037
    %v3054 = vrsqrt.pop %v3038
    %v3055 = vrsqrt.pop %v3039
    %v3056 = vrsqrt.pop %v3040
    %v3057 = vrsqrt.pop %v3041
    %v3058 = vrsqrt.pop %v3042
    %v3059 = vrsqrt.pop %v3043
    %v3060 = vrsqrt.pop %v3044
    %v3061 = vrsqrt.pop %v3045
    %v3062 = vrsqrt.pop %v3046
    %v3063 = vmul.f32 %v2951, %v3047
    %v3064 = vmul.f32 %v2952, %v3048
    %v3065 = vmul.f32 %v2953, %v3049
    %v3066 = vmul.f32 %v2954, %v3050
    %v3067 = vmul.f32 %v2955, %v3051
    %v3068 = vmul.f32 %v2956, %v3052
    %v3069 = vmul.f32 %v2957, %v3053
    %v3070 = vmul.f32 %v2958, %v3054
    %v3071 = vmul.f32 %v2959, %v3055
    %v3072 = vmul.f32 %v2960, %v3056
    %v3073 = vmul.f32 %v2961, %v3057
    %v3074 = vmul.f32 %v2962, %v3058
    %v3075 = vmul.f32 %v2963, %v3059
    %v3076 = vmul.f32 %v2964, %v3060
    %v3077 = vmul.f32 %v2965, %v3061
    %v3078 = vmul.f32 %v2966, %v3062
    %v3080 = vsel %vm125, %v3063, 0
    %v3083 = vsel %vm125, %v3064, 0
    %v3086 = vsel %vm125, %v3065, 0
    %v3089 = vsel %vm125, %v3066, 0
    %v3092 = vsel %vm125, %v3067, 0
    %v3095 = vsel %vm125, %v3068, 0
    %v3098 = vsel %vm125, %v3069, 0
    %v3101 = vsel %vm125, %v3070, 0
    %v3104 = vsel %vm125, %v3071, 0
    %v3107 = vsel %vm125, %v3072, 0
    %v3110 = vsel %vm125, %v3073, 0
    %v3113 = vsel %vm125, %v3074, 0
    %v3116 = vsel %vm125, %v3075, 0
    %v3119 = vsel %vm125, %v3076, 0
    %v3122 = vsel %vm125, %v3077, 0
    %v3125 = vsel %vm125, %v3078, 0
    %3127 = vmatprep.subr.mxu0 0.0
    %3128 = vmatpush1.xpose.msra.mxu0 %v3080
    %3129 = vmatprep.subr.mxu0 0.0
    %3130 = vmatpush1.xpose.msra.mxu0 %v3083
    %3131 = vmatprep.subr.mxu0 0.0
    %3132 = vmatpush1.xpose.msra.mxu0 %v3086
    %3133 = vmatprep.subr.mxu0 0.0
    %3134 = vmatpush1.xpose.msra.mxu0 %v3089
    %3135 = vmatprep.subr.mxu0 0.0
    %3136 = vmatpush1.xpose.msra.mxu0 %v3092
    %3137 = vmatprep.subr.mxu0 0.0
    %3138 = vmatpush1.xpose.msra.mxu0 %v3095
    %3139 = vmatprep.subr.mxu0 0.0
    %3140 = vmatpush1.xpose.msra.mxu0 %v3098
    %3141 = vmatprep.subr.mxu0 0.0
    %3142 = vmatpush1.xpose.msra.mxu0 %v3101
    %3143 = vmatprep.subr.mxu0 0.0
    %3144 = vmatpush1.xpose.msra.mxu0 %v3104
    %3145 = vmatprep.subr.mxu0 0.0
    %3146 = vmatpush1.xpose.msra.mxu0 %v3107
    %3147 = vmatprep.subr.mxu0 0.0
    %3148 = vmatpush1.xpose.msra.mxu0 %v3110
    %3149 = vmatprep.subr.mxu0 0.0
    %3150 = vmatpush1.xpose.msra.mxu0 %v3113
    %3151 = vmatprep.subr.mxu0 0.0
    %3152 = vmatpush1.xpose.msra.mxu0 %v3116
    %3153 = vmatprep.subr.mxu0 0.0
    %3154 = vmatpush1.xpose.msra.mxu0 %v3119
    %3155 = vmatprep.subr.mxu0 0.0
    %3156 = vmatpush1.xpose.msra.mxu0 %v3122
    %3157 = vmatprep.subr.mxu0 0.0
    %3158 = vmatpush1.xpose.msra.mxu0 %v3125
    %3159 = vmatprep.subr.mxu0 0.0
    %3160 = vmatpush1.xpose.msra.mxu0 0.0
    %3161 = vmatprep.subr.mxu0 0.0
    %3162 = vmatpush1.xpose.msra.mxu0 0.0
    %3163 = vmatprep.subr.mxu0 0.0
    %3164 = vmatpush1.xpose.msra.mxu0 0.0
    %3165 = vmatprep.subr.mxu0 0.0
    %3166 = vmatpush1.xpose.msra.mxu0 0.0
    %3167 = vmatprep.subr.mxu0 0.0
    %3168 = vmatpush1.xpose.msra.mxu0 0.0
    %3169 = vmatprep.subr.mxu0 0.0
    %3170 = vmatpush1.xpose.msra.mxu0 0.0
    %3171 = vmatprep.subr.mxu0 0.0
    %3172 = vmatpush1.xpose.msra.mxu0 0.0
    %3173 = vmatprep.subr.mxu0 0.0
    %3174 = vmatpush1.xpose.msra.mxu0 0.0
    %3175 = vmatprep.subr.mxu0 0.0
    %3176 = vmatpush1.xpose.msra.mxu0 0.0
    %3177 = vmatprep.subr.mxu0 0.0
    %3178 = vmatpush1.xpose.msra.mxu0 0.0
    %3179 = vmatprep.subr.mxu0 0.0
    %3180 = vmatpush1.xpose.msra.mxu0 0.0
    %3181 = vmatprep.subr.mxu0 0.0
    %3182 = vmatpush1.xpose.msra.mxu0 0.0
    %3183 = vmatprep.subr.mxu0 0.0
    %3184 = vmatpush1.xpose.msra.mxu0 0.0
    %3185 = vmatprep.subr.mxu0 0.0
    %3186 = vmatpush1.xpose.msra.mxu0 0.0
    %3187 = vmatprep.subr.mxu0 0.0
    %3188 = vmatpush1.xpose.msra.mxu0 0.0
    %3189 = vmatprep.subr.mxu0 0.0
    %3190 = vmatpush1.xpose.msra.mxu0 0.0
    %3191 = vmatprep.mubr.f32.mxu0 0.0
    %3192 = vmatmul.mubr.f32.gmra.mrb[0].mxu0 %v3080
    %v3193 = vpop.f32.mrb[0].mxu0
    %v3194 = vadd.f32 0.0, %v3193
    %v3195 = vpop.f32.mrb[0].mxu0
    %3196 = vmatprep.mubr.f32.mxu0 0.0
    %3197 = vmatmul.mubr.f32.gmra.mrb[0].mxu0 %v3083
    %v3198 = vpop.f32.mrb[0].mxu0
    %v3199 = vadd.f32 0.0, %v3198
    %v3200 = vpop.f32.mrb[0].mxu0
    %3201 = vmatprep.mubr.f32.mxu0 0.0
    %3202 = vmatmul.mubr.f32.gmra.mrb[0].mxu0 %v3086
    %v3203 = vpop.f32.mrb[0].mxu0
    %v3204 = vadd.f32 0.0, %v3203
    %v3205 = vpop.f32.mrb[0].mxu0
    %3206 = vmatprep.mubr.f32.mxu0 0.0
    %3207 = vmatmul.mubr.f32.gmra.mrb[0].mxu0 %v3089
    %v3208 = vpop.f32.mrb[0].mxu0
    %v3209 = vadd.f32 0.0, %v3208
    %v3210 = vpop.f32.mrb[0].mxu0
    %3211 = vmatprep.mubr.f32.mxu0 0.0
    %3212 = vmatmul.mubr.f32.gmra.mrb[0].mxu0 %v3092
    %v3213 = vpop.f32.mrb[0].mxu0
    %v3214 = vadd.f32 0.0, %v3213
    %v3215 = vpop.f32.mrb[0].mxu0
    %3216 = vmatprep.mubr.f32.mxu0 0.0
    %3217 = vmatmul.mubr.f32.gmra.mrb[0].mxu0 %v3095
    %v3218 = vpop.f32.mrb[0].mxu0
    %v3219 = vadd.f32 0.0, %v3218
    %v3220 = vpop.f32.mrb[0].mxu0
    %3221 = vmatprep.mubr.f32.mxu0 0.0
    %3222 = vmatmul.mubr.f32.gmra.mrb[0].mxu0 %v3098
    %v3223 = vpop.f32.mrb[0].mxu0
    %v3224 = vadd.f32 0.0, %v3223
    %v3225 = vpop.f32.mrb[0].mxu0
    %3226 = vmatprep.mubr.f32.mxu0 0.0
    %3227 = vmatmul.mubr.f32.gmra.mrb[0].mxu0 %v3101
    %v3228 = vpop.f32.mrb[0].mxu0
    %v3229 = vadd.f32 0.0, %v3228
    %v3230 = vpop.f32.mrb[0].mxu0
    %3231 = vmatprep.mubr.f32.mxu0 0.0
    %3232 = vmatmul.mubr.f32.gmra.mrb[0].mxu0 %v3104
    %v3233 = vpop.f32.mrb[0].mxu0
    %v3234 = vadd.f32 0.0, %v3233
    %v3235 = vpop.f32.mrb[0].mxu0
    %3236 = vmatprep.mubr.f32.mxu0 0.0
    %3237 = vmatmul.mubr.f32.gmra.mrb[0].mxu0 %v3107
    %v3238 = vpop.f32.mrb[0].mxu0
    %v3239 = vadd.f32 0.0, %v3238
    %v3240 = vpop.f32.mrb[0].mxu0
    %3241 = vmatprep.mubr.f32.mxu0 0.0
    %3242 = vmatmul.mubr.f32.gmra.mrb[0].mxu0 %v3110
    %v3243 = vpop.f32.mrb[0].mxu0
    %v3244 = vadd.f32 0.0, %v3243
    %v3245 = vpop.f32.mrb[0].mxu0
    %3246 = vmatprep.mubr.f32.mxu0 0.0
    %3247 = vmatmul.mubr.f32.gmra.mrb[0].mxu0 %v3113
    %v3248 = vpop.f32.mrb[0].mxu0
    %v3249 = vadd.f32 0.0, %v3248
    %v3250 = vpop.f32.mrb[0].mxu0
    %3251 = vmatprep.mubr.f32.mxu0 0.0
    %3252 = vmatmul.mubr.f32.gmra.mrb[0].mxu0 %v3116
    %v3253 = vpop.f32.mrb[0].mxu0
    %v3254 = vadd.f32 0.0, %v3253
    %v3255 = vpop.f32.mrb[0].mxu0
    %3256 = vmatprep.mubr.f32.mxu0 0.0
    %3257 = vmatmul.mubr.f32.gmra.mrb[0].mxu0 %v3119
    %v3258 = vpop.f32.mrb[0].mxu0
    %v3259 = vadd.f32 0.0, %v3258
    %v3260 = vpop.f32.mrb[0].mxu0
    %3261 = vmatprep.mubr.f32.mxu0 0.0
    %3262 = vmatmul.mubr.f32.gmra.mrb[0].mxu0 %v3122
    %v3263 = vpop.f32.mrb[0].mxu0
    %v3264 = vadd.f32 0.0, %v3263
    %v3265 = vpop.f32.mrb[0].mxu0
    %3266 = vmatprep.mubr.f32.mxu0 0.0
    %3267 = vmatmul.mubr.f32.gmra.mrb[0].mxu0 %v3125
    %v3268 = vpop.f32.mrb[0].mxu0
    %v3269 = vadd.f32 0.0, %v3268
    %v3270 = vpop.f32.mrb[0].mxu0
    %3271 = vdwg.mxu0
    %v3272 = vmax.f32 %v3194, 0.0
    %v3273 = vmax.f32 %v3199, 0.0
    %v3274 = vmax.f32 %v3204, 0.0
    %v3275 = vmax.f32 %v3209, 0.0
    %v3276 = vmax.f32 %v3214, 0.0
    %v3277 = vmax.f32 %v3219, 0.0
    %v3278 = vmax.f32 %v3224, 0.0
    %v3279 = vmax.f32 %v3229, 0.0
    %v3280 = vmax.f32 %v3234, 0.0
    %v3281 = vmax.f32 %v3239, 0.0
    %v3282 = vmax.f32 %v3244, 0.0
    %v3283 = vmax.f32 %v3249, 0.0
    %v3284 = vmax.f32 %v3254, 0.0
    %v3285 = vmax.f32 %v3259, 0.0
    %v3286 = vmax.f32 %v3264, 0.0
    %v3287 = vmax.f32 %v3269, 0.0
    %v3288 = vadd.f32 %v3272, %v3273
    %v3289 = vadd.f32 %v3288, %v3274
    %v3290 = vadd.f32 %v3289, %v3275
    %v3291 = vadd.f32 %v3290, %v3276
    %v3292 = vadd.f32 %v3291, %v3277
    %v3293 = vadd.f32 %v3292, %v3278
    %v3294 = vadd.f32 %v3293, %v3279
    %v3295 = vadd.f32 %v3294, %v3280
    %v3296 = vadd.f32 %v3295, %v3281
    %v3297 = vadd.f32 %v3296, %v3282
    %v3298 = vadd.f32 %v3297, %v3283
    %v3299 = vadd.f32 %v3298, %v3284
    %v3300 = vadd.f32 %v3299, %v3285
    %v3301 = vadd.f32 %v3300, %v3286
    %v3302 = vadd.f32 %v3301, %v3287
    %v3303 = vrot.slane %v3302, 4
    %v3304 = vadd.f32 %v3302, %v3303
    %v3305 = vrot.slane %v3304, 2
    %v3306 = vadd.f32 %v3304, %v3305
    %v3307 = vrot.slane %v3306, 1
    %v3308 = vadd.f32 %v3306, %v3307
    %v3309 = vadd.f32 %v3308, 1.0
    %v3310 = vpack.c.bf16 %v2952, %v2951
    %v3311 = vpack.c.bf16 %v2954, %v2953
    %v3312 = vpack.c.bf16 %v2956, %v2955
    %v3313 = vpack.c.bf16 %v2958, %v2957
    %v3314 = vpack.c.bf16 %v2960, %v2959
    %v3315 = vpack.c.bf16 %v2962, %v2961
    %v3316 = vpack.c.bf16 %v2964, %v2963
    %v3317 = vpack.c.bf16 %v2966, %v2965
    %v3319 = vsel %vm125, %v3310, 0
    %v3322 = vsel %vm125, %v3311, 0
    %v3325 = vsel %vm125, %v3312, 0
    %v3328 = vsel %vm125, %v3313, 0
    %v3331 = vsel %vm125, %v3314, 0
    %v3334 = vsel %vm125, %v3315, 0
    %v3337 = vsel %vm125, %v3316, 0
    %v3340 = vsel %vm125, %v3317, 0
    %3342 = vmatprep.subr.bf16.mxu0 0
    %3343 = vmatpush1.bf16.msra.mxu0 %v109
    %3344 = vmatprep.subr.bf16.mxu0 0
    %3345 = vmatpush1.bf16.msra.mxu0 %v110
    %3346 = vmatprep.subr.bf16.mxu0 0
    %3347 = vmatpush1.bf16.msra.mxu0 0
    %3348 = vmatprep.subr.bf16.mxu0 0
    %3349 = vmatpush1.bf16.msra.mxu0 0
    %3350 = vmatprep.subr.bf16.mxu0 0
    %3351 = vmatpush1.bf16.msra.mxu0 0
    %3352 = vmatprep.subr.bf16.mxu0 0
    %3353 = vmatpush1.bf16.msra.mxu0 0
    %3354 = vmatprep.subr.bf16.mxu0 0
    %3355 = vmatpush1.bf16.msra.mxu0 0
    %3356 = vmatprep.subr.bf16.mxu0 0
    %3357 = vmatpush1.bf16.msra.mxu0 0
    %3358 = vmatprep.subr.bf16.mxu0 0
    %3359 = vmatpush1.bf16.msra.mxu0 0
    %3360 = vmatprep.subr.bf16.mxu0 0
    %3361 = vmatpush1.bf16.msra.mxu0 0
    %3362 = vmatprep.subr.bf16.mxu0 0
    %3363 = vmatpush1.bf16.msra.mxu0 0
    %3364 = vmatprep.subr.bf16.mxu0 0
    %3365 = vmatpush1.bf16.msra.mxu0 0
    %3366 = vmatprep.subr.bf16.mxu0 0
    %3367 = vmatpush1.bf16.msra.mxu0 0
    %3368 = vmatprep.subr.bf16.mxu0 0
    %3369 = vmatpush1.bf16.msra.mxu0 0
    %3370 = vmatprep.subr.bf16.mxu0 0
    %3371 = vmatpush1.bf16.msra.mxu0 0
    %3372 = vmatprep.subr.bf16.mxu0 0
    %3373 = vmatpush1.bf16.msra.mxu0 0
    %3374 = vmatprep.mubr.bf16.mxu0 0
    %3375 = vmatmul.mubr.bf16.gmra.mrb[0].mxu0 %v3319
    %v3376 = vpop.f32.mrb[0].mxu0
    %v3377 = vadd.f32 0.0, %v3376
    %v3378 = vpop.f32.mrb[0].mxu0
    %v3379 = vpop.f32.mrb[0].mxu0
    %v3380 = vadd.f32 0.0, %v3379
    %v3381 = vpop.f32.mrb[0].mxu0
    %3382 = vmatprep.mubr.bf16.mxu0 0
    %3383 = vmatmul.mubr.bf16.gmra.mrb[0].mxu0 %v3322
    %v3384 = vpop.f32.mrb[0].mxu0
    %v3385 = vadd.f32 0.0, %v3384
    %v3386 = vpop.f32.mrb[0].mxu0
    %v3387 = vpop.f32.mrb[0].mxu0
    %v3388 = vadd.f32 0.0, %v3387
    %v3389 = vpop.f32.mrb[0].mxu0
    %3390 = vmatprep.mubr.bf16.mxu0 0
    %3391 = vmatmul.mubr.bf16.gmra.mrb[0].mxu0 %v3325
    %v3392 = vpop.f32.mrb[0].mxu0
    %v3393 = vadd.f32 0.0, %v3392
    %v3394 = vpop.f32.mrb[0].mxu0
    %v3395 = vpop.f32.mrb[0].mxu0
    %v3396 = vadd.f32 0.0, %v3395
    %v3397 = vpop.f32.mrb[0].mxu0
    %3398 = vmatprep.mubr.bf16.mxu0 0
    %3399 = vmatmul.mubr.bf16.gmra.mrb[0].mxu0 %v3328
    %v3400 = vpop.f32.mrb[0].mxu0
    %v3401 = vadd.f32 0.0, %v3400
    %v3402 = vpop.f32.mrb[0].mxu0
    %v3403 = vpop.f32.mrb[0].mxu0
    %v3404 = vadd.f32 0.0, %v3403
    %v3405 = vpop.f32.mrb[0].mxu0
    %3406 = vmatprep.mubr.bf16.mxu0 0
    %3407 = vmatmul.mubr.bf16.gmra.mrb[0].mxu0 %v3331
    %v3408 = vpop.f32.mrb[0].mxu0
    %v3409 = vadd.f32 0.0, %v3408
    %v3410 = vpop.f32.mrb[0].mxu0
    %v3411 = vpop.f32.mrb[0].mxu0
    %v3412 = vadd.f32 0.0, %v3411
    %v3413 = vpop.f32.mrb[0].mxu0
    %3414 = vmatprep.mubr.bf16.mxu0 0
    %3415 = vmatmul.mubr.bf16.gmra.mrb[0].mxu0 %v3334
    %v3416 = vpop.f32.mrb[0].mxu0
    %v3417 = vadd.f32 0.0, %v3416
    %v3418 = vpop.f32.mrb[0].mxu0
    %v3419 = vpop.f32.mrb[0].mxu0
    %v3420 = vadd.f32 0.0, %v3419
    %v3421 = vpop.f32.mrb[0].mxu0
    %3422 = vmatprep.mubr.bf16.mxu0 0
    %3423 = vmatmul.mubr.bf16.gmra.mrb[0].mxu0 %v3337
    %v3424 = vpop.f32.mrb[0].mxu0
    %v3425 = vadd.f32 0.0, %v3424
    %v3426 = vpop.f32.mrb[0].mxu0
    %v3427 = vpop.f32.mrb[0].mxu0
    %v3428 = vadd.f32 0.0, %v3427
    %v3429 = vpop.f32.mrb[0].mxu0
    %3430 = vmatprep.mubr.bf16.mxu0 0
    %3431 = vmatmul.mubr.bf16.gmra.mrb[0].mxu0 %v3340
    %v3432 = vpop.f32.mrb[0].mxu0
    %v3433 = vadd.f32 0.0, %v3432
    %v3434 = vpop.f32.mrb[0].mxu0
    %v3435 = vpop.f32.mrb[0].mxu0
    %v3436 = vadd.f32 0.0, %v3435
    %v3437 = vpop.f32.mrb[0].mxu0
    %3438 = vdwg.mxu0
    %v3439 = vpack.c.bf16 %v3064, %v3063
    %v3440 = vpack.c.bf16 %v3066, %v3065
    %v3441 = vpack.c.bf16 %v3068, %v3067
    %v3442 = vpack.c.bf16 %v3070, %v3069
    %v3443 = vpack.c.bf16 %v3072, %v3071
    %v3444 = vpack.c.bf16 %v3074, %v3073
    %v3445 = vpack.c.bf16 %v3076, %v3075
    %v3446 = vpack.c.bf16 %v3078, %v3077
    %v3455 = vunpack.c.l.b16 %v3439
    %v3456 = vunpack.c.h.b16 %v3439
    %v3457 = vunpack.c.l.b16 %v3440
    %v3458 = vunpack.c.h.b16 %v3440
    %v3459 = vunpack.c.l.b16 %v3441
    %v3460 = vunpack.c.h.b16 %v3441
    %v3461 = vunpack.c.l.b16 %v3442
    %v3462 = vunpack.c.h.b16 %v3442
    %v3463 = vunpack.c.l.b16 %v3443
    %v3464 = vunpack.c.h.b16 %v3443
    %v3465 = vunpack.c.l.b16 %v3444
    %v3466 = vunpack.c.h.b16 %v3444
    %v3467 = vunpack.c.l.b16 %v3445
    %v3468 = vunpack.c.h.b16 %v3445
    %v3469 = vunpack.c.l.b16 %v3446
    %v3470 = vunpack.c.h.b16 %v3446
    %v3471 = vpack.c.b16 %v3455, %v3455
    %v3472 = vpack.c.b16 %v3456, %v3456
    %v3473 = vpack.c.b16 %v3457, %v3457
    %v3474 = vpack.c.b16 %v3458, %v3458
    %v3475 = vpack.c.b16 %v3459, %v3459
    %v3476 = vpack.c.b16 %v3460, %v3460
    %v3477 = vpack.c.b16 %v3461, %v3461
    %v3478 = vpack.c.b16 %v3462, %v3462
    %v3479 = vpack.c.b16 %v3463, %v3463
    %v3480 = vpack.c.b16 %v3464, %v3464
    %v3481 = vpack.c.b16 %v3465, %v3465
    %v3482 = vpack.c.b16 %v3466, %v3466
    %v3483 = vpack.c.b16 %v3467, %v3467
    %v3484 = vpack.c.b16 %v3468, %v3468
    %v3485 = vpack.c.b16 %v3469, %v3469
    %v3486 = vpack.c.b16 %v3470, %v3470
    %s3503 = scalar_lea.vmem [#allocation11], 128
    %3504 = vst.msk [vmem:[%s3503] sm:$0xf] %vm166, %v3471
    %3505 = vst.msk [vmem:[%s3503 + $0x4] sm:$0xf] %vm166, %v3472
    %3506 = vst.msk [vmem:[%s3503 + $0x8] sm:$0xf] %vm166, %v3473
    %3507 = vst.msk [vmem:[%s3503 + $0xc] sm:$0xf] %vm166, %v3474
    %3508 = vst.msk [vmem:[%s3503 + $0x10] sm:$0xf] %vm166, %v3475
    %3509 = vst.msk [vmem:[%s3503 + $0x14] sm:$0xf] %vm166, %v3476
    %3510 = vst.msk [vmem:[%s3503 + $0x18] sm:$0xf] %vm166, %v3477
    %3511 = vst.msk [vmem:[%s3503 + $0x1c] sm:$0xf] %vm166, %v3478
    %3512 = vst.msk [vmem:[%s3503 + $0x20] sm:$0xf] %vm166, %v3479
    %3513 = vst.msk [vmem:[%s3503 + $0x24] sm:$0xf] %vm166, %v3480
    %3514 = vst.msk [vmem:[%s3503 + $0x28] sm:$0xf] %vm166, %v3481
    %3515 = vst.msk [vmem:[%s3503 + $0x2c] sm:$0xf] %vm166, %v3482
    %3516 = vst.msk [vmem:[%s3503 + $0x30] sm:$0xf] %vm166, %v3483
    %3517 = vst.msk [vmem:[%s3503 + $0x34] sm:$0xf] %vm166, %v3484
    %3518 = vst.msk [vmem:[%s3503 + $0x38] sm:$0xf] %vm166, %v3485
    %3519 = vst.msk [vmem:[%s3503 + $0x3c] sm:$0xf] %vm166, %v3486
    %v3520 = vpack.c.bf16 %v3380, %v3377
    %v3521 = vpack.c.bf16 %v3388, %v3385
    %v3522 = vpack.c.bf16 %v3396, %v3393
    %v3523 = vpack.c.bf16 %v3404, %v3401
    %v3524 = vpack.c.bf16 %v3412, %v3409
    %v3525 = vpack.c.bf16 %v3420, %v3417
    %v3526 = vpack.c.bf16 %v3428, %v3425
    %v3527 = vpack.c.bf16 %v3436, %v3433
    %v3536 = vunpack.c.l.b16 %v3520
    %v3537 = vunpack.c.h.b16 %v3520
    %v3538 = vunpack.c.l.b16 %v3521
    %v3539 = vunpack.c.h.b16 %v3521
    %v3540 = vunpack.c.l.b16 %v3522
    %v3541 = vunpack.c.h.b16 %v3522
    %v3542 = vunpack.c.l.b16 %v3523
    %v3543 = vunpack.c.h.b16 %v3523
    %v3544 = vunpack.c.l.b16 %v3524
    %v3545 = vunpack.c.h.b16 %v3524
    %v3546 = vunpack.c.l.b16 %v3525
    %v3547 = vunpack.c.h.b16 %v3525
    %v3548 = vunpack.c.l.b16 %v3526
    %v3549 = vunpack.c.h.b16 %v3526
    %v3550 = vunpack.c.l.b16 %v3527
    %v3551 = vunpack.c.h.b16 %v3527
    %v3552 = vpack.c.b16 %v3536, %v3536
    %v3553 = vpack.c.b16 %v3537, %v3537
    %v3554 = vpack.c.b16 %v3538, %v3538
    %v3555 = vpack.c.b16 %v3539, %v3539
    %v3556 = vpack.c.b16 %v3540, %v3540
    %v3557 = vpack.c.b16 %v3541, %v3541
    %v3558 = vpack.c.b16 %v3542, %v3542
    %v3559 = vpack.c.b16 %v3543, %v3543
    %v3560 = vpack.c.b16 %v3544, %v3544
    %v3561 = vpack.c.b16 %v3545, %v3545
    %v3562 = vpack.c.b16 %v3546, %v3546
    %v3563 = vpack.c.b16 %v3547, %v3547
    %v3564 = vpack.c.b16 %v3548, %v3548
    %v3565 = vpack.c.b16 %v3549, %v3549
    %v3566 = vpack.c.b16 %v3550, %v3550
    %v3567 = vpack.c.b16 %v3551, %v3551
    %s3584 = scalar_lea.vmem [#allocation14], 128
    %3585 = vst.msk [vmem:[%s3584] sm:$0xf] %vm166, %v3552
    %3586 = vst.msk [vmem:[%s3584 + $0x4] sm:$0xf] %vm166, %v3553
    %3587 = vst.msk [vmem:[%s3584 + $0x8] sm:$0xf] %vm166, %v3554
    %3588 = vst.msk [vmem:[%s3584 + $0xc] sm:$0xf] %vm166, %v3555
    %3589 = vst.msk [vmem:[%s3584 + $0x10] sm:$0xf] %vm166, %v3556
    %3590 = vst.msk [vmem:[%s3584 + $0x14] sm:$0xf] %vm166, %v3557
    %3591 = vst.msk [vmem:[%s3584 + $0x18] sm:$0xf] %vm166, %v3558
    %3592 = vst.msk [vmem:[%s3584 + $0x1c] sm:$0xf] %vm166, %v3559
    %3593 = vst.msk [vmem:[%s3584 + $0x20] sm:$0xf] %vm166, %v3560
    %3594 = vst.msk [vmem:[%s3584 + $0x24] sm:$0xf] %vm166, %v3561
    %3595 = vst.msk [vmem:[%s3584 + $0x28] sm:$0xf] %vm166, %v3562
    %3596 = vst.msk [vmem:[%s3584 + $0x2c] sm:$0xf] %vm166, %v3563
    %3597 = vst.msk [vmem:[%s3584 + $0x30] sm:$0xf] %vm166, %v3564
    %3598 = vst.msk [vmem:[%s3584 + $0x34] sm:$0xf] %vm166, %v3565
    %3599 = vst.msk [vmem:[%s3584 + $0x38] sm:$0xf] %vm166, %v3566
    %3600 = vst.msk [vmem:[%s3584 + $0x3c] sm:$0xf] %vm166, %v3567
    %s3601 = scalar_lea.vmem [#allocation17], 2
    %3602 = vst [vmem:[%s3601] sm:$0x1] %v3309
    %s3603 = scalar_lea.vmem [#allocation5], 256
    %v3604 = vld [vmem:[%s3603] sm:$0xff]
    %v3605 = vld [vmem:[%s3603 + $0x8] sm:$0xff]
    %v3606 = vld [vmem:[%s3603 + $0x10] sm:$0xff]
    %v3607 = vld [vmem:[%s3603 + $0x18] sm:$0xff]
    %v3608 = vld [vmem:[%s3603 + $0x20] sm:$0xff]
    %v3609 = vld [vmem:[%s3603 + $0x28] sm:$0xff]
    %v3610 = vld [vmem:[%s3603 + $0x30] sm:$0xff]
    %v3611 = vld [vmem:[%s3603 + $0x38] sm:$0xff]
    %v3612 = vld [vmem:[%s3603 + $0x40] sm:$0xff]
    %v3613 = vld [vmem:[%s3603 + $0x48] sm:$0xff]
    %v3614 = vld [vmem:[%s3603 + $0x50] sm:$0xff]
    %v3615 = vld [vmem:[%s3603 + $0x58] sm:$0xff]
    %v3616 = vld [vmem:[%s3603 + $0x60] sm:$0xff]
    %v3617 = vld [vmem:[%s3603 + $0x68] sm:$0xff]
    %v3618 = vld [vmem:[%s3603 + $0x70] sm:$0xff]
    %v3619 = vld [vmem:[%s3603 + $0x78] sm:$0xff]
    %v3620 = vmul.f32 %v3604, %v3604
    %v3621 = vmul.f32 %v3605, %v3605
    %v3622 = vmul.f32 %v3606, %v3606
    %v3623 = vmul.f32 %v3607, %v3607
    %v3624 = vmul.f32 %v3608, %v3608
    %v3625 = vmul.f32 %v3609, %v3609
    %v3626 = vmul.f32 %v3610, %v3610
    %v3627 = vmul.f32 %v3611, %v3611
    %v3628 = vmul.f32 %v3612, %v3612
    %v3629 = vmul.f32 %v3613, %v3613
    %v3630 = vmul.f32 %v3614, %v3614
    %v3631 = vmul.f32 %v3615, %v3615
    %v3632 = vmul.f32 %v3616, %v3616
    %v3633 = vmul.f32 %v3617, %v3617
    %v3634 = vmul.f32 %v3618, %v3618
    %v3635 = vmul.f32 %v3619, %v3619
    %v3636 = vsel %vm125, %v3620, 0.0
    %3637 = vadd.xlane.f32.xlu0 %v3636
    %v3638 = vpop.xlane.xlu0 %3637
    %v3639 = vsel %vm125, %v3621, 0.0
    %3640 = vadd.xlane.f32.xlu0 %v3639
    %v3641 = vpop.xlane.xlu0 %3640
    %v3642 = vsel %vm125, %v3622, 0.0
    %3643 = vadd.xlane.f32.xlu0 %v3642
    %v3644 = vpop.xlane.xlu0 %3643
    %v3645 = vsel %vm125, %v3623, 0.0
    %3646 = vadd.xlane.f32.xlu0 %v3645
    %v3647 = vpop.xlane.xlu0 %3646
    %v3648 = vsel %vm125, %v3624, 0.0
    %3649 = vadd.xlane.f32.xlu0 %v3648
    %v3650 = vpop.xlane.xlu0 %3649
    %v3651 = vsel %vm125, %v3625, 0.0
    %3652 = vadd.xlane.f32.xlu0 %v3651
    %v3653 = vpop.xlane.xlu0 %3652
    %v3654 = vsel %vm125, %v3626, 0.0
    %3655 = vadd.xlane.f32.xlu0 %v3654
    %v3656 = vpop.xlane.xlu0 %3655
    %v3657 = vsel %vm125, %v3627, 0.0
    %3658 = vadd.xlane.f32.xlu0 %v3657
    %v3659 = vpop.xlane.xlu0 %3658
    %v3660 = vsel %vm125, %v3628, 0.0
    %3661 = vadd.xlane.f32.xlu0 %v3660
    %v3662 = vpop.xlane.xlu0 %3661
    %v3663 = vsel %vm125, %v3629, 0.0
    %3664 = vadd.xlane.f32.xlu0 %v3663
    %v3665 = vpop.xlane.xlu0 %3664
    %v3666 = vsel %vm125, %v3630, 0.0
    %3667 = vadd.xlane.f32.xlu0 %v3666
    %v3668 = vpop.xlane.xlu0 %3667
    %v3669 = vsel %vm125, %v3631, 0.0
    %3670 = vadd.xlane.f32.xlu0 %v3669
    %v3671 = vpop.xlane.xlu0 %3670
    %v3672 = vsel %vm125, %v3632, 0.0
    %3673 = vadd.xlane.f32.xlu0 %v3672
    %v3674 = vpop.xlane.xlu0 %3673
    %v3675 = vsel %vm125, %v3633, 0.0
    %3676 = vadd.xlane.f32.xlu0 %v3675
    %v3677 = vpop.xlane.xlu0 %3676
    %v3678 = vsel %vm125, %v3634, 0.0
    %3679 = vadd.xlane.f32.xlu0 %v3678
    %v3680 = vpop.xlane.xlu0 %3679
    %v3681 = vsel %vm125, %v3635, 0.0
    %3682 = vadd.xlane.f32.xlu0 %v3681
    %v3683 = vpop.xlane.xlu0 %3682
    %v3684 = vmax.f32 %v3638, 1e-24
    %v3685 = vmax.f32 %v3641, 1e-24
    %v3686 = vmax.f32 %v3644, 1e-24
    %v3687 = vmax.f32 %v3647, 1e-24
    %v3688 = vmax.f32 %v3650, 1e-24
    %v3689 = vmax.f32 %v3653, 1e-24
    %v3690 = vmax.f32 %v3656, 1e-24
    %v3691 = vmax.f32 %v3659, 1e-24
    %v3692 = vmax.f32 %v3662, 1e-24
    %v3693 = vmax.f32 %v3665, 1e-24
    %v3694 = vmax.f32 %v3668, 1e-24
    %v3695 = vmax.f32 %v3671, 1e-24
    %v3696 = vmax.f32 %v3674, 1e-24
    %v3697 = vmax.f32 %v3677, 1e-24
    %v3698 = vmax.f32 %v3680, 1e-24
    %v3699 = vmax.f32 %v3683, 1e-24
    %v3700 = vrsqrt.pop %v3684
    %v3701 = vrsqrt.pop %v3685
    %v3702 = vrsqrt.pop %v3686
    %v3703 = vrsqrt.pop %v3687
    %v3704 = vrsqrt.pop %v3688
    %v3705 = vrsqrt.pop %v3689
    %v3706 = vrsqrt.pop %v3690
    %v3707 = vrsqrt.pop %v3691
    %v3708 = vrsqrt.pop %v3692
    %v3709 = vrsqrt.pop %v3693
    %v3710 = vrsqrt.pop %v3694
    %v3711 = vrsqrt.pop %v3695
    %v3712 = vrsqrt.pop %v3696
    %v3713 = vrsqrt.pop %v3697
    %v3714 = vrsqrt.pop %v3698
    %v3715 = vrsqrt.pop %v3699
    %v3716 = vmul.f32 %v3604, %v3700
    %v3717 = vmul.f32 %v3605, %v3701
    %v3718 = vmul.f32 %v3606, %v3702
    %v3719 = vmul.f32 %v3607, %v3703
    %v3720 = vmul.f32 %v3608, %v3704
    %v3721 = vmul.f32 %v3609, %v3705
    %v3722 = vmul.f32 %v3610, %v3706
    %v3723 = vmul.f32 %v3611, %v3707
    %v3724 = vmul.f32 %v3612, %v3708
    %v3725 = vmul.f32 %v3613, %v3709
    %v3726 = vmul.f32 %v3614, %v3710
    %v3727 = vmul.f32 %v3615, %v3711
    %v3728 = vmul.f32 %v3616, %v3712
    %v3729 = vmul.f32 %v3617, %v3713
    %v3730 = vmul.f32 %v3618, %v3714
    %v3731 = vmul.f32 %v3619, %v3715
    %v3733 = vsel %vm125, %v3716, 0
    %v3736 = vsel %vm125, %v3717, 0
    %v3739 = vsel %vm125, %v3718, 0
    %v3742 = vsel %vm125, %v3719, 0
    %v3745 = vsel %vm125, %v3720, 0
    %v3748 = vsel %vm125, %v3721, 0
    %v3751 = vsel %vm125, %v3722, 0
    %v3754 = vsel %vm125, %v3723, 0
    %v3757 = vsel %vm125, %v3724, 0
    %v3760 = vsel %vm125, %v3725, 0
    %v3763 = vsel %vm125, %v3726, 0
    %v3766 = vsel %vm125, %v3727, 0
    %v3769 = vsel %vm125, %v3728, 0
    %v3772 = vsel %vm125, %v3729, 0
    %v3775 = vsel %vm125, %v3730, 0
    %v3778 = vsel %vm125, %v3731, 0
    %3780 = vmatprep.subr.mxu0 0.0
    %3781 = vmatpush1.xpose.msra.mxu0 %v3733
    %3782 = vmatprep.subr.mxu0 0.0
    %3783 = vmatpush1.xpose.msra.mxu0 %v3736
    %3784 = vmatprep.subr.mxu0 0.0
    %3785 = vmatpush1.xpose.msra.mxu0 %v3739
    %3786 = vmatprep.subr.mxu0 0.0
    %3787 = vmatpush1.xpose.msra.mxu0 %v3742
    %3788 = vmatprep.subr.mxu0 0.0
    %3789 = vmatpush1.xpose.msra.mxu0 %v3745
    %3790 = vmatprep.subr.mxu0 0.0
    %3791 = vmatpush1.xpose.msra.mxu0 %v3748
    %3792 = vmatprep.subr.mxu0 0.0
    %3793 = vmatpush1.xpose.msra.mxu0 %v3751
    %3794 = vmatprep.subr.mxu0 0.0
    %3795 = vmatpush1.xpose.msra.mxu0 %v3754
    %3796 = vmatprep.subr.mxu0 0.0
    %3797 = vmatpush1.xpose.msra.mxu0 %v3757
    %3798 = vmatprep.subr.mxu0 0.0
    %3799 = vmatpush1.xpose.msra.mxu0 %v3760
    %3800 = vmatprep.subr.mxu0 0.0
    %3801 = vmatpush1.xpose.msra.mxu0 %v3763
    %3802 = vmatprep.subr.mxu0 0.0
    %3803 = vmatpush1.xpose.msra.mxu0 %v3766
    %3804 = vmatprep.subr.mxu0 0.0
    %3805 = vmatpush1.xpose.msra.mxu0 %v3769
    %3806 = vmatprep.subr.mxu0 0.0
    %3807 = vmatpush1.xpose.msra.mxu0 %v3772
    %3808 = vmatprep.subr.mxu0 0.0
    %3809 = vmatpush1.xpose.msra.mxu0 %v3775
    %3810 = vmatprep.subr.mxu0 0.0
    %3811 = vmatpush1.xpose.msra.mxu0 %v3778
    %3812 = vmatprep.subr.mxu0 0.0
    %3813 = vmatpush1.xpose.msra.mxu0 0.0
    %3814 = vmatprep.subr.mxu0 0.0
    %3815 = vmatpush1.xpose.msra.mxu0 0.0
    %3816 = vmatprep.subr.mxu0 0.0
    %3817 = vmatpush1.xpose.msra.mxu0 0.0
    %3818 = vmatprep.subr.mxu0 0.0
    %3819 = vmatpush1.xpose.msra.mxu0 0.0
    %3820 = vmatprep.subr.mxu0 0.0
    %3821 = vmatpush1.xpose.msra.mxu0 0.0
    %3822 = vmatprep.subr.mxu0 0.0
    %3823 = vmatpush1.xpose.msra.mxu0 0.0
    %3824 = vmatprep.subr.mxu0 0.0
    %3825 = vmatpush1.xpose.msra.mxu0 0.0
    %3826 = vmatprep.subr.mxu0 0.0
    %3827 = vmatpush1.xpose.msra.mxu0 0.0
    %3828 = vmatprep.subr.mxu0 0.0
    %3829 = vmatpush1.xpose.msra.mxu0 0.0
    %3830 = vmatprep.subr.mxu0 0.0
    %3831 = vmatpush1.xpose.msra.mxu0 0.0
    %3832 = vmatprep.subr.mxu0 0.0
    %3833 = vmatpush1.xpose.msra.mxu0 0.0
    %3834 = vmatprep.subr.mxu0 0.0
    %3835 = vmatpush1.xpose.msra.mxu0 0.0
    %3836 = vmatprep.subr.mxu0 0.0
    %3837 = vmatpush1.xpose.msra.mxu0 0.0
    %3838 = vmatprep.subr.mxu0 0.0
    %3839 = vmatpush1.xpose.msra.mxu0 0.0
    %3840 = vmatprep.subr.mxu0 0.0
    %3841 = vmatpush1.xpose.msra.mxu0 0.0
    %3842 = vmatprep.subr.mxu0 0.0
    %3843 = vmatpush1.xpose.msra.mxu0 0.0
    %3844 = vmatprep.mubr.f32.mxu0 0.0
    %3845 = vmatmul.mubr.f32.gmra.mrb[0].mxu0 %v3733
    %v3846 = vpop.f32.mrb[0].mxu0
    %v3847 = vadd.f32 0.0, %v3846
    %v3848 = vpop.f32.mrb[0].mxu0
    %3849 = vmatprep.mubr.f32.mxu0 0.0
    %3850 = vmatmul.mubr.f32.gmra.mrb[0].mxu0 %v3736
    %v3851 = vpop.f32.mrb[0].mxu0
    %v3852 = vadd.f32 0.0, %v3851
    %v3853 = vpop.f32.mrb[0].mxu0
    %3854 = vmatprep.mubr.f32.mxu0 0.0
    %3855 = vmatmul.mubr.f32.gmra.mrb[0].mxu0 %v3739
    %v3856 = vpop.f32.mrb[0].mxu0
    %v3857 = vadd.f32 0.0, %v3856
    %v3858 = vpop.f32.mrb[0].mxu0
    %3859 = vmatprep.mubr.f32.mxu0 0.0
    %3860 = vmatmul.mubr.f32.gmra.mrb[0].mxu0 %v3742
    %v3861 = vpop.f32.mrb[0].mxu0
    %v3862 = vadd.f32 0.0, %v3861
    %v3863 = vpop.f32.mrb[0].mxu0
    %3864 = vmatprep.mubr.f32.mxu0 0.0
    %3865 = vmatmul.mubr.f32.gmra.mrb[0].mxu0 %v3745
    %v3866 = vpop.f32.mrb[0].mxu0
    %v3867 = vadd.f32 0.0, %v3866
    %v3868 = vpop.f32.mrb[0].mxu0
    %3869 = vmatprep.mubr.f32.mxu0 0.0
    %3870 = vmatmul.mubr.f32.gmra.mrb[0].mxu0 %v3748
    %v3871 = vpop.f32.mrb[0].mxu0
    %v3872 = vadd.f32 0.0, %v3871
    %v3873 = vpop.f32.mrb[0].mxu0
    %3874 = vmatprep.mubr.f32.mxu0 0.0
    %3875 = vmatmul.mubr.f32.gmra.mrb[0].mxu0 %v3751
    %v3876 = vpop.f32.mrb[0].mxu0
    %v3877 = vadd.f32 0.0, %v3876
    %v3878 = vpop.f32.mrb[0].mxu0
    %3879 = vmatprep.mubr.f32.mxu0 0.0
    %3880 = vmatmul.mubr.f32.gmra.mrb[0].mxu0 %v3754
    %v3881 = vpop.f32.mrb[0].mxu0
    %v3882 = vadd.f32 0.0, %v3881
    %v3883 = vpop.f32.mrb[0].mxu0
    %3884 = vmatprep.mubr.f32.mxu0 0.0
    %3885 = vmatmul.mubr.f32.gmra.mrb[0].mxu0 %v3757
    %v3886 = vpop.f32.mrb[0].mxu0
    %v3887 = vadd.f32 0.0, %v3886
    %v3888 = vpop.f32.mrb[0].mxu0
    %3889 = vmatprep.mubr.f32.mxu0 0.0
    %3890 = vmatmul.mubr.f32.gmra.mrb[0].mxu0 %v3760
    %v3891 = vpop.f32.mrb[0].mxu0
    %v3892 = vadd.f32 0.0, %v3891
    %v3893 = vpop.f32.mrb[0].mxu0
    %3894 = vmatprep.mubr.f32.mxu0 0.0
    %3895 = vmatmul.mubr.f32.gmra.mrb[0].mxu0 %v3763
    %v3896 = vpop.f32.mrb[0].mxu0
    %v3897 = vadd.f32 0.0, %v3896
    %v3898 = vpop.f32.mrb[0].mxu0
    %3899 = vmatprep.mubr.f32.mxu0 0.0
    %3900 = vmatmul.mubr.f32.gmra.mrb[0].mxu0 %v3766
    %v3901 = vpop.f32.mrb[0].mxu0
    %v3902 = vadd.f32 0.0, %v3901
    %v3903 = vpop.f32.mrb[0].mxu0
    %3904 = vmatprep.mubr.f32.mxu0 0.0
    %3905 = vmatmul.mubr.f32.gmra.mrb[0].mxu0 %v3769
    %v3906 = vpop.f32.mrb[0].mxu0
    %v3907 = vadd.f32 0.0, %v3906
    %v3908 = vpop.f32.mrb[0].mxu0
    %3909 = vmatprep.mubr.f32.mxu0 0.0
    %3910 = vmatmul.mubr.f32.gmra.mrb[0].mxu0 %v3772
    %v3911 = vpop.f32.mrb[0].mxu0
    %v3912 = vadd.f32 0.0, %v3911
    %v3913 = vpop.f32.mrb[0].mxu0
    %3914 = vmatprep.mubr.f32.mxu0 0.0
    %3915 = vmatmul.mubr.f32.gmra.mrb[0].mxu0 %v3775
    %v3916 = vpop.f32.mrb[0].mxu0
    %v3917 = vadd.f32 0.0, %v3916
    %v3918 = vpop.f32.mrb[0].mxu0
    %3919 = vmatprep.mubr.f32.mxu0 0.0
    %3920 = vmatmul.mubr.f32.gmra.mrb[0].mxu0 %v3778
    %v3921 = vpop.f32.mrb[0].mxu0
    %v3922 = vadd.f32 0.0, %v3921
    %v3923 = vpop.f32.mrb[0].mxu0
    %3924 = vdwg.mxu0
    %v3925 = vmax.f32 %v3847, 0.0
    %v3926 = vmax.f32 %v3852, 0.0
    %v3927 = vmax.f32 %v3857, 0.0
    %v3928 = vmax.f32 %v3862, 0.0
    %v3929 = vmax.f32 %v3867, 0.0
    %v3930 = vmax.f32 %v3872, 0.0
    %v3931 = vmax.f32 %v3877, 0.0
    %v3932 = vmax.f32 %v3882, 0.0
    %v3933 = vmax.f32 %v3887, 0.0
    %v3934 = vmax.f32 %v3892, 0.0
    %v3935 = vmax.f32 %v3897, 0.0
    %v3936 = vmax.f32 %v3902, 0.0
    %v3937 = vmax.f32 %v3907, 0.0
    %v3938 = vmax.f32 %v3912, 0.0
    %v3939 = vmax.f32 %v3917, 0.0
    %v3940 = vmax.f32 %v3922, 0.0
    %v3941 = vadd.f32 %v3925, %v3926
    %v3942 = vadd.f32 %v3941, %v3927
    %v3943 = vadd.f32 %v3942, %v3928
    %v3944 = vadd.f32 %v3943, %v3929
    %v3945 = vadd.f32 %v3944, %v3930
    %v3946 = vadd.f32 %v3945, %v3931
    %v3947 = vadd.f32 %v3946, %v3932
    %v3948 = vadd.f32 %v3947, %v3933
    %v3949 = vadd.f32 %v3948, %v3934
    %v3950 = vadd.f32 %v3949, %v3935
    %v3951 = vadd.f32 %v3950, %v3936
    %v3952 = vadd.f32 %v3951, %v3937
    %v3953 = vadd.f32 %v3952, %v3938
    %v3954 = vadd.f32 %v3953, %v3939
    %v3955 = vadd.f32 %v3954, %v3940
    %v3956 = vrot.slane %v3955, 4
    %v3957 = vadd.f32 %v3955, %v3956
    %v3958 = vrot.slane %v3957, 2
    %v3959 = vadd.f32 %v3957, %v3958
    %v3960 = vrot.slane %v3959, 1
    %v3961 = vadd.f32 %v3959, %v3960
    %v3962 = vadd.f32 %v3961, 1.0
    %v3963 = vpack.c.bf16 %v3605, %v3604
    %v3964 = vpack.c.bf16 %v3607, %v3606
    %v3965 = vpack.c.bf16 %v3609, %v3608
    %v3966 = vpack.c.bf16 %v3611, %v3610
    %v3967 = vpack.c.bf16 %v3613, %v3612
    %v3968 = vpack.c.bf16 %v3615, %v3614
    %v3969 = vpack.c.bf16 %v3617, %v3616
    %v3970 = vpack.c.bf16 %v3619, %v3618
    %v3972 = vsel %vm125, %v3963, 0
    %v3975 = vsel %vm125, %v3964, 0
    %v3978 = vsel %vm125, %v3965, 0
    %v3981 = vsel %vm125, %v3966, 0
    %v3984 = vsel %vm125, %v3967, 0
    %v3987 = vsel %vm125, %v3968, 0
    %v3990 = vsel %vm125, %v3969, 0
    %v3993 = vsel %vm125, %v3970, 0
    %3995 = vmatprep.subr.bf16.mxu0 0
    %3996 = vmatpush1.bf16.msra.mxu0 %v115
    %3997 = vmatprep.subr.bf16.mxu0 0
    %3998 = vmatpush1.bf16.msra.mxu0 %v116
    %3999 = vmatprep.subr.bf16.mxu0 0
    %4000 = vmatpush1.bf16.msra.mxu0 0
    %4001 = vmatprep.subr.bf16.mxu0 0
    %4002 = vmatpush1.bf16.msra.mxu0 0
    %4003 = vmatprep.subr.bf16.mxu0 0
    %4004 = vmatpush1.bf16.msra.mxu0 0
    %4005 = vmatprep.subr.bf16.mxu0 0
    %4006 = vmatpush1.bf16.msra.mxu0 0
    %4007 = vmatprep.subr.bf16.mxu0 0
    %4008 = vmatpush1.bf16.msra.mxu0 0
    %4009 = vmatprep.subr.bf16.mxu0 0
    %4010 = vmatpush1.bf16.msra.mxu0 0
    %4011 = vmatprep.subr.bf16.mxu0 0
    %4012 = vmatpush1.bf16.msra.mxu0 0
    %4013 = vmatprep.subr.bf16.mxu0 0
    %4014 = vmatpush1.bf16.msra.mxu0 0
    %4015 = vmatprep.subr.bf16.mxu0 0
    %4016 = vmatpush1.bf16.msra.mxu0 0
    %4017 = vmatprep.subr.bf16.mxu0 0
    %4018 = vmatpush1.bf16.msra.mxu0 0
    %4019 = vmatprep.subr.bf16.mxu0 0
    %4020 = vmatpush1.bf16.msra.mxu0 0
    %4021 = vmatprep.subr.bf16.mxu0 0
    %4022 = vmatpush1.bf16.msra.mxu0 0
    %4023 = vmatprep.subr.bf16.mxu0 0
    %4024 = vmatpush1.bf16.msra.mxu0 0
    %4025 = vmatprep.subr.bf16.mxu0 0
    %4026 = vmatpush1.bf16.msra.mxu0 0
    %4027 = vmatprep.mubr.bf16.mxu0 0
    %4028 = vmatmul.mubr.bf16.gmra.mrb[0].mxu0 %v3972
    %v4029 = vpop.f32.mrb[0].mxu0
    %v4030 = vadd.f32 0.0, %v4029
    %v4031 = vpop.f32.mrb[0].mxu0
    %v4032 = vpop.f32.mrb[0].mxu0
    %v4033 = vadd.f32 0.0, %v4032
    %v4034 = vpop.f32.mrb[0].mxu0
    %4035 = vmatprep.mubr.bf16.mxu0 0
    %4036 = vmatmul.mubr.bf16.gmra.mrb[0].mxu0 %v3975
    %v4037 = vpop.f32.mrb[0].mxu0
    %v4038 = vadd.f32 0.0, %v4037
    %v4039 = vpop.f32.mrb[0].mxu0
    %v4040 = vpop.f32.mrb[0].mxu0
    %v4041 = vadd.f32 0.0, %v4040
    %v4042 = vpop.f32.mrb[0].mxu0
    %4043 = vmatprep.mubr.bf16.mxu0 0
    %4044 = vmatmul.mubr.bf16.gmra.mrb[0].mxu0 %v3978
    %v4045 = vpop.f32.mrb[0].mxu0
    %v4046 = vadd.f32 0.0, %v4045
    %v4047 = vpop.f32.mrb[0].mxu0
    %v4048 = vpop.f32.mrb[0].mxu0
    %v4049 = vadd.f32 0.0, %v4048
    %v4050 = vpop.f32.mrb[0].mxu0
    %4051 = vmatprep.mubr.bf16.mxu0 0
    %4052 = vmatmul.mubr.bf16.gmra.mrb[0].mxu0 %v3981
    %v4053 = vpop.f32.mrb[0].mxu0
    %v4054 = vadd.f32 0.0, %v4053
    %v4055 = vpop.f32.mrb[0].mxu0
    %v4056 = vpop.f32.mrb[0].mxu0
    %v4057 = vadd.f32 0.0, %v4056
    %v4058 = vpop.f32.mrb[0].mxu0
    %4059 = vmatprep.mubr.bf16.mxu0 0
    %4060 = vmatmul.mubr.bf16.gmra.mrb[0].mxu0 %v3984
    %v4061 = vpop.f32.mrb[0].mxu0
    %v4062 = vadd.f32 0.0, %v4061
    %v4063 = vpop.f32.mrb[0].mxu0
    %v4064 = vpop.f32.mrb[0].mxu0
    %v4065 = vadd.f32 0.0, %v4064
    %v4066 = vpop.f32.mrb[0].mxu0
    %4067 = vmatprep.mubr.bf16.mxu0 0
    %4068 = vmatmul.mubr.bf16.gmra.mrb[0].mxu0 %v3987
    %v4069 = vpop.f32.mrb[0].mxu0
    %v4070 = vadd.f32 0.0, %v4069
    %v4071 = vpop.f32.mrb[0].mxu0
    %v4072 = vpop.f32.mrb[0].mxu0
    %v4073 = vadd.f32 0.0, %v4072
    %v4074 = vpop.f32.mrb[0].mxu0
    %4075 = vmatprep.mubr.bf16.mxu0 0
    %4076 = vmatmul.mubr.bf16.gmra.mrb[0].mxu0 %v3990
    %v4077 = vpop.f32.mrb[0].mxu0
    %v4078 = vadd.f32 0.0, %v4077
    %v4079 = vpop.f32.mrb[0].mxu0
    %v4080 = vpop.f32.mrb[0].mxu0
    %v4081 = vadd.f32 0.0, %v4080
    %v4082 = vpop.f32.mrb[0].mxu0
    %4083 = vmatprep.mubr.bf16.mxu0 0
    %4084 = vmatmul.mubr.bf16.gmra.mrb[0].mxu0 %v3993
    %v4085 = vpop.f32.mrb[0].mxu0
    %v4086 = vadd.f32 0.0, %v4085
    %v4087 = vpop.f32.mrb[0].mxu0
    %v4088 = vpop.f32.mrb[0].mxu0
    %v4089 = vadd.f32 0.0, %v4088
    %v4090 = vpop.f32.mrb[0].mxu0
    %4091 = vdwg.mxu0
    %v4092 = vpack.c.bf16 %v3717, %v3716
    %v4093 = vpack.c.bf16 %v3719, %v3718
    %v4094 = vpack.c.bf16 %v3721, %v3720
    %v4095 = vpack.c.bf16 %v3723, %v3722
    %v4096 = vpack.c.bf16 %v3725, %v3724
    %v4097 = vpack.c.bf16 %v3727, %v3726
    %v4098 = vpack.c.bf16 %v3729, %v3728
    %v4099 = vpack.c.bf16 %v3731, %v3730
    %v4108 = vunpack.c.l.b16 %v4092
    %v4109 = vunpack.c.h.b16 %v4092
    %v4110 = vunpack.c.l.b16 %v4093
    %v4111 = vunpack.c.h.b16 %v4093
    %v4112 = vunpack.c.l.b16 %v4094
    %v4113 = vunpack.c.h.b16 %v4094
    %v4114 = vunpack.c.l.b16 %v4095
    %v4115 = vunpack.c.h.b16 %v4095
    %v4116 = vunpack.c.l.b16 %v4096
    %v4117 = vunpack.c.h.b16 %v4096
    %v4118 = vunpack.c.l.b16 %v4097
    %v4119 = vunpack.c.h.b16 %v4097
    %v4120 = vunpack.c.l.b16 %v4098
    %v4121 = vunpack.c.h.b16 %v4098
    %v4122 = vunpack.c.l.b16 %v4099
    %v4123 = vunpack.c.h.b16 %v4099
    %v4124 = vpack.c.b16 %v4108, %v4108
    %v4125 = vpack.c.b16 %v4109, %v4109
    %v4126 = vpack.c.b16 %v4110, %v4110
    %v4127 = vpack.c.b16 %v4111, %v4111
    %v4128 = vpack.c.b16 %v4112, %v4112
    %v4129 = vpack.c.b16 %v4113, %v4113
    %v4130 = vpack.c.b16 %v4114, %v4114
    %v4131 = vpack.c.b16 %v4115, %v4115
    %v4132 = vpack.c.b16 %v4116, %v4116
    %v4133 = vpack.c.b16 %v4117, %v4117
    %v4134 = vpack.c.b16 %v4118, %v4118
    %v4135 = vpack.c.b16 %v4119, %v4119
    %v4136 = vpack.c.b16 %v4120, %v4120
    %v4137 = vpack.c.b16 %v4121, %v4121
    %v4138 = vpack.c.b16 %v4122, %v4122
    %v4139 = vpack.c.b16 %v4123, %v4123
    %s4156 = scalar_lea.vmem [#allocation12], 128
    %4157 = vst.msk [vmem:[%s4156] sm:$0xf] %vm166, %v4124
    %4158 = vst.msk [vmem:[%s4156 + $0x4] sm:$0xf] %vm166, %v4125
    %4159 = vst.msk [vmem:[%s4156 + $0x8] sm:$0xf] %vm166, %v4126
    %4160 = vst.msk [vmem:[%s4156 + $0xc] sm:$0xf] %vm166, %v4127
    %4161 = vst.msk [vmem:[%s4156 + $0x10] sm:$0xf] %vm166, %v4128
    %4162 = vst.msk [vmem:[%s4156 + $0x14] sm:$0xf] %vm166, %v4129
    %4163 = vst.msk [vmem:[%s4156 + $0x18] sm:$0xf] %vm166, %v4130
    %4164 = vst.msk [vmem:[%s4156 + $0x1c] sm:$0xf] %vm166, %v4131
    %4165 = vst.msk [vmem:[%s4156 + $0x20] sm:$0xf] %vm166, %v4132
    %4166 = vst.msk [vmem:[%s4156 + $0x24] sm:$0xf] %vm166, %v4133
    %4167 = vst.msk [vmem:[%s4156 + $0x28] sm:$0xf] %vm166, %v4134
    %4168 = vst.msk [vmem:[%s4156 + $0x2c] sm:$0xf] %vm166, %v4135
    %4169 = vst.msk [vmem:[%s4156 + $0x30] sm:$0xf] %vm166, %v4136
    %4170 = vst.msk [vmem:[%s4156 + $0x34] sm:$0xf] %vm166, %v4137
    %4171 = vst.msk [vmem:[%s4156 + $0x38] sm:$0xf] %vm166, %v4138
    %4172 = vst.msk [vmem:[%s4156 + $0x3c] sm:$0xf] %vm166, %v4139
    %v4173 = vpack.c.bf16 %v4033, %v4030
    %v4174 = vpack.c.bf16 %v4041, %v4038
    %v4175 = vpack.c.bf16 %v4049, %v4046
    %v4176 = vpack.c.bf16 %v4057, %v4054
    %v4177 = vpack.c.bf16 %v4065, %v4062
    %v4178 = vpack.c.bf16 %v4073, %v4070
    %v4179 = vpack.c.bf16 %v4081, %v4078
    %v4180 = vpack.c.bf16 %v4089, %v4086
    %v4189 = vunpack.c.l.b16 %v4173
    %v4190 = vunpack.c.h.b16 %v4173
    %v4191 = vunpack.c.l.b16 %v4174
    %v4192 = vunpack.c.h.b16 %v4174
    %v4193 = vunpack.c.l.b16 %v4175
    %v4194 = vunpack.c.h.b16 %v4175
    %v4195 = vunpack.c.l.b16 %v4176
    %v4196 = vunpack.c.h.b16 %v4176
    %v4197 = vunpack.c.l.b16 %v4177
    %v4198 = vunpack.c.h.b16 %v4177
    %v4199 = vunpack.c.l.b16 %v4178
    %v4200 = vunpack.c.h.b16 %v4178
    %v4201 = vunpack.c.l.b16 %v4179
    %v4202 = vunpack.c.h.b16 %v4179
    %v4203 = vunpack.c.l.b16 %v4180
    %v4204 = vunpack.c.h.b16 %v4180
    %v4205 = vpack.c.b16 %v4189, %v4189
    %v4206 = vpack.c.b16 %v4190, %v4190
    %v4207 = vpack.c.b16 %v4191, %v4191
    %v4208 = vpack.c.b16 %v4192, %v4192
    %v4209 = vpack.c.b16 %v4193, %v4193
    %v4210 = vpack.c.b16 %v4194, %v4194
    %v4211 = vpack.c.b16 %v4195, %v4195
    %v4212 = vpack.c.b16 %v4196, %v4196
    %v4213 = vpack.c.b16 %v4197, %v4197
    %v4214 = vpack.c.b16 %v4198, %v4198
    %v4215 = vpack.c.b16 %v4199, %v4199
    %v4216 = vpack.c.b16 %v4200, %v4200
    %v4217 = vpack.c.b16 %v4201, %v4201
    %v4218 = vpack.c.b16 %v4202, %v4202
    %v4219 = vpack.c.b16 %v4203, %v4203
    %v4220 = vpack.c.b16 %v4204, %v4204
    %s4237 = scalar_lea.vmem [#allocation15], 128
    %4238 = vst.msk [vmem:[%s4237] sm:$0xf] %vm166, %v4205
    %4239 = vst.msk [vmem:[%s4237 + $0x4] sm:$0xf] %vm166, %v4206
    %4240 = vst.msk [vmem:[%s4237 + $0x8] sm:$0xf] %vm166, %v4207
    %4241 = vst.msk [vmem:[%s4237 + $0xc] sm:$0xf] %vm166, %v4208
    %4242 = vst.msk [vmem:[%s4237 + $0x10] sm:$0xf] %vm166, %v4209
    %4243 = vst.msk [vmem:[%s4237 + $0x14] sm:$0xf] %vm166, %v4210
    %4244 = vst.msk [vmem:[%s4237 + $0x18] sm:$0xf] %vm166, %v4211
    %4245 = vst.msk [vmem:[%s4237 + $0x1c] sm:$0xf] %vm166, %v4212
    %4246 = vst.msk [vmem:[%s4237 + $0x20] sm:$0xf] %vm166, %v4213
    %4247 = vst.msk [vmem:[%s4237 + $0x24] sm:$0xf] %vm166, %v4214
    %4248 = vst.msk [vmem:[%s4237 + $0x28] sm:$0xf] %vm166, %v4215
    %4249 = vst.msk [vmem:[%s4237 + $0x2c] sm:$0xf] %vm166, %v4216
    %4250 = vst.msk [vmem:[%s4237 + $0x30] sm:$0xf] %vm166, %v4217
    %4251 = vst.msk [vmem:[%s4237 + $0x34] sm:$0xf] %vm166, %v4218
    %4252 = vst.msk [vmem:[%s4237 + $0x38] sm:$0xf] %vm166, %v4219
    %4253 = vst.msk [vmem:[%s4237 + $0x3c] sm:$0xf] %vm166, %v4220
    %s4254 = scalar_lea.vmem [#allocation18], 2
    %4255 = vst [vmem:[%s4254] sm:$0x1] %v3962
    %s4256 = scalar_lea.vmem [#allocation2], 384
    %v4257 = vld [vmem:[%s4256] sm:$0xff]
    %v4258 = vld [vmem:[%s4256 + $0x8] sm:$0xff]
    %v4259 = vld [vmem:[%s4256 + $0x10] sm:$0xff]
    %v4260 = vld [vmem:[%s4256 + $0x18] sm:$0xff]
    %v4261 = vld [vmem:[%s4256 + $0x20] sm:$0xff]
    %v4262 = vld [vmem:[%s4256 + $0x28] sm:$0xff]
    %v4263 = vld [vmem:[%s4256 + $0x30] sm:$0xff]
    %v4264 = vld [vmem:[%s4256 + $0x38] sm:$0xff]
    %v4265 = vld [vmem:[%s4256 + $0x40] sm:$0xff]
    %v4266 = vld [vmem:[%s4256 + $0x48] sm:$0xff]
    %v4267 = vld [vmem:[%s4256 + $0x50] sm:$0xff]
    %v4268 = vld [vmem:[%s4256 + $0x58] sm:$0xff]
    %v4269 = vld [vmem:[%s4256 + $0x60] sm:$0xff]
    %v4270 = vld [vmem:[%s4256 + $0x68] sm:$0xff]
    %v4271 = vld [vmem:[%s4256 + $0x70] sm:$0xff]
    %v4272 = vld [vmem:[%s4256 + $0x78] sm:$0xff]
    %v4273 = vmul.f32 %v4257, %v4257
    %v4274 = vmul.f32 %v4258, %v4258
    %v4275 = vmul.f32 %v4259, %v4259
    %v4276 = vmul.f32 %v4260, %v4260
    %v4277 = vmul.f32 %v4261, %v4261
    %v4278 = vmul.f32 %v4262, %v4262
    %v4279 = vmul.f32 %v4263, %v4263
    %v4280 = vmul.f32 %v4264, %v4264
    %v4281 = vmul.f32 %v4265, %v4265
    %v4282 = vmul.f32 %v4266, %v4266
    %v4283 = vmul.f32 %v4267, %v4267
    %v4284 = vmul.f32 %v4268, %v4268
    %v4285 = vmul.f32 %v4269, %v4269
    %v4286 = vmul.f32 %v4270, %v4270
    %v4287 = vmul.f32 %v4271, %v4271
    %v4288 = vmul.f32 %v4272, %v4272
    %v4289 = vsel %vm125, %v4273, 0.0
    %4290 = vadd.xlane.f32.xlu0 %v4289
    %v4291 = vpop.xlane.xlu0 %4290
    %v4292 = vsel %vm125, %v4274, 0.0
    %4293 = vadd.xlane.f32.xlu0 %v4292
    %v4294 = vpop.xlane.xlu0 %4293
    %v4295 = vsel %vm125, %v4275, 0.0
    %4296 = vadd.xlane.f32.xlu0 %v4295
    %v4297 = vpop.xlane.xlu0 %4296
    %v4298 = vsel %vm125, %v4276, 0.0
    %4299 = vadd.xlane.f32.xlu0 %v4298
    %v4300 = vpop.xlane.xlu0 %4299
    %v4301 = vsel %vm125, %v4277, 0.0
    %4302 = vadd.xlane.f32.xlu0 %v4301
    %v4303 = vpop.xlane.xlu0 %4302
    %v4304 = vsel %vm125, %v4278, 0.0
    %4305 = vadd.xlane.f32.xlu0 %v4304
    %v4306 = vpop.xlane.xlu0 %4305
    %v4307 = vsel %vm125, %v4279, 0.0
    %4308 = vadd.xlane.f32.xlu0 %v4307
    %v4309 = vpop.xlane.xlu0 %4308
    %v4310 = vsel %vm125, %v4280, 0.0
    %4311 = vadd.xlane.f32.xlu0 %v4310
    %v4312 = vpop.xlane.xlu0 %4311
    %v4313 = vsel %vm125, %v4281, 0.0
    %4314 = vadd.xlane.f32.xlu0 %v4313
    %v4315 = vpop.xlane.xlu0 %4314
    %v4316 = vsel %vm125, %v4282, 0.0
    %4317 = vadd.xlane.f32.xlu0 %v4316
    %v4318 = vpop.xlane.xlu0 %4317
    %v4319 = vsel %vm125, %v4283, 0.0
    %4320 = vadd.xlane.f32.xlu0 %v4319
    %v4321 = vpop.xlane.xlu0 %4320
    %v4322 = vsel %vm125, %v4284, 0.0
    %4323 = vadd.xlane.f32.xlu0 %v4322
    %v4324 = vpop.xlane.xlu0 %4323
    %v4325 = vsel %vm125, %v4285, 0.0
    %4326 = vadd.xlane.f32.xlu0 %v4325
    %v4327 = vpop.xlane.xlu0 %4326
    %v4328 = vsel %vm125, %v4286, 0.0
    %4329 = vadd.xlane.f32.xlu0 %v4328
    %v4330 = vpop.xlane.xlu0 %4329
    %v4331 = vsel %vm125, %v4287, 0.0
    %4332 = vadd.xlane.f32.xlu0 %v4331
    %v4333 = vpop.xlane.xlu0 %4332
    %v4334 = vsel %vm125, %v4288, 0.0
    %4335 = vadd.xlane.f32.xlu0 %v4334
    %v4336 = vpop.xlane.xlu0 %4335
    %v4337 = vmax.f32 %v4291, 1e-24
    %v4338 = vmax.f32 %v4294, 1e-24
    %v4339 = vmax.f32 %v4297, 1e-24
    %v4340 = vmax.f32 %v4300, 1e-24
    %v4341 = vmax.f32 %v4303, 1e-24
    %v4342 = vmax.f32 %v4306, 1e-24
    %v4343 = vmax.f32 %v4309, 1e-24
    %v4344 = vmax.f32 %v4312, 1e-24
    %v4345 = vmax.f32 %v4315, 1e-24
    %v4346 = vmax.f32 %v4318, 1e-24
    %v4347 = vmax.f32 %v4321, 1e-24
    %v4348 = vmax.f32 %v4324, 1e-24
    %v4349 = vmax.f32 %v4327, 1e-24
    %v4350 = vmax.f32 %v4330, 1e-24
    %v4351 = vmax.f32 %v4333, 1e-24
    %v4352 = vmax.f32 %v4336, 1e-24
    %v4353 = vrsqrt.pop %v4337
    %v4354 = vrsqrt.pop %v4338
    %v4355 = vrsqrt.pop %v4339
    %v4356 = vrsqrt.pop %v4340
    %v4357 = vrsqrt.pop %v4341
    %v4358 = vrsqrt.pop %v4342
    %v4359 = vrsqrt.pop %v4343
    %v4360 = vrsqrt.pop %v4344
    %v4361 = vrsqrt.pop %v4345
    %v4362 = vrsqrt.pop %v4346
    %v4363 = vrsqrt.pop %v4347
    %v4364 = vrsqrt.pop %v4348
    %v4365 = vrsqrt.pop %v4349
    %v4366 = vrsqrt.pop %v4350
    %v4367 = vrsqrt.pop %v4351
    %v4368 = vrsqrt.pop %v4352
    %v4369 = vmul.f32 %v4257, %v4353
    %v4370 = vmul.f32 %v4258, %v4354
    %v4371 = vmul.f32 %v4259, %v4355
    %v4372 = vmul.f32 %v4260, %v4356
    %v4373 = vmul.f32 %v4261, %v4357
    %v4374 = vmul.f32 %v4262, %v4358
    %v4375 = vmul.f32 %v4263, %v4359
    %v4376 = vmul.f32 %v4264, %v4360
    %v4377 = vmul.f32 %v4265, %v4361
    %v4378 = vmul.f32 %v4266, %v4362
    %v4379 = vmul.f32 %v4267, %v4363
    %v4380 = vmul.f32 %v4268, %v4364
    %v4381 = vmul.f32 %v4269, %v4365
    %v4382 = vmul.f32 %v4270, %v4366
    %v4383 = vmul.f32 %v4271, %v4367
    %v4384 = vmul.f32 %v4272, %v4368
    %v4386 = vsel %vm125, %v4369, 0
    %v4389 = vsel %vm125, %v4370, 0
    %v4392 = vsel %vm125, %v4371, 0
    %v4395 = vsel %vm125, %v4372, 0
    %v4398 = vsel %vm125, %v4373, 0
    %v4401 = vsel %vm125, %v4374, 0
    %v4404 = vsel %vm125, %v4375, 0
    %v4407 = vsel %vm125, %v4376, 0
    %v4410 = vsel %vm125, %v4377, 0
    %v4413 = vsel %vm125, %v4378, 0
    %v4416 = vsel %vm125, %v4379, 0
    %v4419 = vsel %vm125, %v4380, 0
    %v4422 = vsel %vm125, %v4381, 0
    %v4425 = vsel %vm125, %v4382, 0
    %v4428 = vsel %vm125, %v4383, 0
    %v4431 = vsel %vm125, %v4384, 0
    %4433 = vmatprep.subr.mxu0 0.0
    %4434 = vmatpush1.xpose.msra.mxu0 %v4386
    %4435 = vmatprep.subr.mxu0 0.0
    %4436 = vmatpush1.xpose.msra.mxu0 %v4389
    %4437 = vmatprep.subr.mxu0 0.0
    %4438 = vmatpush1.xpose.msra.mxu0 %v4392
    %4439 = vmatprep.subr.mxu0 0.0
    %4440 = vmatpush1.xpose.msra.mxu0 %v4395
    %4441 = vmatprep.subr.mxu0 0.0
    %4442 = vmatpush1.xpose.msra.mxu0 %v4398
    %4443 = vmatprep.subr.mxu0 0.0
    %4444 = vmatpush1.xpose.msra.mxu0 %v4401
    %4445 = vmatprep.subr.mxu0 0.0
    %4446 = vmatpush1.xpose.msra.mxu0 %v4404
    %4447 = vmatprep.subr.mxu0 0.0
    %4448 = vmatpush1.xpose.msra.mxu0 %v4407
    %4449 = vmatprep.subr.mxu0 0.0
    %4450 = vmatpush1.xpose.msra.mxu0 %v4410
    %4451 = vmatprep.subr.mxu0 0.0
    %4452 = vmatpush1.xpose.msra.mxu0 %v4413
    %4453 = vmatprep.subr.mxu0 0.0
    %4454 = vmatpush1.xpose.msra.mxu0 %v4416
    %4455 = vmatprep.subr.mxu0 0.0
    %4456 = vmatpush1.xpose.msra.mxu0 %v4419
    %4457 = vmatprep.subr.mxu0 0.0
    %4458 = vmatpush1.xpose.msra.mxu0 %v4422
    %4459 = vmatprep.subr.mxu0 0.0
    %4460 = vmatpush1.xpose.msra.mxu0 %v4425
    %4461 = vmatprep.subr.mxu0 0.0
    %4462 = vmatpush1.xpose.msra.mxu0 %v4428
    %4463 = vmatprep.subr.mxu0 0.0
    %4464 = vmatpush1.xpose.msra.mxu0 %v4431
    %4465 = vmatprep.subr.mxu0 0.0
    %4466 = vmatpush1.xpose.msra.mxu0 0.0
    %4467 = vmatprep.subr.mxu0 0.0
    %4468 = vmatpush1.xpose.msra.mxu0 0.0
    %4469 = vmatprep.subr.mxu0 0.0
    %4470 = vmatpush1.xpose.msra.mxu0 0.0
    %4471 = vmatprep.subr.mxu0 0.0
    %4472 = vmatpush1.xpose.msra.mxu0 0.0
    %4473 = vmatprep.subr.mxu0 0.0
    %4474 = vmatpush1.xpose.msra.mxu0 0.0
    %4475 = vmatprep.subr.mxu0 0.0
    %4476 = vmatpush1.xpose.msra.mxu0 0.0
    %4477 = vmatprep.subr.mxu0 0.0
    %4478 = vmatpush1.xpose.msra.mxu0 0.0
    %4479 = vmatprep.subr.mxu0 0.0
    %4480 = vmatpush1.xpose.msra.mxu0 0.0
    %4481 = vmatprep.subr.mxu0 0.0
    %4482 = vmatpush1.xpose.msra.mxu0 0.0
    %4483 = vmatprep.subr.mxu0 0.0
    %4484 = vmatpush1.xpose.msra.mxu0 0.0
    %4485 = vmatprep.subr.mxu0 0.0
    %4486 = vmatpush1.xpose.msra.mxu0 0.0
    %4487 = vmatprep.subr.mxu0 0.0
    %4488 = vmatpush1.xpose.msra.mxu0 0.0
    %4489 = vmatprep.subr.mxu0 0.0
    %4490 = vmatpush1.xpose.msra.mxu0 0.0
    %4491 = vmatprep.subr.mxu0 0.0
    %4492 = vmatpush1.xpose.msra.mxu0 0.0
    %4493 = vmatprep.subr.mxu0 0.0
    %4494 = vmatpush1.xpose.msra.mxu0 0.0
    %4495 = vmatprep.subr.mxu0 0.0
    %4496 = vmatpush1.xpose.msra.mxu0 0.0
    %4497 = vmatprep.mubr.f32.mxu0 0.0
    %4498 = vmatmul.mubr.f32.gmra.mrb[0].mxu0 %v4386
    %v4499 = vpop.f32.mrb[0].mxu0
    %v4500 = vadd.f32 0.0, %v4499
    %v4501 = vpop.f32.mrb[0].mxu0
    %4502 = vmatprep.mubr.f32.mxu0 0.0
    %4503 = vmatmul.mubr.f32.gmra.mrb[0].mxu0 %v4389
    %v4504 = vpop.f32.mrb[0].mxu0
    %v4505 = vadd.f32 0.0, %v4504
    %v4506 = vpop.f32.mrb[0].mxu0
    %4507 = vmatprep.mubr.f32.mxu0 0.0
    %4508 = vmatmul.mubr.f32.gmra.mrb[0].mxu0 %v4392
    %v4509 = vpop.f32.mrb[0].mxu0
    %v4510 = vadd.f32 0.0, %v4509
    %v4511 = vpop.f32.mrb[0].mxu0
    %4512 = vmatprep.mubr.f32.mxu0 0.0
    %4513 = vmatmul.mubr.f32.gmra.mrb[0].mxu0 %v4395
    %v4514 = vpop.f32.mrb[0].mxu0
    %v4515 = vadd.f32 0.0, %v4514
    %v4516 = vpop.f32.mrb[0].mxu0
    %4517 = vmatprep.mubr.f32.mxu0 0.0
    %4518 = vmatmul.mubr.f32.gmra.mrb[0].mxu0 %v4398
    %v4519 = vpop.f32.mrb[0].mxu0
    %v4520 = vadd.f32 0.0, %v4519
    %v4521 = vpop.f32.mrb[0].mxu0
    %4522 = vmatprep.mubr.f32.mxu0 0.0
    %4523 = vmatmul.mubr.f32.gmra.mrb[0].mxu0 %v4401
    %v4524 = vpop.f32.mrb[0].mxu0
    %v4525 = vadd.f32 0.0, %v4524
    %v4526 = vpop.f32.mrb[0].mxu0
    %4527 = vmatprep.mubr.f32.mxu0 0.0
    %4528 = vmatmul.mubr.f32.gmra.mrb[0].mxu0 %v4404
    %v4529 = vpop.f32.mrb[0].mxu0
    %v4530 = vadd.f32 0.0, %v4529
    %v4531 = vpop.f32.mrb[0].mxu0
    %4532 = vmatprep.mubr.f32.mxu0 0.0
    %4533 = vmatmul.mubr.f32.gmra.mrb[0].mxu0 %v4407
    %v4534 = vpop.f32.mrb[0].mxu0
    %v4535 = vadd.f32 0.0, %v4534
    %v4536 = vpop.f32.mrb[0].mxu0
    %4537 = vmatprep.mubr.f32.mxu0 0.0
    %4538 = vmatmul.mubr.f32.gmra.mrb[0].mxu0 %v4410
    %v4539 = vpop.f32.mrb[0].mxu0
    %v4540 = vadd.f32 0.0, %v4539
    %v4541 = vpop.f32.mrb[0].mxu0
    %4542 = vmatprep.mubr.f32.mxu0 0.0
    %4543 = vmatmul.mubr.f32.gmra.mrb[0].mxu0 %v4413
    %v4544 = vpop.f32.mrb[0].mxu0
    %v4545 = vadd.f32 0.0, %v4544
    %v4546 = vpop.f32.mrb[0].mxu0
    %4547 = vmatprep.mubr.f32.mxu0 0.0
    %4548 = vmatmul.mubr.f32.gmra.mrb[0].mxu0 %v4416
    %v4549 = vpop.f32.mrb[0].mxu0
    %v4550 = vadd.f32 0.0, %v4549
    %v4551 = vpop.f32.mrb[0].mxu0
    %4552 = vmatprep.mubr.f32.mxu0 0.0
    %4553 = vmatmul.mubr.f32.gmra.mrb[0].mxu0 %v4419
    %v4554 = vpop.f32.mrb[0].mxu0
    %v4555 = vadd.f32 0.0, %v4554
    %v4556 = vpop.f32.mrb[0].mxu0
    %4557 = vmatprep.mubr.f32.mxu0 0.0
    %4558 = vmatmul.mubr.f32.gmra.mrb[0].mxu0 %v4422
    %v4559 = vpop.f32.mrb[0].mxu0
    %v4560 = vadd.f32 0.0, %v4559
    %v4561 = vpop.f32.mrb[0].mxu0
    %4562 = vmatprep.mubr.f32.mxu0 0.0
    %4563 = vmatmul.mubr.f32.gmra.mrb[0].mxu0 %v4425
    %v4564 = vpop.f32.mrb[0].mxu0
    %v4565 = vadd.f32 0.0, %v4564
    %v4566 = vpop.f32.mrb[0].mxu0
    %4567 = vmatprep.mubr.f32.mxu0 0.0
    %4568 = vmatmul.mubr.f32.gmra.mrb[0].mxu0 %v4428
    %v4569 = vpop.f32.mrb[0].mxu0
    %v4570 = vadd.f32 0.0, %v4569
    %v4571 = vpop.f32.mrb[0].mxu0
    %4572 = vmatprep.mubr.f32.mxu0 0.0
    %4573 = vmatmul.mubr.f32.gmra.mrb[0].mxu0 %v4431
    %v4574 = vpop.f32.mrb[0].mxu0
    %v4575 = vadd.f32 0.0, %v4574
    %v4576 = vpop.f32.mrb[0].mxu0
    %4577 = vdwg.mxu0
    %v4578 = vmax.f32 %v4500, 0.0
    %v4579 = vmax.f32 %v4505, 0.0
    %v4580 = vmax.f32 %v4510, 0.0
    %v4581 = vmax.f32 %v4515, 0.0
    %v4582 = vmax.f32 %v4520, 0.0
    %v4583 = vmax.f32 %v4525, 0.0
    %v4584 = vmax.f32 %v4530, 0.0
    %v4585 = vmax.f32 %v4535, 0.0
    %v4586 = vmax.f32 %v4540, 0.0
    %v4587 = vmax.f32 %v4545, 0.0
    %v4588 = vmax.f32 %v4550, 0.0
    %v4589 = vmax.f32 %v4555, 0.0
    %v4590 = vmax.f32 %v4560, 0.0
    %v4591 = vmax.f32 %v4565, 0.0
    %v4592 = vmax.f32 %v4570, 0.0
    %v4593 = vmax.f32 %v4575, 0.0
    %v4594 = vadd.f32 %v4578, %v4579
    %v4595 = vadd.f32 %v4594, %v4580
    %v4596 = vadd.f32 %v4595, %v4581
    %v4597 = vadd.f32 %v4596, %v4582
    %v4598 = vadd.f32 %v4597, %v4583
    %v4599 = vadd.f32 %v4598, %v4584
    %v4600 = vadd.f32 %v4599, %v4585
    %v4601 = vadd.f32 %v4600, %v4586
    %v4602 = vadd.f32 %v4601, %v4587
    %v4603 = vadd.f32 %v4602, %v4588
    %v4604 = vadd.f32 %v4603, %v4589
    %v4605 = vadd.f32 %v4604, %v4590
    %v4606 = vadd.f32 %v4605, %v4591
    %v4607 = vadd.f32 %v4606, %v4592
    %v4608 = vadd.f32 %v4607, %v4593
    %v4609 = vrot.slane %v4608, 4
    %v4610 = vadd.f32 %v4608, %v4609
    %v4611 = vrot.slane %v4610, 2
    %v4612 = vadd.f32 %v4610, %v4611
    %v4613 = vrot.slane %v4612, 1
    %v4614 = vadd.f32 %v4612, %v4613
    %v4615 = vadd.f32 %v4614, 1.0
    %v4616 = vpack.c.bf16 %v4258, %v4257
    %v4617 = vpack.c.bf16 %v4260, %v4259
    %v4618 = vpack.c.bf16 %v4262, %v4261
    %v4619 = vpack.c.bf16 %v4264, %v4263
    %v4620 = vpack.c.bf16 %v4266, %v4265
    %v4621 = vpack.c.bf16 %v4268, %v4267
    %v4622 = vpack.c.bf16 %v4270, %v4269
    %v4623 = vpack.c.bf16 %v4272, %v4271
    %v4625 = vsel %vm125, %v4616, 0
    %v4628 = vsel %vm125, %v4617, 0
    %v4631 = vsel %vm125, %v4618, 0
    %v4634 = vsel %vm125, %v4619, 0
    %v4637 = vsel %vm125, %v4620, 0
    %v4640 = vsel %vm125, %v4621, 0
    %v4643 = vsel %vm125, %v4622, 0
    %v4646 = vsel %vm125, %v4623, 0
    %4648 = vmatprep.subr.bf16.mxu0 0
    %4649 = vmatpush1.bf16.msra.mxu0 %v109
    %4650 = vmatprep.subr.bf16.mxu0 0
    %4651 = vmatpush1.bf16.msra.mxu0 %v110
    %4652 = vmatprep.subr.bf16.mxu0 0
    %4653 = vmatpush1.bf16.msra.mxu0 0
    %4654 = vmatprep.subr.bf16.mxu0 0
    %4655 = vmatpush1.bf16.msra.mxu0 0
    %4656 = vmatprep.subr.bf16.mxu0 0
    %4657 = vmatpush1.bf16.msra.mxu0 0
    %4658 = vmatprep.subr.bf16.mxu0 0
    %4659 = vmatpush1.bf16.msra.mxu0 0
    %4660 = vmatprep.subr.bf16.mxu0 0
    %4661 = vmatpush1.bf16.msra.mxu0 0
    %4662 = vmatprep.subr.bf16.mxu0 0
    %4663 = vmatpush1.bf16.msra.mxu0 0
    %4664 = vmatprep.subr.bf16.mxu0 0
    %4665 = vmatpush1.bf16.msra.mxu0 0
    %4666 = vmatprep.subr.bf16.mxu0 0
    %4667 = vmatpush1.bf16.msra.mxu0 0
    %4668 = vmatprep.subr.bf16.mxu0 0
    %4669 = vmatpush1.bf16.msra.mxu0 0
    %4670 = vmatprep.subr.bf16.mxu0 0
    %4671 = vmatpush1.bf16.msra.mxu0 0
    %4672 = vmatprep.subr.bf16.mxu0 0
    %4673 = vmatpush1.bf16.msra.mxu0 0
    %4674 = vmatprep.subr.bf16.mxu0 0
    %4675 = vmatpush1.bf16.msra.mxu0 0
    %4676 = vmatprep.subr.bf16.mxu0 0
    %4677 = vmatpush1.bf16.msra.mxu0 0
    %4678 = vmatprep.subr.bf16.mxu0 0
    %4679 = vmatpush1.bf16.msra.mxu0 0
    %4680 = vmatprep.mubr.bf16.mxu0 0
    %4681 = vmatmul.mubr.bf16.gmra.mrb[0].mxu0 %v4625
    %v4682 = vpop.f32.mrb[0].mxu0
    %v4683 = vadd.f32 0.0, %v4682
    %v4684 = vpop.f32.mrb[0].mxu0
    %v4685 = vpop.f32.mrb[0].mxu0
    %v4686 = vadd.f32 0.0, %v4685
    %v4687 = vpop.f32.mrb[0].mxu0
    %4688 = vmatprep.mubr.bf16.mxu0 0
    %4689 = vmatmul.mubr.bf16.gmra.mrb[0].mxu0 %v4628
    %v4690 = vpop.f32.mrb[0].mxu0
    %v4691 = vadd.f32 0.0, %v4690
    %v4692 = vpop.f32.mrb[0].mxu0
    %v4693 = vpop.f32.mrb[0].mxu0
    %v4694 = vadd.f32 0.0, %v4693
    %v4695 = vpop.f32.mrb[0].mxu0
    %4696 = vmatprep.mubr.bf16.mxu0 0
    %4697 = vmatmul.mubr.bf16.gmra.mrb[0].mxu0 %v4631
    %v4698 = vpop.f32.mrb[0].mxu0
    %v4699 = vadd.f32 0.0, %v4698
    %v4700 = vpop.f32.mrb[0].mxu0
    %v4701 = vpop.f32.mrb[0].mxu0
    %v4702 = vadd.f32 0.0, %v4701
    %v4703 = vpop.f32.mrb[0].mxu0
    %4704 = vmatprep.mubr.bf16.mxu0 0
    %4705 = vmatmul.mubr.bf16.gmra.mrb[0].mxu0 %v4634
    %v4706 = vpop.f32.mrb[0].mxu0
    %v4707 = vadd.f32 0.0, %v4706
    %v4708 = vpop.f32.mrb[0].mxu0
    %v4709 = vpop.f32.mrb[0].mxu0
    %v4710 = vadd.f32 0.0, %v4709
    %v4711 = vpop.f32.mrb[0].mxu0
    %4712 = vmatprep.mubr.bf16.mxu0 0
    %4713 = vmatmul.mubr.bf16.gmra.mrb[0].mxu0 %v4637
    %v4714 = vpop.f32.mrb[0].mxu0
    %v4715 = vadd.f32 0.0, %v4714
    %v4716 = vpop.f32.mrb[0].mxu0
    %v4717 = vpop.f32.mrb[0].mxu0
    %v4718 = vadd.f32 0.0, %v4717
    %v4719 = vpop.f32.mrb[0].mxu0
    %4720 = vmatprep.mubr.bf16.mxu0 0
    %4721 = vmatmul.mubr.bf16.gmra.mrb[0].mxu0 %v4640
    %v4722 = vpop.f32.mrb[0].mxu0
    %v4723 = vadd.f32 0.0, %v4722
    %v4724 = vpop.f32.mrb[0].mxu0
    %v4725 = vpop.f32.mrb[0].mxu0
    %v4726 = vadd.f32 0.0, %v4725
    %v4727 = vpop.f32.mrb[0].mxu0
    %4728 = vmatprep.mubr.bf16.mxu0 0
    %4729 = vmatmul.mubr.bf16.gmra.mrb[0].mxu0 %v4643
    %v4730 = vpop.f32.mrb[0].mxu0
    %v4731 = vadd.f32 0.0, %v4730
    %v4732 = vpop.f32.mrb[0].mxu0
    %v4733 = vpop.f32.mrb[0].mxu0
    %v4734 = vadd.f32 0.0, %v4733
    %v4735 = vpop.f32.mrb[0].mxu0
    %4736 = vmatprep.mubr.bf16.mxu0 0
    %4737 = vmatmul.mubr.bf16.gmra.mrb[0].mxu0 %v4646
    %v4738 = vpop.f32.mrb[0].mxu0
    %v4739 = vadd.f32 0.0, %v4738
    %v4740 = vpop.f32.mrb[0].mxu0
    %v4741 = vpop.f32.mrb[0].mxu0
    %v4742 = vadd.f32 0.0, %v4741
    %v4743 = vpop.f32.mrb[0].mxu0
    %4744 = vdwg.mxu0
    %v4745 = vpack.c.bf16 %v4370, %v4369
    %v4746 = vpack.c.bf16 %v4372, %v4371
    %v4747 = vpack.c.bf16 %v4374, %v4373
    %v4748 = vpack.c.bf16 %v4376, %v4375
    %v4749 = vpack.c.bf16 %v4378, %v4377
    %v4750 = vpack.c.bf16 %v4380, %v4379
    %v4751 = vpack.c.bf16 %v4382, %v4381
    %v4752 = vpack.c.bf16 %v4384, %v4383
    %v4761 = vunpack.c.l.b16 %v4745
    %v4762 = vunpack.c.h.b16 %v4745
    %v4763 = vunpack.c.l.b16 %v4746
    %v4764 = vunpack.c.h.b16 %v4746
    %v4765 = vunpack.c.l.b16 %v4747
    %v4766 = vunpack.c.h.b16 %v4747
    %v4767 = vunpack.c.l.b16 %v4748
    %v4768 = vunpack.c.h.b16 %v4748
    %v4769 = vunpack.c.l.b16 %v4749
    %v4770 = vunpack.c.h.b16 %v4749
    %v4771 = vunpack.c.l.b16 %v4750
    %v4772 = vunpack.c.h.b16 %v4750
    %v4773 = vunpack.c.l.b16 %v4751
    %v4774 = vunpack.c.h.b16 %v4751
    %v4775 = vunpack.c.l.b16 %v4752
    %v4776 = vunpack.c.h.b16 %v4752
    %v4777 = vpack.c.b16 %v4761, %v4761
    %v4778 = vpack.c.b16 %v4762, %v4762
    %v4779 = vpack.c.b16 %v4763, %v4763
    %v4780 = vpack.c.b16 %v4764, %v4764
    %v4781 = vpack.c.b16 %v4765, %v4765
    %v4782 = vpack.c.b16 %v4766, %v4766
    %v4783 = vpack.c.b16 %v4767, %v4767
    %v4784 = vpack.c.b16 %v4768, %v4768
    %v4785 = vpack.c.b16 %v4769, %v4769
    %v4786 = vpack.c.b16 %v4770, %v4770
    %v4787 = vpack.c.b16 %v4771, %v4771
    %v4788 = vpack.c.b16 %v4772, %v4772
    %v4789 = vpack.c.b16 %v4773, %v4773
    %v4790 = vpack.c.b16 %v4774, %v4774
    %v4791 = vpack.c.b16 %v4775, %v4775
    %v4792 = vpack.c.b16 %v4776, %v4776
    %s4809 = scalar_lea.vmem [#allocation11], 192
    %4810 = vst.msk [vmem:[%s4809] sm:$0xf] %vm166, %v4777
    %4811 = vst.msk [vmem:[%s4809 + $0x4] sm:$0xf] %vm166, %v4778
    %4812 = vst.msk [vmem:[%s4809 + $0x8] sm:$0xf] %vm166, %v4779
    %4813 = vst.msk [vmem:[%s4809 + $0xc] sm:$0xf] %vm166, %v4780
    %4814 = vst.msk [vmem:[%s4809 + $0x10] sm:$0xf] %vm166, %v4781
    %4815 = vst.msk [vmem:[%s4809 + $0x14] sm:$0xf] %vm166, %v4782
    %4816 = vst.msk [vmem:[%s4809 + $0x18] sm:$0xf] %vm166, %v4783
    %4817 = vst.msk [vmem:[%s4809 + $0x1c] sm:$0xf] %vm166, %v4784
    %4818 = vst.msk [vmem:[%s4809 + $0x20] sm:$0xf] %vm166, %v4785
    %4819 = vst.msk [vmem:[%s4809 + $0x24] sm:$0xf] %vm166, %v4786
    %4820 = vst.msk [vmem:[%s4809 + $0x28] sm:$0xf] %vm166, %v4787
    %4821 = vst.msk [vmem:[%s4809 + $0x2c] sm:$0xf] %vm166, %v4788
    %4822 = vst.msk [vmem:[%s4809 + $0x30] sm:$0xf] %vm166, %v4789
    %4823 = vst.msk [vmem:[%s4809 + $0x34] sm:$0xf] %vm166, %v4790
    %4824 = vst.msk [vmem:[%s4809 + $0x38] sm:$0xf] %vm166, %v4791
    %4825 = vst.msk [vmem:[%s4809 + $0x3c] sm:$0xf] %vm166, %v4792
    %v4826 = vpack.c.bf16 %v4686, %v4683
    %v4827 = vpack.c.bf16 %v4694, %v4691
    %v4828 = vpack.c.bf16 %v4702, %v4699
    %v4829 = vpack.c.bf16 %v4710, %v4707
    %v4830 = vpack.c.bf16 %v4718, %v4715
    %v4831 = vpack.c.bf16 %v4726, %v4723
    %v4832 = vpack.c.bf16 %v4734, %v4731
    %v4833 = vpack.c.bf16 %v4742, %v4739
    %v4842 = vunpack.c.l.b16 %v4826
    %v4843 = vunpack.c.h.b16 %v4826
    %v4844 = vunpack.c.l.b16 %v4827
    %v4845 = vunpack.c.h.b16 %v4827
    %v4846 = vunpack.c.l.b16 %v4828
    %v4847 = vunpack.c.h.b16 %v4828
    %v4848 = vunpack.c.l.b16 %v4829
    %v4849 = vunpack.c.h.b16 %v4829
    %v4850 = vunpack.c.l.b16 %v4830
    %v4851 = vunpack.c.h.b16 %v4830
    %v4852 = vunpack.c.l.b16 %v4831
    %v4853 = vunpack.c.h.b16 %v4831
    %v4854 = vunpack.c.l.b16 %v4832
    %v4855 = vunpack.c.h.b16 %v4832
    %v4856 = vunpack.c.l.b16 %v4833
    %v4857 = vunpack.c.h.b16 %v4833
    %v4858 = vpack.c.b16 %v4842, %v4842
    %v4859 = vpack.c.b16 %v4843, %v4843
    %v4860 = vpack.c.b16 %v4844, %v4844
    %v4861 = vpack.c.b16 %v4845, %v4845
    %v4862 = vpack.c.b16 %v4846, %v4846
    %v4863 = vpack.c.b16 %v4847, %v4847
    %v4864 = vpack.c.b16 %v4848, %v4848
    %v4865 = vpack.c.b16 %v4849, %v4849
    %v4866 = vpack.c.b16 %v4850, %v4850
    %v4867 = vpack.c.b16 %v4851, %v4851
    %v4868 = vpack.c.b16 %v4852, %v4852
    %v4869 = vpack.c.b16 %v4853, %v4853
    %v4870 = vpack.c.b16 %v4854, %v4854
    %v4871 = vpack.c.b16 %v4855, %v4855
    %v4872 = vpack.c.b16 %v4856, %v4856
    %v4873 = vpack.c.b16 %v4857, %v4857
    %s4890 = scalar_lea.vmem [#allocation14], 192
    %4891 = vst.msk [vmem:[%s4890] sm:$0xf] %vm166, %v4858
    %4892 = vst.msk [vmem:[%s4890 + $0x4] sm:$0xf] %vm166, %v4859
    %4893 = vst.msk [vmem:[%s4890 + $0x8] sm:$0xf] %vm166, %v4860
    %4894 = vst.msk [vmem:[%s4890 + $0xc] sm:$0xf] %vm166, %v4861
    %4895 = vst.msk [vmem:[%s4890 + $0x10] sm:$0xf] %vm166, %v4862
    %4896 = vst.msk [vmem:[%s4890 + $0x14] sm:$0xf] %vm166, %v4863
    %4897 = vst.msk [vmem:[%s4890 + $0x18] sm:$0xf] %vm166, %v4864
    %4898 = vst.msk [vmem:[%s4890 + $0x1c] sm:$0xf] %vm166, %v4865
    %4899 = vst.msk [vmem:[%s4890 + $0x20] sm:$0xf] %vm166, %v4866
    %4900 = vst.msk [vmem:[%s4890 + $0x24] sm:$0xf] %vm166, %v4867
    %4901 = vst.msk [vmem:[%s4890 + $0x28] sm:$0xf] %vm166, %v4868
    %4902 = vst.msk [vmem:[%s4890 + $0x2c] sm:$0xf] %vm166, %v4869
    %4903 = vst.msk [vmem:[%s4890 + $0x30] sm:$0xf] %vm166, %v4870
    %4904 = vst.msk [vmem:[%s4890 + $0x34] sm:$0xf] %vm166, %v4871
    %4905 = vst.msk [vmem:[%s4890 + $0x38] sm:$0xf] %vm166, %v4872
    %4906 = vst.msk [vmem:[%s4890 + $0x3c] sm:$0xf] %vm166, %v4873
    %s4907 = scalar_lea.vmem [#allocation17], 3
    %4908 = vst [vmem:[%s4907] sm:$0x1] %v4615
    %s4909 = scalar_lea.vmem [#allocation5], 384
    %v4910 = vld [vmem:[%s4909] sm:$0xff]
    %v4911 = vld [vmem:[%s4909 + $0x8] sm:$0xff]
    %v4912 = vld [vmem:[%s4909 + $0x10] sm:$0xff]
    %v4913 = vld [vmem:[%s4909 + $0x18] sm:$0xff]
    %v4914 = vld [vmem:[%s4909 + $0x20] sm:$0xff]
    %v4915 = vld [vmem:[%s4909 + $0x28] sm:$0xff]
    %v4916 = vld [vmem:[%s4909 + $0x30] sm:$0xff]
    %v4917 = vld [vmem:[%s4909 + $0x38] sm:$0xff]
    %v4918 = vld [vmem:[%s4909 + $0x40] sm:$0xff]
    %v4919 = vld [vmem:[%s4909 + $0x48] sm:$0xff]
    %v4920 = vld [vmem:[%s4909 + $0x50] sm:$0xff]
    %v4921 = vld [vmem:[%s4909 + $0x58] sm:$0xff]
    %v4922 = vld [vmem:[%s4909 + $0x60] sm:$0xff]
    %v4923 = vld [vmem:[%s4909 + $0x68] sm:$0xff]
    %v4924 = vld [vmem:[%s4909 + $0x70] sm:$0xff]
    %v4925 = vld [vmem:[%s4909 + $0x78] sm:$0xff]
    %v4926 = vmul.f32 %v4910, %v4910
    %v4927 = vmul.f32 %v4911, %v4911
    %v4928 = vmul.f32 %v4912, %v4912
    %v4929 = vmul.f32 %v4913, %v4913
    %v4930 = vmul.f32 %v4914, %v4914
    %v4931 = vmul.f32 %v4915, %v4915
    %v4932 = vmul.f32 %v4916, %v4916
    %v4933 = vmul.f32 %v4917, %v4917
    %v4934 = vmul.f32 %v4918, %v4918
    %v4935 = vmul.f32 %v4919, %v4919
    %v4936 = vmul.f32 %v4920, %v4920
    %v4937 = vmul.f32 %v4921, %v4921
    %v4938 = vmul.f32 %v4922, %v4922
    %v4939 = vmul.f32 %v4923, %v4923
    %v4940 = vmul.f32 %v4924, %v4924
    %v4941 = vmul.f32 %v4925, %v4925
    %v4942 = vsel %vm125, %v4926, 0.0
    %4943 = vadd.xlane.f32.xlu0 %v4942
    %v4944 = vpop.xlane.xlu0 %4943
    %v4945 = vsel %vm125, %v4927, 0.0
    %4946 = vadd.xlane.f32.xlu0 %v4945
    %v4947 = vpop.xlane.xlu0 %4946
    %v4948 = vsel %vm125, %v4928, 0.0
    %4949 = vadd.xlane.f32.xlu0 %v4948
    %v4950 = vpop.xlane.xlu0 %4949
    %v4951 = vsel %vm125, %v4929, 0.0
    %4952 = vadd.xlane.f32.xlu0 %v4951
    %v4953 = vpop.xlane.xlu0 %4952
    %v4954 = vsel %vm125, %v4930, 0.0
    %4955 = vadd.xlane.f32.xlu0 %v4954
    %v4956 = vpop.xlane.xlu0 %4955
    %v4957 = vsel %vm125, %v4931, 0.0
    %4958 = vadd.xlane.f32.xlu0 %v4957
    %v4959 = vpop.xlane.xlu0 %4958
    %v4960 = vsel %vm125, %v4932, 0.0
    %4961 = vadd.xlane.f32.xlu0 %v4960
    %v4962 = vpop.xlane.xlu0 %4961
    %v4963 = vsel %vm125, %v4933, 0.0
    %4964 = vadd.xlane.f32.xlu0 %v4963
    %v4965 = vpop.xlane.xlu0 %4964
    %v4966 = vsel %vm125, %v4934, 0.0
    %4967 = vadd.xlane.f32.xlu0 %v4966
    %v4968 = vpop.xlane.xlu0 %4967
    %v4969 = vsel %vm125, %v4935, 0.0
    %4970 = vadd.xlane.f32.xlu0 %v4969
    %v4971 = vpop.xlane.xlu0 %4970
    %v4972 = vsel %vm125, %v4936, 0.0
    %4973 = vadd.xlane.f32.xlu0 %v4972
    %v4974 = vpop.xlane.xlu0 %4973
    %v4975 = vsel %vm125, %v4937, 0.0
    %4976 = vadd.xlane.f32.xlu0 %v4975
    %v4977 = vpop.xlane.xlu0 %4976
    %v4978 = vsel %vm125, %v4938, 0.0
    %4979 = vadd.xlane.f32.xlu0 %v4978
    %v4980 = vpop.xlane.xlu0 %4979
    %v4981 = vsel %vm125, %v4939, 0.0
    %4982 = vadd.xlane.f32.xlu0 %v4981
    %v4983 = vpop.xlane.xlu0 %4982
    %v4984 = vsel %vm125, %v4940, 0.0
    %4985 = vadd.xlane.f32.xlu0 %v4984
    %v4986 = vpop.xlane.xlu0 %4985
    %v4987 = vsel %vm125, %v4941, 0.0
    %4988 = vadd.xlane.f32.xlu0 %v4987
    %v4989 = vpop.xlane.xlu0 %4988
    %v4990 = vmax.f32 %v4944, 1e-24
    %v4991 = vmax.f32 %v4947, 1e-24
    %v4992 = vmax.f32 %v4950, 1e-24
    %v4993 = vmax.f32 %v4953, 1e-24
    %v4994 = vmax.f32 %v4956, 1e-24
    %v4995 = vmax.f32 %v4959, 1e-24
    %v4996 = vmax.f32 %v4962, 1e-24
    %v4997 = vmax.f32 %v4965, 1e-24
    %v4998 = vmax.f32 %v4968, 1e-24
    %v4999 = vmax.f32 %v4971, 1e-24
    %v5000 = vmax.f32 %v4974, 1e-24
    %v5001 = vmax.f32 %v4977, 1e-24
    %v5002 = vmax.f32 %v4980, 1e-24
    %v5003 = vmax.f32 %v4983, 1e-24
    %v5004 = vmax.f32 %v4986, 1e-24
    %v5005 = vmax.f32 %v4989, 1e-24
    %v5006 = vrsqrt.pop %v4990
    %v5007 = vrsqrt.pop %v4991
    %v5008 = vrsqrt.pop %v4992
    %v5009 = vrsqrt.pop %v4993
    %v5010 = vrsqrt.pop %v4994
    %v5011 = vrsqrt.pop %v4995
    %v5012 = vrsqrt.pop %v4996
    %v5013 = vrsqrt.pop %v4997
    %v5014 = vrsqrt.pop %v4998
    %v5015 = vrsqrt.pop %v4999
    %v5016 = vrsqrt.pop %v5000
    %v5017 = vrsqrt.pop %v5001
    %v5018 = vrsqrt.pop %v5002
    %v5019 = vrsqrt.pop %v5003
    %v5020 = vrsqrt.pop %v5004
    %v5021 = vrsqrt.pop %v5005
    %v5022 = vmul.f32 %v4910, %v5006
    %v5023 = vmul.f32 %v4911, %v5007
    %v5024 = vmul.f32 %v4912, %v5008
    %v5025 = vmul.f32 %v4913, %v5009
    %v5026 = vmul.f32 %v4914, %v5010
    %v5027 = vmul.f32 %v4915, %v5011
    %v5028 = vmul.f32 %v4916, %v5012
    %v5029 = vmul.f32 %v4917, %v5013
    %v5030 = vmul.f32 %v4918, %v5014
    %v5031 = vmul.f32 %v4919, %v5015
    %v5032 = vmul.f32 %v4920, %v5016
    %v5033 = vmul.f32 %v4921, %v5017
    %v5034 = vmul.f32 %v4922, %v5018
    %v5035 = vmul.f32 %v4923, %v5019
    %v5036 = vmul.f32 %v4924, %v5020
    %v5037 = vmul.f32 %v4925, %v5021
    %v5039 = vsel %vm125, %v5022, 0
    %v5042 = vsel %vm125, %v5023, 0
    %v5045 = vsel %vm125, %v5024, 0
    %v5048 = vsel %vm125, %v5025, 0
    %v5051 = vsel %vm125, %v5026, 0
    %v5054 = vsel %vm125, %v5027, 0
    %v5057 = vsel %vm125, %v5028, 0
    %v5060 = vsel %vm125, %v5029, 0
    %v5063 = vsel %vm125, %v5030, 0
    %v5066 = vsel %vm125, %v5031, 0
    %v5069 = vsel %vm125, %v5032, 0
    %v5072 = vsel %vm125, %v5033, 0
    %v5075 = vsel %vm125, %v5034, 0
    %v5078 = vsel %vm125, %v5035, 0
    %v5081 = vsel %vm125, %v5036, 0
    %v5084 = vsel %vm125, %v5037, 0
    %5086 = vmatprep.subr.mxu0 0.0
    %5087 = vmatpush1.xpose.msra.mxu0 %v5039
    %5088 = vmatprep.subr.mxu0 0.0
    %5089 = vmatpush1.xpose.msra.mxu0 %v5042
    %5090 = vmatprep.subr.mxu0 0.0
    %5091 = vmatpush1.xpose.msra.mxu0 %v5045
    %5092 = vmatprep.subr.mxu0 0.0
    %5093 = vmatpush1.xpose.msra.mxu0 %v5048
    %5094 = vmatprep.subr.mxu0 0.0
    %5095 = vmatpush1.xpose.msra.mxu0 %v5051
    %5096 = vmatprep.subr.mxu0 0.0
    %5097 = vmatpush1.xpose.msra.mxu0 %v5054
    %5098 = vmatprep.subr.mxu0 0.0
    %5099 = vmatpush1.xpose.msra.mxu0 %v5057
    %5100 = vmatprep.subr.mxu0 0.0
    %5101 = vmatpush1.xpose.msra.mxu0 %v5060
    %5102 = vmatprep.subr.mxu0 0.0
    %5103 = vmatpush1.xpose.msra.mxu0 %v5063
    %5104 = vmatprep.subr.mxu0 0.0
    %5105 = vmatpush1.xpose.msra.mxu0 %v5066
    %5106 = vmatprep.subr.mxu0 0.0
    %5107 = vmatpush1.xpose.msra.mxu0 %v5069
    %5108 = vmatprep.subr.mxu0 0.0
    %5109 = vmatpush1.xpose.msra.mxu0 %v5072
    %5110 = vmatprep.subr.mxu0 0.0
    %5111 = vmatpush1.xpose.msra.mxu0 %v5075
    %5112 = vmatprep.subr.mxu0 0.0
    %5113 = vmatpush1.xpose.msra.mxu0 %v5078
    %5114 = vmatprep.subr.mxu0 0.0
    %5115 = vmatpush1.xpose.msra.mxu0 %v5081
    %5116 = vmatprep.subr.mxu0 0.0
    %5117 = vmatpush1.xpose.msra.mxu0 %v5084
    %5118 = vmatprep.subr.mxu0 0.0
    %5119 = vmatpush1.xpose.msra.mxu0 0.0
    %5120 = vmatprep.subr.mxu0 0.0
    %5121 = vmatpush1.xpose.msra.mxu0 0.0
    %5122 = vmatprep.subr.mxu0 0.0
    %5123 = vmatpush1.xpose.msra.mxu0 0.0
    %5124 = vmatprep.subr.mxu0 0.0
    %5125 = vmatpush1.xpose.msra.mxu0 0.0
    %5126 = vmatprep.subr.mxu0 0.0
    %5127 = vmatpush1.xpose.msra.mxu0 0.0
    %5128 = vmatprep.subr.mxu0 0.0
    %5129 = vmatpush1.xpose.msra.mxu0 0.0
    %5130 = vmatprep.subr.mxu0 0.0
    %5131 = vmatpush1.xpose.msra.mxu0 0.0
    %5132 = vmatprep.subr.mxu0 0.0
    %5133 = vmatpush1.xpose.msra.mxu0 0.0
    %5134 = vmatprep.subr.mxu0 0.0
    %5135 = vmatpush1.xpose.msra.mxu0 0.0
    %5136 = vmatprep.subr.mxu0 0.0
    %5137 = vmatpush1.xpose.msra.mxu0 0.0
    %5138 = vmatprep.subr.mxu0 0.0
    %5139 = vmatpush1.xpose.msra.mxu0 0.0
    %5140 = vmatprep.subr.mxu0 0.0
    %5141 = vmatpush1.xpose.msra.mxu0 0.0
    %5142 = vmatprep.subr.mxu0 0.0
    %5143 = vmatpush1.xpose.msra.mxu0 0.0
    %5144 = vmatprep.subr.mxu0 0.0
    %5145 = vmatpush1.xpose.msra.mxu0 0.0
    %5146 = vmatprep.subr.mxu0 0.0
    %5147 = vmatpush1.xpose.msra.mxu0 0.0
    %5148 = vmatprep.subr.mxu0 0.0
    %5149 = vmatpush1.xpose.msra.mxu0 0.0
    %5150 = vmatprep.mubr.f32.mxu0 0.0
    %5151 = vmatmul.mubr.f32.gmra.mrb[0].mxu0 %v5039
    %v5152 = vpop.f32.mrb[0].mxu0
    %v5153 = vadd.f32 0.0, %v5152
    %v5154 = vpop.f32.mrb[0].mxu0
    %5155 = vmatprep.mubr.f32.mxu0 0.0
    %5156 = vmatmul.mubr.f32.gmra.mrb[0].mxu0 %v5042
    %v5157 = vpop.f32.mrb[0].mxu0
    %v5158 = vadd.f32 0.0, %v5157
    %v5159 = vpop.f32.mrb[0].mxu0
    %5160 = vmatprep.mubr.f32.mxu0 0.0
    %5161 = vmatmul.mubr.f32.gmra.mrb[0].mxu0 %v5045
    %v5162 = vpop.f32.mrb[0].mxu0
    %v5163 = vadd.f32 0.0, %v5162
    %v5164 = vpop.f32.mrb[0].mxu0
    %5165 = vmatprep.mubr.f32.mxu0 0.0
    %5166 = vmatmul.mubr.f32.gmra.mrb[0].mxu0 %v5048
    %v5167 = vpop.f32.mrb[0].mxu0
    %v5168 = vadd.f32 0.0, %v5167
    %v5169 = vpop.f32.mrb[0].mxu0
    %5170 = vmatprep.mubr.f32.mxu0 0.0
    %5171 = vmatmul.mubr.f32.gmra.mrb[0].mxu0 %v5051
    %v5172 = vpop.f32.mrb[0].mxu0
    %v5173 = vadd.f32 0.0, %v5172
    %v5174 = vpop.f32.mrb[0].mxu0
    %5175 = vmatprep.mubr.f32.mxu0 0.0
    %5176 = vmatmul.mubr.f32.gmra.mrb[0].mxu0 %v5054
    %v5177 = vpop.f32.mrb[0].mxu0
    %v5178 = vadd.f32 0.0, %v5177
    %v5179 = vpop.f32.mrb[0].mxu0
    %5180 = vmatprep.mubr.f32.mxu0 0.0
    %5181 = vmatmul.mubr.f32.gmra.mrb[0].mxu0 %v5057
    %v5182 = vpop.f32.mrb[0].mxu0
    %v5183 = vadd.f32 0.0, %v5182
    %v5184 = vpop.f32.mrb[0].mxu0
    %5185 = vmatprep.mubr.f32.mxu0 0.0
    %5186 = vmatmul.mubr.f32.gmra.mrb[0].mxu0 %v5060
    %v5187 = vpop.f32.mrb[0].mxu0
    %v5188 = vadd.f32 0.0, %v5187
    %v5189 = vpop.f32.mrb[0].mxu0
    %5190 = vmatprep.mubr.f32.mxu0 0.0
    %5191 = vmatmul.mubr.f32.gmra.mrb[0].mxu0 %v5063
    %v5192 = vpop.f32.mrb[0].mxu0
    %v5193 = vadd.f32 0.0, %v5192
    %v5194 = vpop.f32.mrb[0].mxu0
    %5195 = vmatprep.mubr.f32.mxu0 0.0
    %5196 = vmatmul.mubr.f32.gmra.mrb[0].mxu0 %v5066
    %v5197 = vpop.f32.mrb[0].mxu0
    %v5198 = vadd.f32 0.0, %v5197
    %v5199 = vpop.f32.mrb[0].mxu0
    %5200 = vmatprep.mubr.f32.mxu0 0.0
    %5201 = vmatmul.mubr.f32.gmra.mrb[0].mxu0 %v5069
    %v5202 = vpop.f32.mrb[0].mxu0
    %v5203 = vadd.f32 0.0, %v5202
    %v5204 = vpop.f32.mrb[0].mxu0
    %5205 = vmatprep.mubr.f32.mxu0 0.0
    %5206 = vmatmul.mubr.f32.gmra.mrb[0].mxu0 %v5072
    %v5207 = vpop.f32.mrb[0].mxu0
    %v5208 = vadd.f32 0.0, %v5207
    %v5209 = vpop.f32.mrb[0].mxu0
    %5210 = vmatprep.mubr.f32.mxu0 0.0
    %5211 = vmatmul.mubr.f32.gmra.mrb[0].mxu0 %v5075
    %v5212 = vpop.f32.mrb[0].mxu0
    %v5213 = vadd.f32 0.0, %v5212
    %v5214 = vpop.f32.mrb[0].mxu0
    %5215 = vmatprep.mubr.f32.mxu0 0.0
    %5216 = vmatmul.mubr.f32.gmra.mrb[0].mxu0 %v5078
    %v5217 = vpop.f32.mrb[0].mxu0
    %v5218 = vadd.f32 0.0, %v5217
    %v5219 = vpop.f32.mrb[0].mxu0
    %5220 = vmatprep.mubr.f32.mxu0 0.0
    %5221 = vmatmul.mubr.f32.gmra.mrb[0].mxu0 %v5081
    %v5222 = vpop.f32.mrb[0].mxu0
    %v5223 = vadd.f32 0.0, %v5222
    %v5224 = vpop.f32.mrb[0].mxu0
    %5225 = vmatprep.mubr.f32.mxu0 0.0
    %5226 = vmatmul.mubr.f32.gmra.mrb[0].mxu0 %v5084
    %v5227 = vpop.f32.mrb[0].mxu0
    %v5228 = vadd.f32 0.0, %v5227
    %v5229 = vpop.f32.mrb[0].mxu0
    %5230 = vdwg.mxu0
    %v5231 = vmax.f32 %v5153, 0.0
    %v5232 = vmax.f32 %v5158, 0.0
    %v5233 = vmax.f32 %v5163, 0.0
    %v5234 = vmax.f32 %v5168, 0.0
    %v5235 = vmax.f32 %v5173, 0.0
    %v5236 = vmax.f32 %v5178, 0.0
    %v5237 = vmax.f32 %v5183, 0.0
    %v5238 = vmax.f32 %v5188, 0.0
    %v5239 = vmax.f32 %v5193, 0.0
    %v5240 = vmax.f32 %v5198, 0.0
    %v5241 = vmax.f32 %v5203, 0.0
    %v5242 = vmax.f32 %v5208, 0.0
    %v5243 = vmax.f32 %v5213, 0.0
    %v5244 = vmax.f32 %v5218, 0.0
    %v5245 = vmax.f32 %v5223, 0.0
    %v5246 = vmax.f32 %v5228, 0.0
    %v5247 = vadd.f32 %v5231, %v5232
    %v5248 = vadd.f32 %v5247, %v5233
    %v5249 = vadd.f32 %v5248, %v5234
    %v5250 = vadd.f32 %v5249, %v5235
    %v5251 = vadd.f32 %v5250, %v5236
    %v5252 = vadd.f32 %v5251, %v5237
    %v5253 = vadd.f32 %v5252, %v5238
    %v5254 = vadd.f32 %v5253, %v5239
    %v5255 = vadd.f32 %v5254, %v5240
    %v5256 = vadd.f32 %v5255, %v5241
    %v5257 = vadd.f32 %v5256, %v5242
    %v5258 = vadd.f32 %v5257, %v5243
    %v5259 = vadd.f32 %v5258, %v5244
    %v5260 = vadd.f32 %v5259, %v5245
    %v5261 = vadd.f32 %v5260, %v5246
    %v5262 = vrot.slane %v5261, 4
    %v5263 = vadd.f32 %v5261, %v5262
    %v5264 = vrot.slane %v5263, 2
    %v5265 = vadd.f32 %v5263, %v5264
    %v5266 = vrot.slane %v5265, 1
    %v5267 = vadd.f32 %v5265, %v5266
    %v5268 = vadd.f32 %v5267, 1.0
    %v5269 = vpack.c.bf16 %v4911, %v4910
    %v5270 = vpack.c.bf16 %v4913, %v4912
    %v5271 = vpack.c.bf16 %v4915, %v4914
    %v5272 = vpack.c.bf16 %v4917, %v4916
    %v5273 = vpack.c.bf16 %v4919, %v4918
    %v5274 = vpack.c.bf16 %v4921, %v4920
    %v5275 = vpack.c.bf16 %v4923, %v4922
    %v5276 = vpack.c.bf16 %v4925, %v4924
    %v5278 = vsel %vm125, %v5269, 0
    %v5281 = vsel %vm125, %v5270, 0
    %v5284 = vsel %vm125, %v5271, 0
    %v5287 = vsel %vm125, %v5272, 0
    %v5290 = vsel %vm125, %v5273, 0
    %v5293 = vsel %vm125, %v5274, 0
    %v5296 = vsel %vm125, %v5275, 0
    %v5299 = vsel %vm125, %v5276, 0
    %5301 = vmatprep.subr.bf16.mxu0 0
    %5302 = vmatpush1.bf16.msra.mxu0 %v115
    %5303 = vmatprep.subr.bf16.mxu0 0
    %5304 = vmatpush1.bf16.msra.mxu0 %v116
    %5305 = vmatprep.subr.bf16.mxu0 0
    %5306 = vmatpush1.bf16.msra.mxu0 0
    %5307 = vmatprep.subr.bf16.mxu0 0
    %5308 = vmatpush1.bf16.msra.mxu0 0
    %5309 = vmatprep.subr.bf16.mxu0 0
    %5310 = vmatpush1.bf16.msra.mxu0 0
    %5311 = vmatprep.subr.bf16.mxu0 0
    %5312 = vmatpush1.bf16.msra.mxu0 0
    %5313 = vmatprep.subr.bf16.mxu0 0
    %5314 = vmatpush1.bf16.msra.mxu0 0
    %5315 = vmatprep.subr.bf16.mxu0 0
    %5316 = vmatpush1.bf16.msra.mxu0 0
    %5317 = vmatprep.subr.bf16.mxu0 0
    %5318 = vmatpush1.bf16.msra.mxu0 0
    %5319 = vmatprep.subr.bf16.mxu0 0
    %5320 = vmatpush1.bf16.msra.mxu0 0
    %5321 = vmatprep.subr.bf16.mxu0 0
    %5322 = vmatpush1.bf16.msra.mxu0 0
    %5323 = vmatprep.subr.bf16.mxu0 0
    %5324 = vmatpush1.bf16.msra.mxu0 0
    %5325 = vmatprep.subr.bf16.mxu0 0
    %5326 = vmatpush1.bf16.msra.mxu0 0
    %5327 = vmatprep.subr.bf16.mxu0 0
    %5328 = vmatpush1.bf16.msra.mxu0 0
    %5329 = vmatprep.subr.bf16.mxu0 0
    %5330 = vmatpush1.bf16.msra.mxu0 0
    %5331 = vmatprep.subr.bf16.mxu0 0
    %5332 = vmatpush1.bf16.msra.mxu0 0
    %5333 = vmatprep.mubr.bf16.mxu0 0
    %5334 = vmatmul.mubr.bf16.gmra.mrb[0].mxu0 %v5278
    %v5335 = vpop.f32.mrb[0].mxu0
    %v5336 = vadd.f32 0.0, %v5335
    %v5337 = vpop.f32.mrb[0].mxu0
    %v5338 = vpop.f32.mrb[0].mxu0
    %v5339 = vadd.f32 0.0, %v5338
    %v5340 = vpop.f32.mrb[0].mxu0
    %5341 = vmatprep.mubr.bf16.mxu0 0
    %5342 = vmatmul.mubr.bf16.gmra.mrb[0].mxu0 %v5281
    %v5343 = vpop.f32.mrb[0].mxu0
    %v5344 = vadd.f32 0.0, %v5343
    %v5345 = vpop.f32.mrb[0].mxu0
    %v5346 = vpop.f32.mrb[0].mxu0
    %v5347 = vadd.f32 0.0, %v5346
    %v5348 = vpop.f32.mrb[0].mxu0
    %5349 = vmatprep.mubr.bf16.mxu0 0
    %5350 = vmatmul.mubr.bf16.gmra.mrb[0].mxu0 %v5284
    %v5351 = vpop.f32.mrb[0].mxu0
    %v5352 = vadd.f32 0.0, %v5351
    %v5353 = vpop.f32.mrb[0].mxu0
    %v5354 = vpop.f32.mrb[0].mxu0
    %v5355 = vadd.f32 0.0, %v5354
    %v5356 = vpop.f32.mrb[0].mxu0
    %5357 = vmatprep.mubr.bf16.mxu0 0
    %5358 = vmatmul.mubr.bf16.gmra.mrb[0].mxu0 %v5287
    %v5359 = vpop.f32.mrb[0].mxu0
    %v5360 = vadd.f32 0.0, %v5359
    %v5361 = vpop.f32.mrb[0].mxu0
    %v5362 = vpop.f32.mrb[0].mxu0
    %v5363 = vadd.f32 0.0, %v5362
    %v5364 = vpop.f32.mrb[0].mxu0
    %5365 = vmatprep.mubr.bf16.mxu0 0
    %5366 = vmatmul.mubr.bf16.gmra.mrb[0].mxu0 %v5290
    %v5367 = vpop.f32.mrb[0].mxu0
    %v5368 = vadd.f32 0.0, %v5367
    %v5369 = vpop.f32.mrb[0].mxu0
    %v5370 = vpop.f32.mrb[0].mxu0
    %v5371 = vadd.f32 0.0, %v5370
    %v5372 = vpop.f32.mrb[0].mxu0
    %5373 = vmatprep.mubr.bf16.mxu0 0
    %5374 = vmatmul.mubr.bf16.gmra.mrb[0].mxu0 %v5293
    %v5375 = vpop.f32.mrb[0].mxu0
    %v5376 = vadd.f32 0.0, %v5375
    %v5377 = vpop.f32.mrb[0].mxu0
    %v5378 = vpop.f32.mrb[0].mxu0
    %v5379 = vadd.f32 0.0, %v5378
    %v5380 = vpop.f32.mrb[0].mxu0
    %5381 = vmatprep.mubr.bf16.mxu0 0
    %5382 = vmatmul.mubr.bf16.gmra.mrb[0].mxu0 %v5296
    %v5383 = vpop.f32.mrb[0].mxu0
    %v5384 = vadd.f32 0.0, %v5383
    %v5385 = vpop.f32.mrb[0].mxu0
    %v5386 = vpop.f32.mrb[0].mxu0
    %v5387 = vadd.f32 0.0, %v5386
    %v5388 = vpop.f32.mrb[0].mxu0
    %5389 = vmatprep.mubr.bf16.mxu0 0
    %5390 = vmatmul.mubr.bf16.gmra.mrb[0].mxu0 %v5299
    %v5391 = vpop.f32.mrb[0].mxu0
    %v5392 = vadd.f32 0.0, %v5391
    %v5393 = vpop.f32.mrb[0].mxu0
    %v5394 = vpop.f32.mrb[0].mxu0
    %v5395 = vadd.f32 0.0, %v5394
    %v5396 = vpop.f32.mrb[0].mxu0
    %5397 = vdwg.mxu0
    %v5398 = vpack.c.bf16 %v5023, %v5022
    %v5399 = vpack.c.bf16 %v5025, %v5024
    %v5400 = vpack.c.bf16 %v5027, %v5026
    %v5401 = vpack.c.bf16 %v5029, %v5028
    %v5402 = vpack.c.bf16 %v5031, %v5030
    %v5403 = vpack.c.bf16 %v5033, %v5032
    %v5404 = vpack.c.bf16 %v5035, %v5034
    %v5405 = vpack.c.bf16 %v5037, %v5036
    %v5414 = vunpack.c.l.b16 %v5398
    %v5415 = vunpack.c.h.b16 %v5398
    %v5416 = vunpack.c.l.b16 %v5399
    %v5417 = vunpack.c.h.b16 %v5399
    %v5418 = vunpack.c.l.b16 %v5400
    %v5419 = vunpack.c.h.b16 %v5400
    %v5420 = vunpack.c.l.b16 %v5401
    %v5421 = vunpack.c.h.b16 %v5401
    %v5422 = vunpack.c.l.b16 %v5402
    %v5423 = vunpack.c.h.b16 %v5402
    %v5424 = vunpack.c.l.b16 %v5403
    %v5425 = vunpack.c.h.b16 %v5403
    %v5426 = vunpack.c.l.b16 %v5404
    %v5427 = vunpack.c.h.b16 %v5404
    %v5428 = vunpack.c.l.b16 %v5405
    %v5429 = vunpack.c.h.b16 %v5405
    %v5430 = vpack.c.b16 %v5414, %v5414
    %v5431 = vpack.c.b16 %v5415, %v5415
    %v5432 = vpack.c.b16 %v5416, %v5416
    %v5433 = vpack.c.b16 %v5417, %v5417
    %v5434 = vpack.c.b16 %v5418, %v5418
    %v5435 = vpack.c.b16 %v5419, %v5419
    %v5436 = vpack.c.b16 %v5420, %v5420
    %v5437 = vpack.c.b16 %v5421, %v5421
    %v5438 = vpack.c.b16 %v5422, %v5422
    %v5439 = vpack.c.b16 %v5423, %v5423
    %v5440 = vpack.c.b16 %v5424, %v5424
    %v5441 = vpack.c.b16 %v5425, %v5425
    %v5442 = vpack.c.b16 %v5426, %v5426
    %v5443 = vpack.c.b16 %v5427, %v5427
    %v5444 = vpack.c.b16 %v5428, %v5428
    %v5445 = vpack.c.b16 %v5429, %v5429
    %s5462 = scalar_lea.vmem [#allocation12], 192
    %5463 = vst.msk [vmem:[%s5462] sm:$0xf] %vm166, %v5430
    %5464 = vst.msk [vmem:[%s5462 + $0x4] sm:$0xf] %vm166, %v5431
    %5465 = vst.msk [vmem:[%s5462 + $0x8] sm:$0xf] %vm166, %v5432
    %5466 = vst.msk [vmem:[%s5462 + $0xc] sm:$0xf] %vm166, %v5433
    %5467 = vst.msk [vmem:[%s5462 + $0x10] sm:$0xf] %vm166, %v5434
    %5468 = vst.msk [vmem:[%s5462 + $0x14] sm:$0xf] %vm166, %v5435
    %5469 = vst.msk [vmem:[%s5462 + $0x18] sm:$0xf] %vm166, %v5436
    %5470 = vst.msk [vmem:[%s5462 + $0x1c] sm:$0xf] %vm166, %v5437
    %5471 = vst.msk [vmem:[%s5462 + $0x20] sm:$0xf] %vm166, %v5438
    %5472 = vst.msk [vmem:[%s5462 + $0x24] sm:$0xf] %vm166, %v5439
    %5473 = vst.msk [vmem:[%s5462 + $0x28] sm:$0xf] %vm166, %v5440
    %5474 = vst.msk [vmem:[%s5462 + $0x2c] sm:$0xf] %vm166, %v5441
    %5475 = vst.msk [vmem:[%s5462 + $0x30] sm:$0xf] %vm166, %v5442
    %5476 = vst.msk [vmem:[%s5462 + $0x34] sm:$0xf] %vm166, %v5443
    %5477 = vst.msk [vmem:[%s5462 + $0x38] sm:$0xf] %vm166, %v5444
    %5478 = vst.msk [vmem:[%s5462 + $0x3c] sm:$0xf] %vm166, %v5445
    %v5479 = vpack.c.bf16 %v5339, %v5336
    %v5480 = vpack.c.bf16 %v5347, %v5344
    %v5481 = vpack.c.bf16 %v5355, %v5352
    %v5482 = vpack.c.bf16 %v5363, %v5360
    %v5483 = vpack.c.bf16 %v5371, %v5368
    %v5484 = vpack.c.bf16 %v5379, %v5376
    %v5485 = vpack.c.bf16 %v5387, %v5384
    %v5486 = vpack.c.bf16 %v5395, %v5392
    %v5495 = vunpack.c.l.b16 %v5479
    %v5496 = vunpack.c.h.b16 %v5479
    %v5497 = vunpack.c.l.b16 %v5480
    %v5498 = vunpack.c.h.b16 %v5480
    %v5499 = vunpack.c.l.b16 %v5481
    %v5500 = vunpack.c.h.b16 %v5481
    %v5501 = vunpack.c.l.b16 %v5482
    %v5502 = vunpack.c.h.b16 %v5482
    %v5503 = vunpack.c.l.b16 %v5483
    %v5504 = vunpack.c.h.b16 %v5483
    %v5505 = vunpack.c.l.b16 %v5484
    %v5506 = vunpack.c.h.b16 %v5484
    %v5507 = vunpack.c.l.b16 %v5485
    %v5508 = vunpack.c.h.b16 %v5485
    %v5509 = vunpack.c.l.b16 %v5486
    %v5510 = vunpack.c.h.b16 %v5486
    %v5511 = vpack.c.b16 %v5495, %v5495
    %v5512 = vpack.c.b16 %v5496, %v5496
    %v5513 = vpack.c.b16 %v5497, %v5497
    %v5514 = vpack.c.b16 %v5498, %v5498
    %v5515 = vpack.c.b16 %v5499, %v5499
    %v5516 = vpack.c.b16 %v5500, %v5500
    %v5517 = vpack.c.b16 %v5501, %v5501
    %v5518 = vpack.c.b16 %v5502, %v5502
    %v5519 = vpack.c.b16 %v5503, %v5503
    %v5520 = vpack.c.b16 %v5504, %v5504
    %v5521 = vpack.c.b16 %v5505, %v5505
    %v5522 = vpack.c.b16 %v5506, %v5506
    %v5523 = vpack.c.b16 %v5507, %v5507
    %v5524 = vpack.c.b16 %v5508, %v5508
    %v5525 = vpack.c.b16 %v5509, %v5509
    %v5526 = vpack.c.b16 %v5510, %v5510
    %s5543 = scalar_lea.vmem [#allocation15], 192
    %5544 = vst.msk [vmem:[%s5543] sm:$0xf] %vm166, %v5511
    %5545 = vst.msk [vmem:[%s5543 + $0x4] sm:$0xf] %vm166, %v5512
    %5546 = vst.msk [vmem:[%s5543 + $0x8] sm:$0xf] %vm166, %v5513
    %5547 = vst.msk [vmem:[%s5543 + $0xc] sm:$0xf] %vm166, %v5514
    %5548 = vst.msk [vmem:[%s5543 + $0x10] sm:$0xf] %vm166, %v5515
    %5549 = vst.msk [vmem:[%s5543 + $0x14] sm:$0xf] %vm166, %v5516
    %5550 = vst.msk [vmem:[%s5543 + $0x18] sm:$0xf] %vm166, %v5517
    %5551 = vst.msk [vmem:[%s5543 + $0x1c] sm:$0xf] %vm166, %v5518
    %5552 = vst.msk [vmem:[%s5543 + $0x20] sm:$0xf] %vm166, %v5519
    %5553 = vst.msk [vmem:[%s5543 + $0x24] sm:$0xf] %vm166, %v5520
    %5554 = vst.msk [vmem:[%s5543 + $0x28] sm:$0xf] %vm166, %v5521
    %5555 = vst.msk [vmem:[%s5543 + $0x2c] sm:$0xf] %vm166, %v5522
    %5556 = vst.msk [vmem:[%s5543 + $0x30] sm:$0xf] %vm166, %v5523
    %5557 = vst.msk [vmem:[%s5543 + $0x34] sm:$0xf] %vm166, %v5524
    %5558 = vst.msk [vmem:[%s5543 + $0x38] sm:$0xf] %vm166, %v5525
    %5559 = vst.msk [vmem:[%s5543 + $0x3c] sm:$0xf] %vm166, %v5526
    %s5560 = scalar_lea.vmem [#allocation18], 3
    %5561 = vst [vmem:[%s5560] sm:$0x1] %v5268
    // Predicated region
    $region42: #{tpu_custom_call.1} parent=1 // pred_check
      _
    $region43: #{tpu_custom_call.1} parent=1 // pred_check_branch
      %5563 = sbr.rel (0) target = $region45
    $region44: #{tpu_custom_call.1} parent=1 // pred_region
      %s5565 = ssub.s32 4096, 4096
      %5566 = vsyncadd [#allocation4], %s5565
      %s5567 = sshll.u32 [#allocation11], 4
      %s5568 = int_to_ptr.vmem [resolvable:$true] %s5567
      %5573 = dma.vmem_to_hbm [thread:$0]  %s5568, 4096, %s5, [#allocation4], 64, 64, 4
    $region45: #{tpu_custom_call.1} parent=1 // pred_fallthru
      _
    // Predicated region
    $region46: #{tpu_custom_call.1} parent=1 // pred_check
      _
    $region47: #{tpu_custom_call.1} parent=1 // pred_check_branch
      %5575 = sbr.rel (0) target = $region49
    $region48: #{tpu_custom_call.1} parent=1 // pred_region
      %s5577 = ssub.s32 4096, 4096
      %5578 = vsyncadd [#allocation13], %s5577
      %s5579 = sshll.u32 [#allocation12], 4
      %s5580 = int_to_ptr.vmem [resolvable:$true] %s5579
      %5585 = dma.vmem_to_hbm [thread:$0]  %s5580, 4096, %s6, [#allocation13], 64, 64, 4
    $region49: #{tpu_custom_call.1} parent=1 // pred_fallthru
      _
    // Predicated region
    $region50: #{tpu_custom_call.1} parent=1 // pred_check
      _
    $region51: #{tpu_custom_call.1} parent=1 // pred_check_branch
      %5587 = sbr.rel (0) target = $region53
    $region52: #{tpu_custom_call.1} parent=1 // pred_region
      %s5589 = ssub.s32 4096, 4096
      %5590 = vsyncadd [#allocation13], %s5589
      %s5591 = sshll.u32 [#allocation14], 4
      %s5592 = int_to_ptr.vmem [resolvable:$true] %s5591
      %5597 = dma.vmem_to_hbm [thread:$0]  %s5592, 4096, %s7, [#allocation13], 64, 64, 4
    $region53: #{tpu_custom_call.1} parent=1 // pred_fallthru
      _
    // Predicated region
    $region54: #{tpu_custom_call.1} parent=1 // pred_check
      _
    $region55: #{tpu_custom_call.1} parent=1 // pred_check_branch
      %5599 = sbr.rel (0) target = $region57
    $region56: #{tpu_custom_call.1} parent=1 // pred_region
      %s5601 = ssub.s32 4096, 4096
      %5602 = vsyncadd [#allocation16], %s5601
      %s5603 = sshll.u32 [#allocation15], 4
      %s5604 = int_to_ptr.vmem [resolvable:$true] %s5603
      %5609 = dma.vmem_to_hbm [thread:$0]  %s5604, 4096, %s8, [#allocation16], 64, 64, 4
    $region57: #{tpu_custom_call.1} parent=1 // pred_fallthru
      _
    // Predicated region
    $region58: #{tpu_custom_call.1} parent=1 // pred_check
      _
    $region59: #{tpu_custom_call.1} parent=1 // pred_check_branch
      %5611 = sbr.rel (0) target = $region61
    $region60: #{tpu_custom_call.1} parent=1 // pred_region
      %s5613 = ssub.s32 64, 64
      %5614 = vsyncadd [#allocation16], %s5613
      %s5615 = sshll.u32 [#allocation17], 4
      %s5616 = int_to_ptr.vmem [resolvable:$true] %s5615
      %5621 = dma.vmem_to_hbm [thread:$0]  %s5616, 64, %s9, [#allocation16], 16, 16, 1
    $region61: #{tpu_custom_call.1} parent=1 // pred_fallthru
      _
    // Predicated region
    $region62: #{tpu_custom_call.1} parent=1 // pred_check
      _
    $region63: #{tpu_custom_call.1} parent=1 // pred_check_branch
      %5623 = sbr.rel (0) target = $region65
    $region64: #{tpu_custom_call.1} parent=1 // pred_region
      %s5625 = ssub.s32 64, 64
      %5626 = vsyncadd [#allocation19], %s5625
      %s5627 = sshll.u32 [#allocation18], 4
      %s5628 = int_to_ptr.vmem [resolvable:$true] %s5627
      %5633 = dma.vmem_to_hbm [thread:$0]  %s5628, 64, %s10, [#allocation19], 16, 16, 1
    $region65: #{tpu_custom_call.1} parent=1 // pred_fallthru
      _
    // Predicated region
    $region66: #{tpu_custom_call.1} parent=1 // pred_check
      _
    $region67: #{tpu_custom_call.1} parent=1 // pred_check_branch
      %5635 = sbr.rel (0) target = $region69
    $region68: #{tpu_custom_call.1} parent=1 // pred_region
      %s5637 = ssub.s32 256, 256
      %5638 = vsyncadd [#allocation19], %s5637
      %s5639 = sshll.u32 [#allocation20], 4
      %s5640 = int_to_ptr.vmem [resolvable:$true] %s5639
      %5645 = dma.vmem_to_hbm [thread:$0]  %s5640, 256, %s11, [#allocation19], 64, 64, 4
    $region69: #{tpu_custom_call.1} parent=1 // pred_fallthru
      _
    // Predicated region
    $region70: #{tpu_custom_call.1} parent=1 // pred_check
      _
    $region71: #{tpu_custom_call.1} parent=1 // pred_check_branch
      %5647 = sbr.rel (0) target = $region73
    $region72: #{tpu_custom_call.1} parent=1 // pred_region
      %s5649 = ssub.s32 512, 512
      %5650 = vsyncadd [#allocation22], %s5649
      %s5651 = sshll.u32 [#allocation21], 4
      %s5652 = int_to_ptr.vmem [resolvable:$true] %s5651
      %5657 = dma.vmem_to_hbm [thread:$0]  %s5652, 512, %s12, [#allocation22], 128, 128, 8
    $region73: #{tpu_custom_call.1} parent=1 // pred_fallthru
      _
    // Predicated region
    $region74: #{tpu_custom_call.1} parent=1 // pred_check
      _
    $region75: #{tpu_custom_call.1} parent=1 // pred_check_branch
      %5659 = sbr.rel (0) target = $region77
    $region76: #{tpu_custom_call.1} parent=1 // pred_region
      %s5661 = ssub.s32 256, 256
      %5662 = vsyncadd [#allocation22], %s5661
      %s5663 = sshll.u32 [#allocation23], 4
      %s5664 = int_to_ptr.vmem [resolvable:$true] %s5663
      %5669 = dma.vmem_to_hbm [thread:$0]  %s5664, 256, %s13, [#allocation22], 64, 64, 4
    $region77: #{tpu_custom_call.1} parent=1 // pred_fallthru
      _
    // Predicated region
    $region78: #{tpu_custom_call.1} parent=1 // pred_check
      _
    $region79: #{tpu_custom_call.1} parent=1 // pred_check_branch
      %5671 = sbr.rel (0) target = $region81
    $region80: #{tpu_custom_call.1} parent=1 // pred_region
      %s5673 = ssub.s32 256, 256
      %5674 = vsyncadd [#allocation25], %s5673
      %s5675 = sshll.u32 [#allocation24], 4
      %s5676 = int_to_ptr.vmem [resolvable:$true] %s5675
      %5681 = dma.vmem_to_hbm [thread:$0]  %s5676, 256, %s14, [#allocation25], 64, 64, 4
    $region81: #{tpu_custom_call.1} parent=1 // pred_fallthru
      _
    // Predicated region
    $region82: #{tpu_custom_call.1} parent=1 // pred_check
      _
    $region83: #{tpu_custom_call.1} parent=1 // pred_check_branch
      %5683 = sbr.rel (0) target = $region85
    $region84: #{tpu_custom_call.1} parent=1 // pred_region
      %5684 = dma.done [#allocation4], 4096
    $region85: #{tpu_custom_call.1} parent=1 // pred_fallthru
      _
    // Predicated region
    $region86: #{tpu_custom_call.1} parent=1 // pred_check
      _
    $region87: #{tpu_custom_call.1} parent=1 // pred_check_branch
      %5686 = sbr.rel (0) target = $region89
    $region88: #{tpu_custom_call.1} parent=1 // pred_region
      %5687 = dma.done [#allocation13], 4096
    $region89: #{tpu_custom_call.1} parent=1 // pred_fallthru
      _
    // Predicated region
    $region90: #{tpu_custom_call.1} parent=1 // pred_check
      _
    $region91: #{tpu_custom_call.1} parent=1 // pred_check_branch
      %5689 = sbr.rel (0) target = $region93
    $region92: #{tpu_custom_call.1} parent=1 // pred_region
      %5690 = dma.done [#allocation13], 4096
    $region93: #{tpu_custom_call.1} parent=1 // pred_fallthru
      _
    // Predicated region
    $region94: #{tpu_custom_call.1} parent=1 // pred_check
      _
    $region95: #{tpu_custom_call.1} parent=1 // pred_check_branch
      %5692 = sbr.rel (0) target = $region97
    $region96: #{tpu_custom_call.1} parent=1 // pred_region
      %5693 = dma.done [#allocation16], 4096
    $region97: #{tpu_custom_call.1} parent=1 // pred_fallthru
      _
    // Predicated region
    $region98: #{tpu_custom_call.1} parent=1 // pred_check
      _
    $region99: #{tpu_custom_call.1} parent=1 // pred_check_branch
      %5695 = sbr.rel (0) target = $region101
    $region100: #{tpu_custom_call.1} parent=1 // pred_region
      %5696 = dma.done [#allocation16], 64
    $region101: #{tpu_custom_call.1} parent=1 // pred_fallthru
      _
    // Predicated region
    $region102: #{tpu_custom_call.1} parent=1 // pred_check
      _
    $region103: #{tpu_custom_call.1} parent=1 // pred_check_branch
      %5698 = sbr.rel (0) target = $region105
    $region104: #{tpu_custom_call.1} parent=1 // pred_region
      %5699 = dma.done [#allocation19], 64
    $region105: #{tpu_custom_call.1} parent=1 // pred_fallthru
      _
    // Predicated region
    $region106: #{tpu_custom_call.1} parent=1 // pred_check
      _
    $region107: #{tpu_custom_call.1} parent=1 // pred_check_branch
      %5701 = sbr.rel (0) target = $region109
    $region108: #{tpu_custom_call.1} parent=1 // pred_region
      %5702 = dma.done [#allocation19], 256
    $region109: #{tpu_custom_call.1} parent=1 // pred_fallthru
      _
    // Predicated region
    $region110: #{tpu_custom_call.1} parent=1 // pred_check
      _
    $region111: #{tpu_custom_call.1} parent=1 // pred_check_branch
      %5704 = sbr.rel (0) target = $region113
    $region112: #{tpu_custom_call.1} parent=1 // pred_region
      %5705 = dma.done [#allocation22], 512
    $region113: #{tpu_custom_call.1} parent=1 // pred_fallthru
      _
    // Predicated region
    $region114: #{tpu_custom_call.1} parent=1 // pred_check
      _
    $region115: #{tpu_custom_call.1} parent=1 // pred_check_branch
      %5707 = sbr.rel (0) target = $region117
    $region116: #{tpu_custom_call.1} parent=1 // pred_region
      %5708 = dma.done [#allocation22], 256
    $region117: #{tpu_custom_call.1} parent=1 // pred_fallthru
      _
    // Predicated region
    $region118: #{tpu_custom_call.1} parent=1 // pred_check
      _
    $region119: #{tpu_custom_call.1} parent=1 // pred_check_branch
      %5710 = sbr.rel (0) target = $region121
    $region120: #{tpu_custom_call.1} parent=1 // pred_region
      %5711 = dma.done [#allocation25], 256
    $region121: #{tpu_custom_call.1} parent=1 // pred_fallthru
      _
    %5712 = vsyncpa [#allocation3], 1
    %5713 = vsyncpa [#allocation6], 1
    %5714 = vsyncpa [#allocation9], 1
    %5715 = vsyncpa [#allocation4], 1
    %5716 = vsyncpa [#allocation13], 1
    %5717 = vsyncpa [#allocation16], 1
    %5718 = vsyncpa [#allocation19], 1
    %5719 = vsyncpa [#allocation22], 1
    %5720 = vsyncpa [#allocation25], 1

</llo_original>
